<compile_context>
chip_gen: v5e
topology: v5e:2x2
jax: 0.10.0
libtpu: 0.0.40
codegen_flags: <defaults>
</compile_context>

<pallas_src>
import jax
import jax.numpy as jnp
import numpy as np
from jax import lax
from jax.experimental import pallas as pl
from jax.experimental.pallas import tpu as pltpu

F_IN = 74          # COVAREP feature dim
F_PAD = 128        # feature dim (incl. bias lane) padded to a full lane group
BIAS_LANE = F_IN   # lane 74 carries a constant 1.0 -> layer-1 bias folded into matmul
H = 64             # hidden size of both LSTMs
G = 4 * H          # 256 gate columns (PyTorch order: i, f, g, o)
OUT_LANES = 128    # lane-dense output slab (real output is column 0)
BAT_ALIGN = 16     # batch-block alignment (bf16 sublane tile)


def _make_kernel(T, TBLK, BBLK, need_mask, unroll):
    """Build the kernel with static (Python) loop/config parameters closed over."""

    def kernel(x_ref,      # (1, TBLK*BBLK, F_PAD) bf16   time chunk, row = s*BBLK + j
               w1ih_ref,   # (F_PAD, G) bf16              Wih1^T (+ b1 in BIAS_LANE row)
               w1hh_ref,   # (H, G)     bf16              Whh1^T
               w2a_ref,    # (H, G)     bf16              Wih2^T
               w2b_ref,    # (H, G)     bf16              Whh2^T
               b2_ref,     # (1, G)     f32               bih2 + bhh2 (g-cols x2)
               wc_ref,     # (1, H)     f32               classifier weight row
               bc_ref,     # (1, 1)     f32               classifier bias
               out_ref,    # (BBLK, OUT_LANES) f32        resident output
               xg,         # (TBLK*BBLK, G) f32 scratch   layer-1 input projection
               h1, c1, h2, c2):   # (BBLK, H) f32 scratch, persist across chunks
        tc = pl.program_id(1)          # time-chunk index (sequential recurrence)

        @pl.when(tc == 0)
        def _init():
            h1[...] = jnp.zeros_like(h1)
            c1[...] = jnp.zeros_like(c1)
            h2[...] = jnp.zeros_like(h2)
            c2[...] = jnp.zeros_like(c2)
            out_ref[...] = jnp.zeros_like(out_ref)   # cheap insurance

        # --- layer-1 input projection + bias: ONE big MXU matmul per chunk ---
        xg[...] = jnp.dot(x_ref[0], w1ih_ref[...],
                          preferred_element_type=jnp.float32)

        # hoisted (small) weight loads — no big bias broadcasts held live
        w1hh = w1hh_ref[...]
        w2a = w2a_ref[...]
        w2b = w2b_ref[...]
        b2 = b2_ref[...]          # (1, G): broadcasts in the add, never materialized

        def step(s, carry):
            h1_v, c1_v, h2_v, c2_v = carry
            row = pl.multiple_of(s * BBLK, BBLK)

            # ---- LSTM layer 1: recurrent part only (K = 64) ----
            g1 = xg[pl.ds(row, BBLK), :] + jnp.dot(
                h1_v.astype(jnp.bfloat16), w1hh,
                preferred_element_type=jnp.float32)
            sig1 = jax.nn.sigmoid(g1)                 # single EUP pass per layer
            i1 = sig1[:, 0:H]
            f1 = sig1[:, H:2 * H]
            gg1 = 2.0 * sig1[:, 2 * H:3 * H] - 1.0    # tanh(z) = 2*sigmoid(2z) - 1
            o1 = sig1[:, 3 * H:4 * H]
            c1_n = f1 * c1_v + i1 * gg1
            h1_n = o1 * jnp.tanh(c1_n)

            # ---- LSTM layer 2: two accumulating K=64 dots (no lane concat) ----
            g2 = (jnp.dot(h1_n.astype(jnp.bfloat16), w2a,
                          preferred_element_type=jnp.float32)
                  + jnp.dot(h2_v.astype(jnp.bfloat16), w2b,
                            preferred_element_type=jnp.float32)
                  + b2)
            sig2 = jax.nn.sigmoid(g2)
            i2 = sig2[:, 0:H]
            f2 = sig2[:, H:2 * H]
            gg2 = 2.0 * sig2[:, 2 * H:3 * H] - 1.0
            o2 = sig2[:, 3 * H:4 * H]
            c2_n = f2 * c2_v + i2 * gg2
            h2_n = o2 * jnp.tanh(c2_n)

            new = (h1_n, c1_n, h2_n, c2_n)
            if need_mask:  # only emitted when T has no suitable chunk divisor
                valid = (tc * TBLK + s) < T
                new = tuple(jnp.where(valid, n, o) for n, o in zip(new, carry))
            return new

        carry = lax.fori_loop(0, TBLK, step,
                              (h1[...], c1[...], h2[...], c2[...]),
                              unroll=unroll)
        h1[...], c1[...], h2[...], c2[...] = carry

        # ---- classifier on the last timestep's hidden state ----
        @pl.when(tc == pl.num_programs(1) - 1)
        def _final():
            h2_last = carry[2]                                 # (BBLK, H)
            val = jnp.sum(h2_last * wc_ref[...], axis=-1, keepdims=True) + bc_ref[...]
            out_ref[...] = jnp.broadcast_to(val, out_ref.shape).astype(out_ref.dtype)

    return kernel


def _tensorcores_per_chip():
    """2 TensorCores per chip on v4 / v5p / v7x; 1 on v5e / v6e."""
    try:
        kind = jax.devices()[0].device_kind.lower()
    except Exception:
        return 1
    for tag in ("v4", "v5p", "v7"):
        if tag in kind:
            return 2
    return 1


def covarep_audio_lstm_net(x, params, *, time_block=None):
    """x: (B, T, 74) float32.  Returns (B, 1) float32 (Dropout is inference identity)."""
    B, T, F = x.shape
    assert F == F_IN and T >= 1
    (wih1, whh1, bih1, bhh1,
     wih2, whh2, bih2, bhh2,
     wc, bc) = params

    f32, bf16 = jnp.float32, jnp.bfloat16

    # --- fused / padded / gate-scaled weights (host-side, one-time) ---
    # g-gate columns pre-scaled by 2 so the kernel uses a single sigmoid pass
    # per layer and recovers the cell gate via tanh(z) = 2*sigmoid(2z) - 1.
    scale = jnp.concatenate([jnp.ones((2 * H,), f32),
                             2.0 * jnp.ones((H,), f32),
                             jnp.ones((H,), f32)])
    b1 = (bih1 + bhh1).reshape(1, G).astype(f32)
    w1ih = jnp.concatenate([wih1.T.astype(f32), b1], axis=0)            # (75, 256)
    w1ih = jnp.pad(w1ih, ((0, F_PAD - F_IN - 1), (0, 0)))               # (128, 256)
    w1ih = (w1ih * scale[None, :]).astype(bf16)
    w1hh = (whh1.T.astype(f32) * scale[None, :]).astype(bf16)           # (64, 256)
    w2a = (wih2.T.astype(f32) * scale[None, :]).astype(bf16)            # (64, 256)
    w2b = (whh2.T.astype(f32) * scale[None, :]).astype(bf16)            # (64, 256)
    b2 = (bih2 + bhh2).reshape(1, G).astype(f32) * scale[None, :]       # (1, 256) f32
    wc_row = wc.reshape(1, H).astype(f32)                               # (1, 64)
    bc_r = bc.reshape(1, 1).astype(f32)                                 # (1, 1)

    # --- batch blocking (16-aligned for the bf16 sublane tile) ---
    if B <= 128:
        BBLK = ((B + BAT_ALIGN - 1) // BAT_ALIGN) * BAT_ALIGN
    else:
        BBLK = 128
    B_pad = ((B + BBLK - 1) // BBLK) * BBLK
    nb = B_pad // BBLK
    # 2-TC chips (v7x etc.): split a lone batch block so both cores get real work.
    if nb == 1 and _tensorcores_per_chip() >= 2 and BBLK >= 2 * BAT_ALIGN and B > BBLK // 2:
        BBLK //= 2
        nb = 2
        B_pad = nb * BBLK

    # --- time chunking (recurrence stays in-kernel) ---
    if time_block is None:
        # keep the xg scratch (TBLK*BBLK, 256) f32 around <= 8 MiB so the whole
        # working set fits comfortably even on v7x's smaller VMEM.
        time_block = max(16, min(256, (8 * 1024 * 1024) // (BBLK * G * 4)))
    TBLK = min(T, time_block)
    if T % TBLK != 0:
        # prefer a divisor of T: removes per-step tail masking from the hot loop
        div = 1
        for d in range(TBLK, 0, -1):
            if T % d == 0:
                div = d
                break
        if div >= max(8, TBLK // 4):
            TBLK = div
    need_mask = (T % TBLK != 0)
    n_tc = (T + TBLK - 1) // TBLK
    T_pad = n_tc * TBLK

    # unroll: keep live gate tensors within the 64-vreg budget
    if TBLK <= 16:
        unroll = True
    elif BBLK <= 64:
        unroll = 8
    else:
        unroll = 4

    # --- input layout: (B, T, 74) -> (nb, T_pad*BBLK, F_PAD) bf16, time-major
    # inside each batch block, with a constant-1 lane so b1 rides the matmul. ---
    x_r = jnp.transpose(x.astype(f32), (1, 0, 2))                       # (T, B, 74)
    x_r = jnp.concatenate([x_r, jnp.ones((T, B, 1), f32)], axis=-1)     # (T, B, 75)
    x_r = jnp.pad(x_r, ((0, T_pad - T), (0, B_pad - B), (0, F_PAD - F_IN - 1)))
    x_r = x_r.reshape(T_pad, nb, BBLK, F_PAD).transpose(1, 0, 2, 3)
    x_r = x_r.reshape(nb, T_pad * BBLK, F_PAD).astype(bf16)

    kernel = _make_kernel(T, TBLK, BBLK, need_mask, unroll)

    def const(shape):
        return pl.BlockSpec(shape, lambda b, t: tuple(0 for _ in shape))

    out = pl.pallas_call(
        kernel,
        out_shape=jax.ShapeDtypeStruct((B_pad, OUT_LANES), jnp.float32),
        grid_spec=pltpu.PrefetchScalarGridSpec(
            num_scalar_prefetch=0,
            grid=(nb, n_tc),
            in_specs=[
                pl.BlockSpec((1, TBLK * BBLK, F_PAD), lambda b, t: (b, t, 0)),  # x chunk
                const((F_PAD, G)),     # w1 input-to-hidden (+ bias row)
                const((H, G)),         # w1 hidden-to-hidden
                const((H, G)),         # w2 input(h1)-to-hidden
                const((H, G)),         # w2 hidden-to-hidden
                const((1, G)),         # b2
                const((1, H)),         # wc row
                const((1, 1)),         # bc
            ],
            out_specs=pl.BlockSpec((BBLK, OUT_LANES), lambda b, t: (b, 0)),
            scratch_shapes=[
                pltpu.VMEM((TBLK * BBLK, G), jnp.float32),   # xg (layer-1 pre-projection)
                pltpu.VMEM((BBLK, H), jnp.float32),          # h1
                pltpu.VMEM((BBLK, H), jnp.float32),          # c1
                pltpu.VMEM((BBLK, H), jnp.float32),          # h2
                pltpu.VMEM((BBLK, H), jnp.float32),          # c2
            ],
        ),
        compiler_params=pltpu.CompilerParams(
            # batch blocks are independent (megacore); time is a recurrence
            dimension_semantics=("parallel", "arbitrary"),
        ),
    )(x_r, w1ih, w1hh, w2a, w2b, b2, wc_row, bc_r)

    return out[:B, :1]


# ---------------- pure-JAX reference (for correctness check) ----------------
def _lstm_layer_ref(x, wih, whh, bih, bhh):
    B, T, _ = x.shape

    def step(carry, x_t):
        h, c = carry
        g = x_t @ wih.T + bih + h @ whh.T + bhh
        i = jax.nn.sigmoid(g[:, 0:H])
        f = jax.nn.sigmoid(g[:, H:2 * H])
        gg = jnp.tanh(g[:, 2 * H:3 * H])
        o = jax.nn.sigmoid(g[:, 3 * H:4 * H])
        c = f * c + i * gg
        h = o * jnp.tanh(c)
        return (h, c), h

    h0 = jnp.zeros((B, H), jnp.float32)
    (_, _), hs = jax.lax.scan(step, (h0, h0), jnp.swapaxes(x, 0, 1))
    return jnp.swapaxes(hs, 0, 1)


def _ref_forward(x, params):
    (wih1, whh1, bih1, bhh1, wih2, whh2, bih2, bhh2, wc, bc) = params
    y = _lstm_layer_ref(x, wih1, whh1, bih1, bhh1)
    y = _lstm_layer_ref(y, wih2, whh2, bih2, bhh2)
    last = y[:, -1, :]
    return last @ wc.T + bc


def init_params(key):
    # PyTorch LSTM / Linear default init: U(-1/sqrt(fan), 1/sqrt(fan))
    ks = jax.random.split(key, 10)
    s = 1.0 / np.sqrt(H)
    u = lambda k, shape, scale: jax.random.uniform(k, shape, jnp.float32, -scale, scale)
    wih1 = u(ks[0], (4 * H, F_IN), s)
    whh1 = u(ks[1], (4 * H, H), s)
    bih1 = u(ks[2], (4 * H,), s)
    bhh1 = u(ks[3], (4 * H,), s)
    wih2 = u(ks[4], (4 * H, H), s)
    whh2 = u(ks[5], (4 * H, H), s)
    bih2 = u(ks[6], (4 * H,), s)
    bhh2 = u(ks[7], (4 * H,), s)
    wc = u(ks[8], (1, H), s)
    bc = u(ks[9], (1,), s)
    return (wih1, whh1, bih1, bhh1, wih2, whh2, bih2, bhh2, wc, bc)


if __name__ == "__main__":
    key = jax.random.PRNGKey(0)
    k_x, k_p = jax.random.split(key)
    B, T = 2, 8
    x = jax.random.normal(k_x, (B, T, F_IN), jnp.float32)
    params = init_params(k_p)

    out = covarep_audio_lstm_net(x, params)
    out = jax.block_until_ready(out)

    ref = jax.block_until_ready(_ref_forward(x, params))
    # bf16 MXU operands -> loosened tolerance (state/gate math stays f32)
    np.testing.assert_allclose(np.asarray(out), np.asarray(ref), rtol=3e-2, atol=3e-2)

    print("KERNEL_OK")
</pallas_src>

<mosaic_0001>
module attributes {stable_mosaic.version = 11 : i64} {
  func.func @kernel(%arg0: i32, %arg1: i32, %arg2: memref<1x128x128xbf16, #tpu.memory_space<vmem>>, %arg3: memref<128x256xbf16, #tpu.memory_space<vmem>>, %arg4: memref<64x256xbf16, #tpu.memory_space<vmem>>, %arg5: memref<64x256xbf16, #tpu.memory_space<vmem>>, %arg6: memref<64x256xbf16, #tpu.memory_space<vmem>>, %arg7: memref<1x256xf32, #tpu.memory_space<vmem>>, %arg8: memref<1x64xf32, #tpu.memory_space<vmem>>, %arg9: memref<1x1xf32, #tpu.memory_space<vmem>>, %arg10: memref<16x128xf32, #tpu.memory_space<vmem>>, %arg11: memref<128x256xf32, #tpu.memory_space<vmem>>, %arg12: memref<16x64xf32, #tpu.memory_space<vmem>>, %arg13: memref<16x64xf32, #tpu.memory_space<vmem>>, %arg14: memref<16x64xf32, #tpu.memory_space<vmem>>, %arg15: memref<16x64xf32, #tpu.memory_space<vmem>>) attributes {dimension_semantics = [#tpu.dimension_semantics<parallel>, #tpu.dimension_semantics<arbitrary>], iteration_bounds = array<i64: 1, 1>, scalar_prefetch = 0 : i64, scratch_operands = 5 : i64, tpu.core_type = #tpu.core_type<tc>, window_params = [{transform_indices = @transform_0, window_bounds = array<i64: 1, 128, 128>}, {pipeline_mode = #tpu.pipeline_mode<synchronous>, transform_indices = @transform_1, window_bounds = array<i64: 128, 256>}, {pipeline_mode = #tpu.pipeline_mode<synchronous>, transform_indices = @transform_2, window_bounds = array<i64: 64, 256>}, {pipeline_mode = #tpu.pipeline_mode<synchronous>, transform_indices = @transform_3, window_bounds = array<i64: 64, 256>}, {pipeline_mode = #tpu.pipeline_mode<synchronous>, transform_indices = @transform_4, window_bounds = array<i64: 64, 256>}, {pipeline_mode = #tpu.pipeline_mode<synchronous>, transform_indices = @transform_5, window_bounds = array<i64: 1, 256>}, {pipeline_mode = #tpu.pipeline_mode<synchronous>, transform_indices = @transform_6, window_bounds = array<i64: 1, 64>}, {pipeline_mode = #tpu.pipeline_mode<synchronous>, transform_indices = @transform_7, window_bounds = array<i64: 1, 1>}, {transform_indices = @transform_8, window_bounds = array<i64: 16, 128>}]} {
    %c0_i32 = arith.constant 0 : i32
    %0 = arith.cmpi eq, %arg1, %c0_i32 : i32
    %1 = arith.extui %0 : i1 to i32
    %c0_i32_0 = arith.constant 0 : i32
    %2 = arith.cmpi ne, %1, %c0_i32_0 : i32
    scf.if %2 {
      %cst_121 = arith.constant 0.000000e+00 : f32
      %423 = vector.broadcast %cst_121 : f32 to vector<16x64xf32>
      %c0_122 = arith.constant 0 : index
      %c0_123 = arith.constant 0 : index
      %424 = vector.load %arg12[%c0_122, %c0_123] : memref<16x64xf32, #tpu.memory_space<vmem>>, vector<16x64xf32>
      tpu.vector_store %arg12[%c0_122, %c0_123], %423 {strides = array<i32>} : memref<16x64xf32, #tpu.memory_space<vmem>>, vector<16x64xf32>,
      %cst_124 = arith.constant 0.000000e+00 : f32
      %425 = vector.broadcast %cst_124 : f32 to vector<16x64xf32>
      %c0_125 = arith.constant 0 : index
      %c0_126 = arith.constant 0 : index
      %426 = vector.load %arg13[%c0_125, %c0_126] : memref<16x64xf32, #tpu.memory_space<vmem>>, vector<16x64xf32>
      tpu.vector_store %arg13[%c0_125, %c0_126], %425 {strides = array<i32>} : memref<16x64xf32, #tpu.memory_space<vmem>>, vector<16x64xf32>,
      %cst_127 = arith.constant 0.000000e+00 : f32
      %427 = vector.broadcast %cst_127 : f32 to vector<16x64xf32>
      %c0_128 = arith.constant 0 : index
      %c0_129 = arith.constant 0 : index
      %428 = vector.load %arg14[%c0_128, %c0_129] : memref<16x64xf32, #tpu.memory_space<vmem>>, vector<16x64xf32>
      tpu.vector_store %arg14[%c0_128, %c0_129], %427 {strides = array<i32>} : memref<16x64xf32, #tpu.memory_space<vmem>>, vector<16x64xf32>,
      %cst_130 = arith.constant 0.000000e+00 : f32
      %429 = vector.broadcast %cst_130 : f32 to vector<16x64xf32>
      %c0_131 = arith.constant 0 : index
      %c0_132 = arith.constant 0 : index
      %430 = vector.load %arg15[%c0_131, %c0_132] : memref<16x64xf32, #tpu.memory_space<vmem>>, vector<16x64xf32>
      tpu.vector_store %arg15[%c0_131, %c0_132], %429 {strides = array<i32>} : memref<16x64xf32, #tpu.memory_space<vmem>>, vector<16x64xf32>,
      %cst_133 = arith.constant 0.000000e+00 : f32
      %431 = vector.broadcast %cst_133 : f32 to vector<16x128xf32>
      %c0_134 = arith.constant 0 : index
      %c0_135 = arith.constant 0 : index
      %432 = vector.load %arg10[%c0_134, %c0_135] : memref<16x128xf32, #tpu.memory_space<vmem>>, vector<16x128xf32>
      tpu.vector_store %arg10[%c0_134, %c0_135], %431 {strides = array<i32>} : memref<16x128xf32, #tpu.memory_space<vmem>>, vector<16x128xf32>,
    } else {
    }
    %c0 = arith.constant 0 : index
    %c0_1 = arith.constant 0 : index
    %c0_2 = arith.constant 0 : index
    %3 = vector.load %arg2[%c0, %c0_1, %c0_2] : memref<1x128x128xbf16, #tpu.memory_space<vmem>>, vector<1x128x128xbf16>
    %4 = vector.shape_cast %3 : vector<1x128x128xbf16> to vector<128x128xbf16>
    %c0_3 = arith.constant 0 : index
    %c0_4 = arith.constant 0 : index
    %5 = vector.load %arg3[%c0_3, %c0_4] : memref<128x256xbf16, #tpu.memory_space<vmem>>, vector<128x256xbf16>
    %cst = arith.constant dense<0.000000e+00> : vector<128x256xf32>
    %6 = tpu.matmul %4, %5, %cst {dimension_numbers = #tpu.dot_dimension_numbers<[1], [0], [0], [1], [0, 0, 1, 1], [], []>} : vector<128x128xbf16>, vector<128x256xbf16>, vector<128x256xf32> -> vector<128x256xf32>
    %c0_5 = arith.constant 0 : index
    %c0_6 = arith.constant 0 : index
    %7 = vector.load %arg11[%c0_5, %c0_6] : memref<128x256xf32, #tpu.memory_space<vmem>>, vector<128x256xf32>
    tpu.vector_store %arg11[%c0_5, %c0_6], %6 {strides = array<i32>} : memref<128x256xf32, #tpu.memory_space<vmem>>, vector<128x256xf32>,
    %c0_7 = arith.constant 0 : index
    %c0_8 = arith.constant 0 : index
    %8 = vector.load %arg4[%c0_7, %c0_8] : memref<64x256xbf16, #tpu.memory_space<vmem>>, vector<64x256xbf16>
    %c0_9 = arith.constant 0 : index
    %c0_10 = arith.constant 0 : index
    %9 = vector.load %arg5[%c0_9, %c0_10] : memref<64x256xbf16, #tpu.memory_space<vmem>>, vector<64x256xbf16>
    %c0_11 = arith.constant 0 : index
    %c0_12 = arith.constant 0 : index
    %10 = vector.load %arg6[%c0_11, %c0_12] : memref<64x256xbf16, #tpu.memory_space<vmem>>, vector<64x256xbf16>
    %c0_13 = arith.constant 0 : index
    %c0_14 = arith.constant 0 : index
    %11 = vector.load %arg7[%c0_13, %c0_14] : memref<1x256xf32, #tpu.memory_space<vmem>>, vector<1x256xf32>
    %c0_15 = arith.constant 0 : index
    %c0_16 = arith.constant 0 : index
    %12 = vector.load %arg12[%c0_15, %c0_16] : memref<16x64xf32, #tpu.memory_space<vmem>>, vector<16x64xf32>
    %c0_17 = arith.constant 0 : index
    %c0_18 = arith.constant 0 : index
    %13 = vector.load %arg13[%c0_17, %c0_18] : memref<16x64xf32, #tpu.memory_space<vmem>>, vector<16x64xf32>
    %c0_19 = arith.constant 0 : index
    %c0_20 = arith.constant 0 : index
    %14 = vector.load %arg14[%c0_19, %c0_20] : memref<16x64xf32, #tpu.memory_space<vmem>>, vector<16x64xf32>
    %c0_21 = arith.constant 0 : index
    %c0_22 = arith.constant 0 : index
    %15 = vector.load %arg15[%c0_21, %c0_22] : memref<16x64xf32, #tpu.memory_space<vmem>>, vector<16x64xf32>
    %c0_i32_23 = arith.constant 0 : i32
    %c16_i32 = arith.constant 16 : i32
    %16 = arith.muli %c0_i32_23, %c16_i32 : i32
    %17 = tpu.assume_multiple %16, 16 : i32
    %18 = arith.index_cast %17 : i32 to index
    %c0_24 = arith.constant 0 : index
    %19 = vector.load %arg11[%18, %c0_24] : memref<128x256xf32, #tpu.memory_space<vmem>>, vector<16x256xf32>
    %20 = arith.truncf %12 : vector<16x64xf32> to vector<16x64xbf16>
    %cst_25 = arith.constant dense<0.000000e+00> : vector<16x256xf32>
    %21 = tpu.matmul %20, %8, %cst_25 {dimension_numbers = #tpu.dot_dimension_numbers<[1], [0], [0], [1], [0, 0, 1, 1], [], []>} : vector<16x64xbf16>, vector<64x256xbf16>, vector<16x256xf32> -> vector<16x256xf32>
    %22 = arith.addf %19, %21 : vector<16x256xf32>
    %23 = arith.negf %22 : vector<16x256xf32>
    %24 = math.exp %23 : vector<16x256xf32>
    %cst_26 = arith.constant 1.000000e+00 : f32
    %25 = vector.broadcast %cst_26 : f32 to vector<16x256xf32>
    %26 = arith.addf %25, %24 : vector<16x256xf32>
    %27 = arith.divf %25, %26 : vector<16x256xf32>
    %28 = vector.extract_strided_slice %27 {offsets = [0, 0], sizes = [16, 64], strides = [1, 1]} : vector<16x256xf32> to vector<16x64xf32>
    %29 = vector.extract_strided_slice %27 {offsets = [0, 64], sizes = [16, 64], strides = [1, 1]} : vector<16x256xf32> to vector<16x64xf32>
    %30 = vector.extract_strided_slice %27 {offsets = [0, 128], sizes = [16, 64], strides = [1, 1]} : vector<16x256xf32> to vector<16x64xf32>
    %cst_27 = arith.constant 2.000000e+00 : f32
    %31 = vector.broadcast %cst_27 : f32 to vector<16x64xf32>
    %32 = arith.mulf %31, %30 : vector<16x64xf32>
    %cst_28 = arith.constant 1.000000e+00 : f32
    %33 = vector.broadcast %cst_28 : f32 to vector<16x64xf32>
    %34 = arith.subf %32, %33 : vector<16x64xf32>
    %35 = vector.extract_strided_slice %27 {offsets = [0, 192], sizes = [16, 64], strides = [1, 1]} : vector<16x256xf32> to vector<16x64xf32>
    %36 = arith.mulf %29, %13 : vector<16x64xf32>
    %37 = arith.mulf %28, %34 : vector<16x64xf32>
    %38 = arith.addf %36, %37 : vector<16x64xf32>
    %39 = math.tanh %38 : vector<16x64xf32>
    %40 = arith.mulf %35, %39 : vector<16x64xf32>
    %41 = arith.truncf %40 : vector<16x64xf32> to vector<16x64xbf16>
    %cst_29 = arith.constant dense<0.000000e+00> : vector<16x256xf32>
    %42 = tpu.matmul %41, %9, %cst_29 {dimension_numbers = #tpu.dot_dimension_numbers<[1], [0], [0], [1], [0, 0, 1, 1], [], []>} : vector<16x64xbf16>, vector<64x256xbf16>, vector<16x256xf32> -> vector<16x256xf32>
    %43 = arith.truncf %14 : vector<16x64xf32> to vector<16x64xbf16>
    %cst_30 = arith.constant dense<0.000000e+00> : vector<16x256xf32>
    %44 = tpu.matmul %43, %10, %cst_30 {dimension_numbers = #tpu.dot_dimension_numbers<[1], [0], [0], [1], [0, 0, 1, 1], [], []>} : vector<16x64xbf16>, vector<64x256xbf16>, vector<16x256xf32> -> vector<16x256xf32>
    %45 = arith.addf %42, %44 : vector<16x256xf32>
    %46 = vector.broadcast %11 : vector<1x256xf32> to vector<16x256xf32>
    %47 = arith.addf %45, %46 : vector<16x256xf32>
    %48 = arith.negf %47 : vector<16x256xf32>
    %49 = math.exp %48 : vector<16x256xf32>
    %cst_31 = arith.constant 1.000000e+00 : f32
    %50 = vector.broadcast %cst_31 : f32 to vector<16x256xf32>
    %51 = arith.addf %50, %49 : vector<16x256xf32>
    %52 = arith.divf %50, %51 : vector<16x256xf32>
    %53 = vector.extract_strided_slice %52 {offsets = [0, 0], sizes = [16, 64], strides = [1, 1]} : vector<16x256xf32> to vector<16x64xf32>
    %54 = vector.extract_strided_slice %52 {offsets = [0, 64], sizes = [16, 64], strides = [1, 1]} : vector<16x256xf32> to vector<16x64xf32>
    %55 = vector.extract_strided_slice %52 {offsets = [0, 128], sizes = [16, 64], strides = [1, 1]} : vector<16x256xf32> to vector<16x64xf32>
    %cst_32 = arith.constant 2.000000e+00 : f32
    %56 = vector.broadcast %cst_32 : f32 to vector<16x64xf32>
    %57 = arith.mulf %56, %55 : vector<16x64xf32>
    %cst_33 = arith.constant 1.000000e+00 : f32
    %58 = vector.broadcast %cst_33 : f32 to vector<16x64xf32>
    %59 = arith.subf %57, %58 : vector<16x64xf32>
    %60 = vector.extract_strided_slice %52 {offsets = [0, 192], sizes = [16, 64], strides = [1, 1]} : vector<16x256xf32> to vector<16x64xf32>
    %61 = arith.mulf %54, %15 : vector<16x64xf32>
    %62 = arith.mulf %53, %59 : vector<16x64xf32>
    %63 = arith.addf %61, %62 : vector<16x64xf32>
    %64 = math.tanh %63 : vector<16x64xf32>
    %65 = arith.mulf %60, %64 : vector<16x64xf32>
    %c1_i32 = arith.constant 1 : i32
    %c16_i32_34 = arith.constant 16 : i32
    %66 = arith.muli %c1_i32, %c16_i32_34 : i32
    %67 = tpu.assume_multiple %66, 16 : i32
    %68 = arith.index_cast %67 : i32 to index
    %c0_35 = arith.constant 0 : index
    %69 = vector.load %arg11[%68, %c0_35] : memref<128x256xf32, #tpu.memory_space<vmem>>, vector<16x256xf32>
    %70 = arith.truncf %40 : vector<16x64xf32> to vector<16x64xbf16>
    %cst_36 = arith.constant dense<0.000000e+00> : vector<16x256xf32>
    %71 = tpu.matmul %70, %8, %cst_36 {dimension_numbers = #tpu.dot_dimension_numbers<[1], [0], [0], [1], [0, 0, 1, 1], [], []>} : vector<16x64xbf16>, vector<64x256xbf16>, vector<16x256xf32> -> vector<16x256xf32>
    %72 = arith.addf %69, %71 : vector<16x256xf32>
    %73 = arith.negf %72 : vector<16x256xf32>
    %74 = math.exp %73 : vector<16x256xf32>
    %cst_37 = arith.constant 1.000000e+00 : f32
    %75 = vector.broadcast %cst_37 : f32 to vector<16x256xf32>
    %76 = arith.addf %75, %74 : vector<16x256xf32>
    %77 = arith.divf %75, %76 : vector<16x256xf32>
    %78 = vector.extract_strided_slice %77 {offsets = [0, 0], sizes = [16, 64], strides = [1, 1]} : vector<16x256xf32> to vector<16x64xf32>
    %79 = vector.extract_strided_slice %77 {offsets = [0, 64], sizes = [16, 64], strides = [1, 1]} : vector<16x256xf32> to vector<16x64xf32>
    %80 = vector.extract_strided_slice %77 {offsets = [0, 128], sizes = [16, 64], strides = [1, 1]} : vector<16x256xf32> to vector<16x64xf32>
    %cst_38 = arith.constant 2.000000e+00 : f32
    %81 = vector.broadcast %cst_38 : f32 to vector<16x64xf32>
    %82 = arith.mulf %81, %80 : vector<16x64xf32>
    %cst_39 = arith.constant 1.000000e+00 : f32
    %83 = vector.broadcast %cst_39 : f32 to vector<16x64xf32>
    %84 = arith.subf %82, %83 : vector<16x64xf32>
    %85 = vector.extract_strided_slice %77 {offsets = [0, 192], sizes = [16, 64], strides = [1, 1]} : vector<16x256xf32> to vector<16x64xf32>
    %86 = arith.mulf %79, %38 : vector<16x64xf32>
    %87 = arith.mulf %78, %84 : vector<16x64xf32>
    %88 = arith.addf %86, %87 : vector<16x64xf32>
    %89 = math.tanh %88 : vector<16x64xf32>
    %90 = arith.mulf %85, %89 : vector<16x64xf32>
    %91 = arith.truncf %90 : vector<16x64xf32> to vector<16x64xbf16>
    %cst_40 = arith.constant dense<0.000000e+00> : vector<16x256xf32>
    %92 = tpu.matmul %91, %9, %cst_40 {dimension_numbers = #tpu.dot_dimension_numbers<[1], [0], [0], [1], [0, 0, 1, 1], [], []>} : vector<16x64xbf16>, vector<64x256xbf16>, vector<16x256xf32> -> vector<16x256xf32>
    %93 = arith.truncf %65 : vector<16x64xf32> to vector<16x64xbf16>
    %cst_41 = arith.constant dense<0.000000e+00> : vector<16x256xf32>
    %94 = tpu.matmul %93, %10, %cst_41 {dimension_numbers = #tpu.dot_dimension_numbers<[1], [0], [0], [1], [0, 0, 1, 1], [], []>} : vector<16x64xbf16>, vector<64x256xbf16>, vector<16x256xf32> -> vector<16x256xf32>
    %95 = arith.addf %92, %94 : vector<16x256xf32>
    %96 = vector.broadcast %11 : vector<1x256xf32> to vector<16x256xf32>
    %97 = arith.addf %95, %96 : vector<16x256xf32>
    %98 = arith.negf %97 : vector<16x256xf32>
    %99 = math.exp %98 : vector<16x256xf32>
    %cst_42 = arith.constant 1.000000e+00 : f32
    %100 = vector.broadcast %cst_42 : f32 to vector<16x256xf32>
    %101 = arith.addf %100, %99 : vector<16x256xf32>
    %102 = arith.divf %100, %101 : vector<16x256xf32>
    %103 = vector.extract_strided_slice %102 {offsets = [0, 0], sizes = [16, 64], strides = [1, 1]} : vector<16x256xf32> to vector<16x64xf32>
    %104 = vector.extract_strided_slice %102 {offsets = [0, 64], sizes = [16, 64], strides = [1, 1]} : vector<16x256xf32> to vector<16x64xf32>
    %105 = vector.extract_strided_slice %102 {offsets = [0, 128], sizes = [16, 64], strides = [1, 1]} : vector<16x256xf32> to vector<16x64xf32>
    %cst_43 = arith.constant 2.000000e+00 : f32
    %106 = vector.broadcast %cst_43 : f32 to vector<16x64xf32>
    %107 = arith.mulf %106, %105 : vector<16x64xf32>
    %cst_44 = arith.constant 1.000000e+00 : f32
    %108 = vector.broadcast %cst_44 : f32 to vector<16x64xf32>
    %109 = arith.subf %107, %108 : vector<16x64xf32>
    %110 = vector.extract_strided_slice %102 {offsets = [0, 192], sizes = [16, 64], strides = [1, 1]} : vector<16x256xf32> to vector<16x64xf32>
    %111 = arith.mulf %104, %63 : vector<16x64xf32>
    %112 = arith.mulf %103, %109 : vector<16x64xf32>
    %113 = arith.addf %111, %112 : vector<16x64xf32>
    %114 = math.tanh %113 : vector<16x64xf32>
    %115 = arith.mulf %110, %114 : vector<16x64xf32>
    %c2_i32 = arith.constant 2 : i32
    %c16_i32_45 = arith.constant 16 : i32
    %116 = arith.muli %c2_i32, %c16_i32_45 : i32
    %117 = tpu.assume_multiple %116, 16 : i32
    %118 = arith.index_cast %117 : i32 to index
    %c0_46 = arith.constant 0 : index
    %119 = vector.load %arg11[%118, %c0_46] : memref<128x256xf32, #tpu.memory_space<vmem>>, vector<16x256xf32>
    %120 = arith.truncf %90 : vector<16x64xf32> to vector<16x64xbf16>
    %cst_47 = arith.constant dense<0.000000e+00> : vector<16x256xf32>
    %121 = tpu.matmul %120, %8, %cst_47 {dimension_numbers = #tpu.dot_dimension_numbers<[1], [0], [0], [1], [0, 0, 1, 1], [], []>} : vector<16x64xbf16>, vector<64x256xbf16>, vector<16x256xf32> -> vector<16x256xf32>
    %122 = arith.addf %119, %121 : vector<16x256xf32>
    %123 = arith.negf %122 : vector<16x256xf32>
    %124 = math.exp %123 : vector<16x256xf32>
    %cst_48 = arith.constant 1.000000e+00 : f32
    %125 = vector.broadcast %cst_48 : f32 to vector<16x256xf32>
    %126 = arith.addf %125, %124 : vector<16x256xf32>
    %127 = arith.divf %125, %126 : vector<16x256xf32>
    %128 = vector.extract_strided_slice %127 {offsets = [0, 0], sizes = [16, 64], strides = [1, 1]} : vector<16x256xf32> to vector<16x64xf32>
    %129 = vector.extract_strided_slice %127 {offsets = [0, 64], sizes = [16, 64], strides = [1, 1]} : vector<16x256xf32> to vector<16x64xf32>
    %130 = vector.extract_strided_slice %127 {offsets = [0, 128], sizes = [16, 64], strides = [1, 1]} : vector<16x256xf32> to vector<16x64xf32>
    %cst_49 = arith.constant 2.000000e+00 : f32
    %131 = vector.broadcast %cst_49 : f32 to vector<16x64xf32>
    %132 = arith.mulf %131, %130 : vector<16x64xf32>
    %cst_50 = arith.constant 1.000000e+00 : f32
    %133 = vector.broadcast %cst_50 : f32 to vector<16x64xf32>
    %134 = arith.subf %132, %133 : vector<16x64xf32>
    %135 = vector.extract_strided_slice %127 {offsets = [0, 192], sizes = [16, 64], strides = [1, 1]} : vector<16x256xf32> to vector<16x64xf32>
    %136 = arith.mulf %129, %88 : vector<16x64xf32>
    %137 = arith.mulf %128, %134 : vector<16x64xf32>
    %138 = arith.addf %136, %137 : vector<16x64xf32>
    %139 = math.tanh %138 : vector<16x64xf32>
    %140 = arith.mulf %135, %139 : vector<16x64xf32>
    %141 = arith.truncf %140 : vector<16x64xf32> to vector<16x64xbf16>
    %cst_51 = arith.constant dense<0.000000e+00> : vector<16x256xf32>
    %142 = tpu.matmul %141, %9, %cst_51 {dimension_numbers = #tpu.dot_dimension_numbers<[1], [0], [0], [1], [0, 0, 1, 1], [], []>} : vector<16x64xbf16>, vector<64x256xbf16>, vector<16x256xf32> -> vector<16x256xf32>
    %143 = arith.truncf %115 : vector<16x64xf32> to vector<16x64xbf16>
    %cst_52 = arith.constant dense<0.000000e+00> : vector<16x256xf32>
    %144 = tpu.matmul %143, %10, %cst_52 {dimension_numbers = #tpu.dot_dimension_numbers<[1], [0], [0], [1], [0, 0, 1, 1], [], []>} : vector<16x64xbf16>, vector<64x256xbf16>, vector<16x256xf32> -> vector<16x256xf32>
    %145 = arith.addf %142, %144 : vector<16x256xf32>
    %146 = vector.broadcast %11 : vector<1x256xf32> to vector<16x256xf32>
    %147 = arith.addf %145, %146 : vector<16x256xf32>
    %148 = arith.negf %147 : vector<16x256xf32>
    %149 = math.exp %148 : vector<16x256xf32>
    %cst_53 = arith.constant 1.000000e+00 : f32
    %150 = vector.broadcast %cst_53 : f32 to vector<16x256xf32>
    %151 = arith.addf %150, %149 : vector<16x256xf32>
    %152 = arith.divf %150, %151 : vector<16x256xf32>
    %153 = vector.extract_strided_slice %152 {offsets = [0, 0], sizes = [16, 64], strides = [1, 1]} : vector<16x256xf32> to vector<16x64xf32>
    %154 = vector.extract_strided_slice %152 {offsets = [0, 64], sizes = [16, 64], strides = [1, 1]} : vector<16x256xf32> to vector<16x64xf32>
    %155 = vector.extract_strided_slice %152 {offsets = [0, 128], sizes = [16, 64], strides = [1, 1]} : vector<16x256xf32> to vector<16x64xf32>
    %cst_54 = arith.constant 2.000000e+00 : f32
    %156 = vector.broadcast %cst_54 : f32 to vector<16x64xf32>
    %157 = arith.mulf %156, %155 : vector<16x64xf32>
    %cst_55 = arith.constant 1.000000e+00 : f32
    %158 = vector.broadcast %cst_55 : f32 to vector<16x64xf32>
    %159 = arith.subf %157, %158 : vector<16x64xf32>
    %160 = vector.extract_strided_slice %152 {offsets = [0, 192], sizes = [16, 64], strides = [1, 1]} : vector<16x256xf32> to vector<16x64xf32>
    %161 = arith.mulf %154, %113 : vector<16x64xf32>
    %162 = arith.mulf %153, %159 : vector<16x64xf32>
    %163 = arith.addf %161, %162 : vector<16x64xf32>
    %164 = math.tanh %163 : vector<16x64xf32>
    %165 = arith.mulf %160, %164 : vector<16x64xf32>
    %c3_i32 = arith.constant 3 : i32
    %c16_i32_56 = arith.constant 16 : i32
    %166 = arith.muli %c3_i32, %c16_i32_56 : i32
    %167 = tpu.assume_multiple %166, 16 : i32
    %168 = arith.index_cast %167 : i32 to index
    %c0_57 = arith.constant 0 : index
    %169 = vector.load %arg11[%168, %c0_57] : memref<128x256xf32, #tpu.memory_space<vmem>>, vector<16x256xf32>
    %170 = arith.truncf %140 : vector<16x64xf32> to vector<16x64xbf16>
    %cst_58 = arith.constant dense<0.000000e+00> : vector<16x256xf32>
    %171 = tpu.matmul %170, %8, %cst_58 {dimension_numbers = #tpu.dot_dimension_numbers<[1], [0], [0], [1], [0, 0, 1, 1], [], []>} : vector<16x64xbf16>, vector<64x256xbf16>, vector<16x256xf32> -> vector<16x256xf32>
    %172 = arith.addf %169, %171 : vector<16x256xf32>
    %173 = arith.negf %172 : vector<16x256xf32>
    %174 = math.exp %173 : vector<16x256xf32>
    %cst_59 = arith.constant 1.000000e+00 : f32
    %175 = vector.broadcast %cst_59 : f32 to vector<16x256xf32>
    %176 = arith.addf %175, %174 : vector<16x256xf32>
    %177 = arith.divf %175, %176 : vector<16x256xf32>
    %178 = vector.extract_strided_slice %177 {offsets = [0, 0], sizes = [16, 64], strides = [1, 1]} : vector<16x256xf32> to vector<16x64xf32>
    %179 = vector.extract_strided_slice %177 {offsets = [0, 64], sizes = [16, 64], strides = [1, 1]} : vector<16x256xf32> to vector<16x64xf32>
    %180 = vector.extract_strided_slice %177 {offsets = [0, 128], sizes = [16, 64], strides = [1, 1]} : vector<16x256xf32> to vector<16x64xf32>
    %cst_60 = arith.constant 2.000000e+00 : f32
    %181 = vector.broadcast %cst_60 : f32 to vector<16x64xf32>
    %182 = arith.mulf %181, %180 : vector<16x64xf32>
    %cst_61 = arith.constant 1.000000e+00 : f32
    %183 = vector.broadcast %cst_61 : f32 to vector<16x64xf32>
    %184 = arith.subf %182, %183 : vector<16x64xf32>
    %185 = vector.extract_strided_slice %177 {offsets = [0, 192], sizes = [16, 64], strides = [1, 1]} : vector<16x256xf32> to vector<16x64xf32>
    %186 = arith.mulf %179, %138 : vector<16x64xf32>
    %187 = arith.mulf %178, %184 : vector<16x64xf32>
    %188 = arith.addf %186, %187 : vector<16x64xf32>
    %189 = math.tanh %188 : vector<16x64xf32>
    %190 = arith.mulf %185, %189 : vector<16x64xf32>
    %191 = arith.truncf %190 : vector<16x64xf32> to vector<16x64xbf16>
    %cst_62 = arith.constant dense<0.000000e+00> : vector<16x256xf32>
    %192 = tpu.matmul %191, %9, %cst_62 {dimension_numbers = #tpu.dot_dimension_numbers<[1], [0], [0], [1], [0, 0, 1, 1], [], []>} : vector<16x64xbf16>, vector<64x256xbf16>, vector<16x256xf32> -> vector<16x256xf32>
    %193 = arith.truncf %165 : vector<16x64xf32> to vector<16x64xbf16>
    %cst_63 = arith.constant dense<0.000000e+00> : vector<16x256xf32>
    %194 = tpu.matmul %193, %10, %cst_63 {dimension_numbers = #tpu.dot_dimension_numbers<[1], [0], [0], [1], [0, 0, 1, 1], [], []>} : vector<16x64xbf16>, vector<64x256xbf16>, vector<16x256xf32> -> vector<16x256xf32>
    %195 = arith.addf %192, %194 : vector<16x256xf32>
    %196 = vector.broadcast %11 : vector<1x256xf32> to vector<16x256xf32>
    %197 = arith.addf %195, %196 : vector<16x256xf32>
    %198 = arith.negf %197 : vector<16x256xf32>
    %199 = math.exp %198 : vector<16x256xf32>
    %cst_64 = arith.constant 1.000000e+00 : f32
    %200 = vector.broadcast %cst_64 : f32 to vector<16x256xf32>
    %201 = arith.addf %200, %199 : vector<16x256xf32>
    %202 = arith.divf %200, %201 : vector<16x256xf32>
    %203 = vector.extract_strided_slice %202 {offsets = [0, 0], sizes = [16, 64], strides = [1, 1]} : vector<16x256xf32> to vector<16x64xf32>
    %204 = vector.extract_strided_slice %202 {offsets = [0, 64], sizes = [16, 64], strides = [1, 1]} : vector<16x256xf32> to vector<16x64xf32>
    %205 = vector.extract_strided_slice %202 {offsets = [0, 128], sizes = [16, 64], strides = [1, 1]} : vector<16x256xf32> to vector<16x64xf32>
    %cst_65 = arith.constant 2.000000e+00 : f32
    %206 = vector.broadcast %cst_65 : f32 to vector<16x64xf32>
    %207 = arith.mulf %206, %205 : vector<16x64xf32>
    %cst_66 = arith.constant 1.000000e+00 : f32
    %208 = vector.broadcast %cst_66 : f32 to vector<16x64xf32>
    %209 = arith.subf %207, %208 : vector<16x64xf32>
    %210 = vector.extract_strided_slice %202 {offsets = [0, 192], sizes = [16, 64], strides = [1, 1]} : vector<16x256xf32> to vector<16x64xf32>
    %211 = arith.mulf %204, %163 : vector<16x64xf32>
    %212 = arith.mulf %203, %209 : vector<16x64xf32>
    %213 = arith.addf %211, %212 : vector<16x64xf32>
    %214 = math.tanh %213 : vector<16x64xf32>
    %215 = arith.mulf %210, %214 : vector<16x64xf32>
    %c4_i32 = arith.constant 4 : i32
    %c16_i32_67 = arith.constant 16 : i32
    %216 = arith.muli %c4_i32, %c16_i32_67 : i32
    %217 = tpu.assume_multiple %216, 16 : i32
    %218 = arith.index_cast %217 : i32 to index
    %c0_68 = arith.constant 0 : index
    %219 = vector.load %arg11[%218, %c0_68] : memref<128x256xf32, #tpu.memory_space<vmem>>, vector<16x256xf32>
    %220 = arith.truncf %190 : vector<16x64xf32> to vector<16x64xbf16>
    %cst_69 = arith.constant dense<0.000000e+00> : vector<16x256xf32>
    %221 = tpu.matmul %220, %8, %cst_69 {dimension_numbers = #tpu.dot_dimension_numbers<[1], [0], [0], [1], [0, 0, 1, 1], [], []>} : vector<16x64xbf16>, vector<64x256xbf16>, vector<16x256xf32> -> vector<16x256xf32>
    %222 = arith.addf %219, %221 : vector<16x256xf32>
    %223 = arith.negf %222 : vector<16x256xf32>
    %224 = math.exp %223 : vector<16x256xf32>
    %cst_70 = arith.constant 1.000000e+00 : f32
    %225 = vector.broadcast %cst_70 : f32 to vector<16x256xf32>
    %226 = arith.addf %225, %224 : vector<16x256xf32>
    %227 = arith.divf %225, %226 : vector<16x256xf32>
    %228 = vector.extract_strided_slice %227 {offsets = [0, 0], sizes = [16, 64], strides = [1, 1]} : vector<16x256xf32> to vector<16x64xf32>
    %229 = vector.extract_strided_slice %227 {offsets = [0, 64], sizes = [16, 64], strides = [1, 1]} : vector<16x256xf32> to vector<16x64xf32>
    %230 = vector.extract_strided_slice %227 {offsets = [0, 128], sizes = [16, 64], strides = [1, 1]} : vector<16x256xf32> to vector<16x64xf32>
    %cst_71 = arith.constant 2.000000e+00 : f32
    %231 = vector.broadcast %cst_71 : f32 to vector<16x64xf32>
    %232 = arith.mulf %231, %230 : vector<16x64xf32>
    %cst_72 = arith.constant 1.000000e+00 : f32
    %233 = vector.broadcast %cst_72 : f32 to vector<16x64xf32>
    %234 = arith.subf %232, %233 : vector<16x64xf32>
    %235 = vector.extract_strided_slice %227 {offsets = [0, 192], sizes = [16, 64], strides = [1, 1]} : vector<16x256xf32> to vector<16x64xf32>
    %236 = arith.mulf %229, %188 : vector<16x64xf32>
    %237 = arith.mulf %228, %234 : vector<16x64xf32>
    %238 = arith.addf %236, %237 : vector<16x64xf32>
    %239 = math.tanh %238 : vector<16x64xf32>
    %240 = arith.mulf %235, %239 : vector<16x64xf32>
    %241 = arith.truncf %240 : vector<16x64xf32> to vector<16x64xbf16>
    %cst_73 = arith.constant dense<0.000000e+00> : vector<16x256xf32>
    %242 = tpu.matmul %241, %9, %cst_73 {dimension_numbers = #tpu.dot_dimension_numbers<[1], [0], [0], [1], [0, 0, 1, 1], [], []>} : vector<16x64xbf16>, vector<64x256xbf16>, vector<16x256xf32> -> vector<16x256xf32>
    %243 = arith.truncf %215 : vector<16x64xf32> to vector<16x64xbf16>
    %cst_74 = arith.constant dense<0.000000e+00> : vector<16x256xf32>
    %244 = tpu.matmul %243, %10, %cst_74 {dimension_numbers = #tpu.dot_dimension_numbers<[1], [0], [0], [1], [0, 0, 1, 1], [], []>} : vector<16x64xbf16>, vector<64x256xbf16>, vector<16x256xf32> -> vector<16x256xf32>
    %245 = arith.addf %242, %244 : vector<16x256xf32>
    %246 = vector.broadcast %11 : vector<1x256xf32> to vector<16x256xf32>
    %247 = arith.addf %245, %246 : vector<16x256xf32>
    %248 = arith.negf %247 : vector<16x256xf32>
    %249 = math.exp %248 : vector<16x256xf32>
    %cst_75 = arith.constant 1.000000e+00 : f32
    %250 = vector.broadcast %cst_75 : f32 to vector<16x256xf32>
    %251 = arith.addf %250, %249 : vector<16x256xf32>
    %252 = arith.divf %250, %251 : vector<16x256xf32>
    %253 = vector.extract_strided_slice %252 {offsets = [0, 0], sizes = [16, 64], strides = [1, 1]} : vector<16x256xf32> to vector<16x64xf32>
    %254 = vector.extract_strided_slice %252 {offsets = [0, 64], sizes = [16, 64], strides = [1, 1]} : vector<16x256xf32> to vector<16x64xf32>
    %255 = vector.extract_strided_slice %252 {offsets = [0, 128], sizes = [16, 64], strides = [1, 1]} : vector<16x256xf32> to vector<16x64xf32>
    %cst_76 = arith.constant 2.000000e+00 : f32
    %256 = vector.broadcast %cst_76 : f32 to vector<16x64xf32>
    %257 = arith.mulf %256, %255 : vector<16x64xf32>
    %cst_77 = arith.constant 1.000000e+00 : f32
    %258 = vector.broadcast %cst_77 : f32 to vector<16x64xf32>
    %259 = arith.subf %257, %258 : vector<16x64xf32>
    %260 = vector.extract_strided_slice %252 {offsets = [0, 192], sizes = [16, 64], strides = [1, 1]} : vector<16x256xf32> to vector<16x64xf32>
    %261 = arith.mulf %254, %213 : vector<16x64xf32>
    %262 = arith.mulf %253, %259 : vector<16x64xf32>
    %263 = arith.addf %261, %262 : vector<16x64xf32>
    %264 = math.tanh %263 : vector<16x64xf32>
    %265 = arith.mulf %260, %264 : vector<16x64xf32>
    %c5_i32 = arith.constant 5 : i32
    %c16_i32_78 = arith.constant 16 : i32
    %266 = arith.muli %c5_i32, %c16_i32_78 : i32
    %267 = tpu.assume_multiple %266, 16 : i32
    %268 = arith.index_cast %267 : i32 to index
    %c0_79 = arith.constant 0 : index
    %269 = vector.load %arg11[%268, %c0_79] : memref<128x256xf32, #tpu.memory_space<vmem>>, vector<16x256xf32>
    %270 = arith.truncf %240 : vector<16x64xf32> to vector<16x64xbf16>
    %cst_80 = arith.constant dense<0.000000e+00> : vector<16x256xf32>
    %271 = tpu.matmul %270, %8, %cst_80 {dimension_numbers = #tpu.dot_dimension_numbers<[1], [0], [0], [1], [0, 0, 1, 1], [], []>} : vector<16x64xbf16>, vector<64x256xbf16>, vector<16x256xf32> -> vector<16x256xf32>
    %272 = arith.addf %269, %271 : vector<16x256xf32>
    %273 = arith.negf %272 : vector<16x256xf32>
    %274 = math.exp %273 : vector<16x256xf32>
    %cst_81 = arith.constant 1.000000e+00 : f32
    %275 = vector.broadcast %cst_81 : f32 to vector<16x256xf32>
    %276 = arith.addf %275, %274 : vector<16x256xf32>
    %277 = arith.divf %275, %276 : vector<16x256xf32>
    %278 = vector.extract_strided_slice %277 {offsets = [0, 0], sizes = [16, 64], strides = [1, 1]} : vector<16x256xf32> to vector<16x64xf32>
    %279 = vector.extract_strided_slice %277 {offsets = [0, 64], sizes = [16, 64], strides = [1, 1]} : vector<16x256xf32> to vector<16x64xf32>
    %280 = vector.extract_strided_slice %277 {offsets = [0, 128], sizes = [16, 64], strides = [1, 1]} : vector<16x256xf32> to vector<16x64xf32>
    %cst_82 = arith.constant 2.000000e+00 : f32
    %281 = vector.broadcast %cst_82 : f32 to vector<16x64xf32>
    %282 = arith.mulf %281, %280 : vector<16x64xf32>
    %cst_83 = arith.constant 1.000000e+00 : f32
    %283 = vector.broadcast %cst_83 : f32 to vector<16x64xf32>
    %284 = arith.subf %282, %283 : vector<16x64xf32>
    %285 = vector.extract_strided_slice %277 {offsets = [0, 192], sizes = [16, 64], strides = [1, 1]} : vector<16x256xf32> to vector<16x64xf32>
    %286 = arith.mulf %279, %238 : vector<16x64xf32>
    %287 = arith.mulf %278, %284 : vector<16x64xf32>
    %288 = arith.addf %286, %287 : vector<16x64xf32>
    %289 = math.tanh %288 : vector<16x64xf32>
    %290 = arith.mulf %285, %289 : vector<16x64xf32>
    %291 = arith.truncf %290 : vector<16x64xf32> to vector<16x64xbf16>
    %cst_84 = arith.constant dense<0.000000e+00> : vector<16x256xf32>
    %292 = tpu.matmul %291, %9, %cst_84 {dimension_numbers = #tpu.dot_dimension_numbers<[1], [0], [0], [1], [0, 0, 1, 1], [], []>} : vector<16x64xbf16>, vector<64x256xbf16>, vector<16x256xf32> -> vector<16x256xf32>
    %293 = arith.truncf %265 : vector<16x64xf32> to vector<16x64xbf16>
    %cst_85 = arith.constant dense<0.000000e+00> : vector<16x256xf32>
    %294 = tpu.matmul %293, %10, %cst_85 {dimension_numbers = #tpu.dot_dimension_numbers<[1], [0], [0], [1], [0, 0, 1, 1], [], []>} : vector<16x64xbf16>, vector<64x256xbf16>, vector<16x256xf32> -> vector<16x256xf32>
    %295 = arith.addf %292, %294 : vector<16x256xf32>
    %296 = vector.broadcast %11 : vector<1x256xf32> to vector<16x256xf32>
    %297 = arith.addf %295, %296 : vector<16x256xf32>
    %298 = arith.negf %297 : vector<16x256xf32>
    %299 = math.exp %298 : vector<16x256xf32>
    %cst_86 = arith.constant 1.000000e+00 : f32
    %300 = vector.broadcast %cst_86 : f32 to vector<16x256xf32>
    %301 = arith.addf %300, %299 : vector<16x256xf32>
    %302 = arith.divf %300, %301 : vector<16x256xf32>
    %303 = vector.extract_strided_slice %302 {offsets = [0, 0], sizes = [16, 64], strides = [1, 1]} : vector<16x256xf32> to vector<16x64xf32>
    %304 = vector.extract_strided_slice %302 {offsets = [0, 64], sizes = [16, 64], strides = [1, 1]} : vector<16x256xf32> to vector<16x64xf32>
    %305 = vector.extract_strided_slice %302 {offsets = [0, 128], sizes = [16, 64], strides = [1, 1]} : vector<16x256xf32> to vector<16x64xf32>
    %cst_87 = arith.constant 2.000000e+00 : f32
    %306 = vector.broadcast %cst_87 : f32 to vector<16x64xf32>
    %307 = arith.mulf %306, %305 : vector<16x64xf32>
    %cst_88 = arith.constant 1.000000e+00 : f32
    %308 = vector.broadcast %cst_88 : f32 to vector<16x64xf32>
    %309 = arith.subf %307, %308 : vector<16x64xf32>
    %310 = vector.extract_strided_slice %302 {offsets = [0, 192], sizes = [16, 64], strides = [1, 1]} : vector<16x256xf32> to vector<16x64xf32>
    %311 = arith.mulf %304, %263 : vector<16x64xf32>
    %312 = arith.mulf %303, %309 : vector<16x64xf32>
    %313 = arith.addf %311, %312 : vector<16x64xf32>
    %314 = math.tanh %313 : vector<16x64xf32>
    %315 = arith.mulf %310, %314 : vector<16x64xf32>
    %c6_i32 = arith.constant 6 : i32
    %c16_i32_89 = arith.constant 16 : i32
    %316 = arith.muli %c6_i32, %c16_i32_89 : i32
    %317 = tpu.assume_multiple %316, 16 : i32
    %318 = arith.index_cast %317 : i32 to index
    %c0_90 = arith.constant 0 : index
    %319 = vector.load %arg11[%318, %c0_90] : memref<128x256xf32, #tpu.memory_space<vmem>>, vector<16x256xf32>
    %320 = arith.truncf %290 : vector<16x64xf32> to vector<16x64xbf16>
    %cst_91 = arith.constant dense<0.000000e+00> : vector<16x256xf32>
    %321 = tpu.matmul %320, %8, %cst_91 {dimension_numbers = #tpu.dot_dimension_numbers<[1], [0], [0], [1], [0, 0, 1, 1], [], []>} : vector<16x64xbf16>, vector<64x256xbf16>, vector<16x256xf32> -> vector<16x256xf32>
    %322 = arith.addf %319, %321 : vector<16x256xf32>
    %323 = arith.negf %322 : vector<16x256xf32>
    %324 = math.exp %323 : vector<16x256xf32>
    %cst_92 = arith.constant 1.000000e+00 : f32
    %325 = vector.broadcast %cst_92 : f32 to vector<16x256xf32>
    %326 = arith.addf %325, %324 : vector<16x256xf32>
    %327 = arith.divf %325, %326 : vector<16x256xf32>
    %328 = vector.extract_strided_slice %327 {offsets = [0, 0], sizes = [16, 64], strides = [1, 1]} : vector<16x256xf32> to vector<16x64xf32>
    %329 = vector.extract_strided_slice %327 {offsets = [0, 64], sizes = [16, 64], strides = [1, 1]} : vector<16x256xf32> to vector<16x64xf32>
    %330 = vector.extract_strided_slice %327 {offsets = [0, 128], sizes = [16, 64], strides = [1, 1]} : vector<16x256xf32> to vector<16x64xf32>
    %cst_93 = arith.constant 2.000000e+00 : f32
    %331 = vector.broadcast %cst_93 : f32 to vector<16x64xf32>
    %332 = arith.mulf %331, %330 : vector<16x64xf32>
    %cst_94 = arith.constant 1.000000e+00 : f32
    %333 = vector.broadcast %cst_94 : f32 to vector<16x64xf32>
    %334 = arith.subf %332, %333 : vector<16x64xf32>
    %335 = vector.extract_strided_slice %327 {offsets = [0, 192], sizes = [16, 64], strides = [1, 1]} : vector<16x256xf32> to vector<16x64xf32>
    %336 = arith.mulf %329, %288 : vector<16x64xf32>
    %337 = arith.mulf %328, %334 : vector<16x64xf32>
    %338 = arith.addf %336, %337 : vector<16x64xf32>
    %339 = math.tanh %338 : vector<16x64xf32>
    %340 = arith.mulf %335, %339 : vector<16x64xf32>
    %341 = arith.truncf %340 : vector<16x64xf32> to vector<16x64xbf16>
    %cst_95 = arith.constant dense<0.000000e+00> : vector<16x256xf32>
    %342 = tpu.matmul %341, %9, %cst_95 {dimension_numbers = #tpu.dot_dimension_numbers<[1], [0], [0], [1], [0, 0, 1, 1], [], []>} : vector<16x64xbf16>, vector<64x256xbf16>, vector<16x256xf32> -> vector<16x256xf32>
    %343 = arith.truncf %315 : vector<16x64xf32> to vector<16x64xbf16>
    %cst_96 = arith.constant dense<0.000000e+00> : vector<16x256xf32>
    %344 = tpu.matmul %343, %10, %cst_96 {dimension_numbers = #tpu.dot_dimension_numbers<[1], [0], [0], [1], [0, 0, 1, 1], [], []>} : vector<16x64xbf16>, vector<64x256xbf16>, vector<16x256xf32> -> vector<16x256xf32>
    %345 = arith.addf %342, %344 : vector<16x256xf32>
    %346 = vector.broadcast %11 : vector<1x256xf32> to vector<16x256xf32>
    %347 = arith.addf %345, %346 : vector<16x256xf32>
    %348 = arith.negf %347 : vector<16x256xf32>
    %349 = math.exp %348 : vector<16x256xf32>
    %cst_97 = arith.constant 1.000000e+00 : f32
    %350 = vector.broadcast %cst_97 : f32 to vector<16x256xf32>
    %351 = arith.addf %350, %349 : vector<16x256xf32>
    %352 = arith.divf %350, %351 : vector<16x256xf32>
    %353 = vector.extract_strided_slice %352 {offsets = [0, 0], sizes = [16, 64], strides = [1, 1]} : vector<16x256xf32> to vector<16x64xf32>
    %354 = vector.extract_strided_slice %352 {offsets = [0, 64], sizes = [16, 64], strides = [1, 1]} : vector<16x256xf32> to vector<16x64xf32>
    %355 = vector.extract_strided_slice %352 {offsets = [0, 128], sizes = [16, 64], strides = [1, 1]} : vector<16x256xf32> to vector<16x64xf32>
    %cst_98 = arith.constant 2.000000e+00 : f32
    %356 = vector.broadcast %cst_98 : f32 to vector<16x64xf32>
    %357 = arith.mulf %356, %355 : vector<16x64xf32>
    %cst_99 = arith.constant 1.000000e+00 : f32
    %358 = vector.broadcast %cst_99 : f32 to vector<16x64xf32>
    %359 = arith.subf %357, %358 : vector<16x64xf32>
    %360 = vector.extract_strided_slice %352 {offsets = [0, 192], sizes = [16, 64], strides = [1, 1]} : vector<16x256xf32> to vector<16x64xf32>
    %361 = arith.mulf %354, %313 : vector<16x64xf32>
    %362 = arith.mulf %353, %359 : vector<16x64xf32>
    %363 = arith.addf %361, %362 : vector<16x64xf32>
    %364 = math.tanh %363 : vector<16x64xf32>
    %365 = arith.mulf %360, %364 : vector<16x64xf32>
    %c7_i32 = arith.constant 7 : i32
    %c16_i32_100 = arith.constant 16 : i32
    %366 = arith.muli %c7_i32, %c16_i32_100 : i32
    %367 = tpu.assume_multiple %366, 16 : i32
    %368 = arith.index_cast %367 : i32 to index
    %c0_101 = arith.constant 0 : index
    %369 = vector.load %arg11[%368, %c0_101] : memref<128x256xf32, #tpu.memory_space<vmem>>, vector<16x256xf32>
    %370 = arith.truncf %340 : vector<16x64xf32> to vector<16x64xbf16>
    %cst_102 = arith.constant dense<0.000000e+00> : vector<16x256xf32>
    %371 = tpu.matmul %370, %8, %cst_102 {dimension_numbers = #tpu.dot_dimension_numbers<[1], [0], [0], [1], [0, 0, 1, 1], [], []>} : vector<16x64xbf16>, vector<64x256xbf16>, vector<16x256xf32> -> vector<16x256xf32>
    %372 = arith.addf %369, %371 : vector<16x256xf32>
    %373 = arith.negf %372 : vector<16x256xf32>
    %374 = math.exp %373 : vector<16x256xf32>
    %cst_103 = arith.constant 1.000000e+00 : f32
    %375 = vector.broadcast %cst_103 : f32 to vector<16x256xf32>
    %376 = arith.addf %375, %374 : vector<16x256xf32>
    %377 = arith.divf %375, %376 : vector<16x256xf32>
    %378 = vector.extract_strided_slice %377 {offsets = [0, 0], sizes = [16, 64], strides = [1, 1]} : vector<16x256xf32> to vector<16x64xf32>
    %379 = vector.extract_strided_slice %377 {offsets = [0, 64], sizes = [16, 64], strides = [1, 1]} : vector<16x256xf32> to vector<16x64xf32>
    %380 = vector.extract_strided_slice %377 {offsets = [0, 128], sizes = [16, 64], strides = [1, 1]} : vector<16x256xf32> to vector<16x64xf32>
    %cst_104 = arith.constant 2.000000e+00 : f32
    %381 = vector.broadcast %cst_104 : f32 to vector<16x64xf32>
    %382 = arith.mulf %381, %380 : vector<16x64xf32>
    %cst_105 = arith.constant 1.000000e+00 : f32
    %383 = vector.broadcast %cst_105 : f32 to vector<16x64xf32>
    %384 = arith.subf %382, %383 : vector<16x64xf32>
    %385 = vector.extract_strided_slice %377 {offsets = [0, 192], sizes = [16, 64], strides = [1, 1]} : vector<16x256xf32> to vector<16x64xf32>
    %386 = arith.mulf %379, %338 : vector<16x64xf32>
    %387 = arith.mulf %378, %384 : vector<16x64xf32>
    %388 = arith.addf %386, %387 : vector<16x64xf32>
    %389 = math.tanh %388 : vector<16x64xf32>
    %390 = arith.mulf %385, %389 : vector<16x64xf32>
    %391 = arith.truncf %390 : vector<16x64xf32> to vector<16x64xbf16>
    %cst_106 = arith.constant dense<0.000000e+00> : vector<16x256xf32>
    %392 = tpu.matmul %391, %9, %cst_106 {dimension_numbers = #tpu.dot_dimension_numbers<[1], [0], [0], [1], [0, 0, 1, 1], [], []>} : vector<16x64xbf16>, vector<64x256xbf16>, vector<16x256xf32> -> vector<16x256xf32>
    %393 = arith.truncf %365 : vector<16x64xf32> to vector<16x64xbf16>
    %cst_107 = arith.constant dense<0.000000e+00> : vector<16x256xf32>
    %394 = tpu.matmul %393, %10, %cst_107 {dimension_numbers = #tpu.dot_dimension_numbers<[1], [0], [0], [1], [0, 0, 1, 1], [], []>} : vector<16x64xbf16>, vector<64x256xbf16>, vector<16x256xf32> -> vector<16x256xf32>
    %395 = arith.addf %392, %394 : vector<16x256xf32>
    %396 = vector.broadcast %11 : vector<1x256xf32> to vector<16x256xf32>
    %397 = arith.addf %395, %396 : vector<16x256xf32>
    %398 = arith.negf %397 : vector<16x256xf32>
    %399 = math.exp %398 : vector<16x256xf32>
    %cst_108 = arith.constant 1.000000e+00 : f32
    %400 = vector.broadcast %cst_108 : f32 to vector<16x256xf32>
    %401 = arith.addf %400, %399 : vector<16x256xf32>
    %402 = arith.divf %400, %401 : vector<16x256xf32>
    %403 = vector.extract_strided_slice %402 {offsets = [0, 0], sizes = [16, 64], strides = [1, 1]} : vector<16x256xf32> to vector<16x64xf32>
    %404 = vector.extract_strided_slice %402 {offsets = [0, 64], sizes = [16, 64], strides = [1, 1]} : vector<16x256xf32> to vector<16x64xf32>
    %405 = vector.extract_strided_slice %402 {offsets = [0, 128], sizes = [16, 64], strides = [1, 1]} : vector<16x256xf32> to vector<16x64xf32>
    %cst_109 = arith.constant 2.000000e+00 : f32
    %406 = vector.broadcast %cst_109 : f32 to vector<16x64xf32>
    %407 = arith.mulf %406, %405 : vector<16x64xf32>
    %cst_110 = arith.constant 1.000000e+00 : f32
    %408 = vector.broadcast %cst_110 : f32 to vector<16x64xf32>
    %409 = arith.subf %407, %408 : vector<16x64xf32>
    %410 = vector.extract_strided_slice %402 {offsets = [0, 192], sizes = [16, 64], strides = [1, 1]} : vector<16x256xf32> to vector<16x64xf32>
    %411 = arith.mulf %404, %363 : vector<16x64xf32>
    %412 = arith.mulf %403, %409 : vector<16x64xf32>
    %413 = arith.addf %411, %412 : vector<16x64xf32>
    %414 = math.tanh %413 : vector<16x64xf32>
    %415 = arith.mulf %410, %414 : vector<16x64xf32>
    %c8_i32 = arith.constant 8 : i32
    %c0_111 = arith.constant 0 : index
    %c0_112 = arith.constant 0 : index
    %416 = vector.load %arg12[%c0_111, %c0_112] : memref<16x64xf32, #tpu.memory_space<vmem>>, vector<16x64xf32>
    tpu.vector_store %arg12[%c0_111, %c0_112], %390 {strides = array<i32>} : memref<16x64xf32, #tpu.memory_space<vmem>>, vector<16x64xf32>,
    %c0_113 = arith.constant 0 : index
    %c0_114 = arith.constant 0 : index
    %417 = vector.load %arg13[%c0_113, %c0_114] : memref<16x64xf32, #tpu.memory_space<vmem>>, vector<16x64xf32>
    tpu.vector_store %arg13[%c0_113, %c0_114], %388 {strides = array<i32>} : memref<16x64xf32, #tpu.memory_space<vmem>>, vector<16x64xf32>,
    %c0_115 = arith.constant 0 : index
    %c0_116 = arith.constant 0 : index
    %418 = vector.load %arg14[%c0_115, %c0_116] : memref<16x64xf32, #tpu.memory_space<vmem>>, vector<16x64xf32>
    tpu.vector_store %arg14[%c0_115, %c0_116], %415 {strides = array<i32>} : memref<16x64xf32, #tpu.memory_space<vmem>>, vector<16x64xf32>,
    %c0_117 = arith.constant 0 : index
    %c0_118 = arith.constant 0 : index
    %419 = vector.load %arg15[%c0_117, %c0_118] : memref<16x64xf32, #tpu.memory_space<vmem>>, vector<16x64xf32>
    tpu.vector_store %arg15[%c0_117, %c0_118], %413 {strides = array<i32>} : memref<16x64xf32, #tpu.memory_space<vmem>>, vector<16x64xf32>,
    %c0_i32_119 = arith.constant 0 : i32
    %420 = arith.cmpi eq, %arg1, %c0_i32_119 : i32
    %421 = arith.extui %420 : i1 to i32
    %c0_i32_120 = arith.constant 0 : i32
    %422 = arith.cmpi ne, %421, %c0_i32_120 : i32
    scf.if %422 {
      %c0_121 = arith.constant 0 : index
      %c0_122 = arith.constant 0 : index
      %423 = vector.load %arg8[%c0_121, %c0_122] : memref<1x64xf32, #tpu.memory_space<vmem>>, vector<1x64xf32>
      %424 = vector.broadcast %423 : vector<1x64xf32> to vector<16x64xf32>
      %425 = arith.mulf %415, %424 : vector<16x64xf32>
      %cst_123 = arith.constant dense<0.000000e+00> : vector<16xf32>
      %426 = vector.multi_reduction <add>, %425, %cst_123 [1] : vector<16x64xf32> to vector<16xf32>
      %427 = vector.shape_cast %426 : vector<16xf32> to vector<16x1xf32>
      %c0_124 = arith.constant 0 : index
      %c0_125 = arith.constant 0 : index
      %428 = vector.load %arg9[%c0_124, %c0_125] : memref<1x1xf32, #tpu.memory_space<vmem>>, vector<1x1xf32>
      %429 = vector.broadcast %428 : vector<1x1xf32> to vector<16x1xf32>
      %430 = arith.addf %427, %429 : vector<16x1xf32>
      %431 = vector.shape_cast %430 : vector<16x1xf32> to vector<16x1xf32>
      %432 = vector.broadcast %431 : vector<16x1xf32> to vector<16x128xf32>
      %c0_126 = arith.constant 0 : index
      %c0_127 = arith.constant 0 : index
      %433 = vector.load %arg10[%c0_126, %c0_127] : memref<16x128xf32, #tpu.memory_space<vmem>>, vector<16x128xf32>
      tpu.vector_store %arg10[%c0_126, %c0_127], %432 {strides = array<i32>} : memref<16x128xf32, #tpu.memory_space<vmem>>, vector<16x128xf32>,
    } else {
    }
    return
  }
  func.func @transform_0(%arg0: i32, %arg1: i32) -> (i32, i32, i32) {
    %c0_i32 = arith.constant 0 : i32
    %c0_i32_0 = arith.constant 0 : i32
    return %arg0, %arg1, %c0_i32 : i32, i32, i32
  }
  func.func @transform_1(%arg0: i32, %arg1: i32) -> (i32, i32) {
    %c0_i32 = arith.constant 0 : i32
    %c0_i32_0 = arith.constant 0 : i32
    %c0_i32_1 = arith.constant 0 : i32
    return %c0_i32, %c0_i32_0 : i32, i32
  }
  func.func @transform_2(%arg0: i32, %arg1: i32) -> (i32, i32) {
    %c0_i32 = arith.constant 0 : i32
    %c0_i32_0 = arith.constant 0 : i32
    %c0_i32_1 = arith.constant 0 : i32
    return %c0_i32, %c0_i32_0 : i32, i32
  }
  func.func @transform_3(%arg0: i32, %arg1: i32) -> (i32, i32) {
    %c0_i32 = arith.constant 0 : i32
    %c0_i32_0 = arith.constant 0 : i32
    %c0_i32_1 = arith.constant 0 : i32
    return %c0_i32, %c0_i32_0 : i32, i32
  }
  func.func @transform_4(%arg0: i32, %arg1: i32) -> (i32, i32) {
    %c0_i32 = arith.constant 0 : i32
    %c0_i32_0 = arith.constant 0 : i32
    %c0_i32_1 = arith.constant 0 : i32
    return %c0_i32, %c0_i32_0 : i32, i32
  }
  func.func @transform_5(%arg0: i32, %arg1: i32) -> (i32, i32) {
    %c0_i32 = arith.constant 0 : i32
    %c0_i32_0 = arith.constant 0 : i32
    %c0_i32_1 = arith.constant 0 : i32
    return %c0_i32, %c0_i32_0 : i32, i32
  }
  func.func @transform_6(%arg0: i32, %arg1: i32) -> (i32, i32) {
    %c0_i32 = arith.constant 0 : i32
    %c0_i32_0 = arith.constant 0 : i32
    %c0_i32_1 = arith.constant 0 : i32
    return %c0_i32, %c0_i32_0 : i32, i32
  }
  func.func @transform_7(%arg0: i32, %arg1: i32) -> (i32, i32) {
    %c0_i32 = arith.constant 0 : i32
    %c0_i32_0 = arith.constant 0 : i32
    %c0_i32_1 = arith.constant 0 : i32
    return %c0_i32, %c0_i32_0 : i32, i32
  }
  func.func @transform_8(%arg0: i32, %arg1: i32) -> (i32, i32) {
    %c0_i32 = arith.constant 0 : i32
    %c0_i32_0 = arith.constant 0 : i32
    return %arg0, %c0_i32 : i32, i32
  }
}

</mosaic_0001>

<llo_original>
// kernel: tpu_custom_call.1
$region0: #{tpu_custom_call.1}
  #allocation0 [shape = 'u32[]', space=smem, size = 0x4, offset = 0x4, fixed_abs, tag = 'smem constant byte address 0x4 - core index']
  #allocation1 [shape = 'u32[72,128]{1,0:T(1,128)}', space=vmem, size = 0x9000, scoped, tag = 'internal scratch']
  #allocation2 [shape = 'f32[128,256]{1,0:T(8,128)}', space=vmem, size = 0x20000, scoped, tag = 'scratch operand']
  #allocation3 [shape = 'f32[16,64]{1,0:T(8,128)}', space=vmem, size = 0x2000, scoped, tag = 'scratch operand']
  #allocation4 [shape = 'f32[16,64]{1,0:T(8,128)}', space=vmem, size = 0x2000, scoped, tag = 'scratch operand']
  #allocation5 [shape = 'f32[16,64]{1,0:T(8,128)}', space=vmem, size = 0x2000, scoped, tag = 'scratch operand']
  #allocation6 [shape = 'f32[16,64]{1,0:T(8,128)}', space=vmem, size = 0x2000, scoped, tag = 'scratch operand']
  #allocation7 [shape = 'f32[1,1]{1,0:T(1,128)S(1)}', space=vmem, size = 0x200, scoped, tag = 'scoped memory for tpu_custom_call.1']
  %s0 = inlined_call_operand.hbm [shape: bf16[1,128,128], index: 0, kind: input, shape index: {}]
  %s1 = inlined_call_operand.hbm [shape: bf16[128,256], index: 1, kind: input, shape index: {}]
  %s2 = inlined_call_operand.hbm [shape: bf16[64,256], index: 2, kind: input, shape index: {}]
  %s3 = inlined_call_operand.hbm [shape: bf16[64,256], index: 3, kind: input, shape index: {}]
  %s4 = inlined_call_operand.hbm [shape: bf16[64,256], index: 4, kind: input, shape index: {}]
  %s5 = inlined_call_operand.vmem [shape: f32[1,256], index: 5, kind: input, shape index: {}]
  %s6 = inlined_call_operand.vmem [shape: f32[1,64], index: 6, kind: input, shape index: {}]
  %s7 = inlined_call_operand.<no memory space> [shape: f32[1,1], index: 7, kind: input, shape index: {}]
  %s8 = inlined_call_operand.hbm [shape: f32[16,128], index: 8, kind: output, shape index: {}]
  %s9 = sld [smem:[#allocation0]]
  $region70: #{tpu_custom_call.1} parent=0
    _
  %s11 = ssub.s32 1, %s9
  %s12 = scalar_select 0, %s11, %s9
  %v13 = vstv %s7
  %14 = vst [vmem:[#allocation7] sm:$0x1] %v13
  $region1: #{tpu_custom_call.1} parent=0
    #allocation8 [shape = 'u8[32768]{0}', space=vmem, size = 0x8000, scoped, tag = 'input window, operand 0, single buffered']
    #allocation9 [shape = 's32[1]{0}', space=sflag, size = 0x4, scoped, tag = 'scoped memory for tpu_custom_call.1']
    #allocation10 [shape = 's32[1]{0}', space=sflag, size = 0x4, scoped, tag = 'scoped memory for tpu_custom_call.1']
    #allocation11 [shape = 'u8[65536]{0}', space=vmem, size = 0x10000, scoped, tag = 'input window, operand 1, single buffered']
    #allocation12 [shape = 's32[1]{0}', space=sflag, size = 0x4, scoped, tag = 'scoped memory for tpu_custom_call.1']
    #allocation13 [shape = 'u8[32768]{0}', space=vmem, size = 0x8000, scoped, tag = 'input window, operand 2, single buffered']
    #allocation14 [shape = 'u8[32768]{0}', space=vmem, size = 0x8000, scoped, tag = 'input window, operand 3, single buffered']
    #allocation15 [shape = 's32[1]{0}', space=sflag, size = 0x4, scoped, tag = 'scoped memory for tpu_custom_call.1']
    #allocation16 [shape = 'u8[32768]{0}', space=vmem, size = 0x8000, scoped, tag = 'input window, operand 4, single buffered']
    #allocation17 [shape = 'u8[8192]{0}', space=vmem, size = 0x2000, scoped, tag = 'output window, operand 0, single buffered']
    %15 = vsyncpa [#allocation9], 0
    %16 = vsyncpa [#allocation12], 0
    %17 = vsyncpa [#allocation15], 0
    %18 = vsyncpa [#allocation10], 0
    // Predicated region
    $region2: #{tpu_custom_call.1} parent=1 // pred_check
      _
    $region3: #{tpu_custom_call.1} parent=1 // pred_check_branch
      %20 = sbr.rel (0) target = $region5
    $region4: #{tpu_custom_call.1} parent=1 // pred_region
      %22 = vsyncadd [#allocation9], 0
      %s23 = sshll.u32 %s0, 4
      %s24 = int_to_ptr.hbm [resolvable:$true] %s23
      %s25 = sshll.u32 [#allocation8], 4
      %s26 = int_to_ptr.vmem [resolvable:$true] %s25
      %31 = dma.hbm_to_vmem [thread:$0]  %s24, 1024, %s26, [#allocation9], 64, 64, 4
    $region5: #{tpu_custom_call.1} parent=1 // pred_fallthru
      _
    // Predicated region
    $region6: #{tpu_custom_call.1} parent=1 // pred_check
      _
    $region7: #{tpu_custom_call.1} parent=1 // pred_check_branch
      %33 = sbr.rel (0) target = $region9
    $region8: #{tpu_custom_call.1} parent=1 // pred_region
      %35 = vsyncadd [#allocation12], 0
      %s36 = sshll.u32 %s1, 4
      %s37 = int_to_ptr.hbm [resolvable:$true] %s36
      %s38 = sshll.u32 [#allocation11], 4
      %s39 = int_to_ptr.vmem [resolvable:$true] %s38
      %44 = dma.hbm_to_vmem [thread:$0]  %s37, 2048, %s39, [#allocation12], 128, 128, 8
    $region9: #{tpu_custom_call.1} parent=1 // pred_fallthru
      _
    // Predicated region
    $region10: #{tpu_custom_call.1} parent=1 // pred_check
      _
    $region11: #{tpu_custom_call.1} parent=1 // pred_check_branch
      %46 = sbr.rel (0) target = $region13
    $region12: #{tpu_custom_call.1} parent=1 // pred_region
      %48 = vsyncadd [#allocation12], 0
      %s49 = sshll.u32 %s2, 4
      %s50 = int_to_ptr.hbm [resolvable:$true] %s49
      %s51 = sshll.u32 [#allocation13], 4
      %s52 = int_to_ptr.vmem [resolvable:$true] %s51
      %57 = dma.hbm_to_vmem [thread:$0]  %s50, 1024, %s52, [#allocation12], 128, 128, 8
    $region13: #{tpu_custom_call.1} parent=1 // pred_fallthru
      _
    // Predicated region
    $region14: #{tpu_custom_call.1} parent=1 // pred_check
      _
    $region15: #{tpu_custom_call.1} parent=1 // pred_check_branch
      %59 = sbr.rel (0) target = $region17
    $region16: #{tpu_custom_call.1} parent=1 // pred_region
      %61 = vsyncadd [#allocation15], 0
      %s62 = sshll.u32 %s3, 4
      %s63 = int_to_ptr.hbm [resolvable:$true] %s62
      %s64 = sshll.u32 [#allocation14], 4
      %s65 = int_to_ptr.vmem [resolvable:$true] %s64
      %70 = dma.hbm_to_vmem [thread:$0]  %s63, 1024, %s65, [#allocation15], 128, 128, 8
    $region17: #{tpu_custom_call.1} parent=1 // pred_fallthru
      _
    // Predicated region
    $region18: #{tpu_custom_call.1} parent=1 // pred_check
      _
    $region19: #{tpu_custom_call.1} parent=1 // pred_check_branch
      %72 = sbr.rel (0) target = $region21
    $region20: #{tpu_custom_call.1} parent=1 // pred_region
      %74 = vsyncadd [#allocation15], 0
      %s75 = sshll.u32 %s4, 4
      %s76 = int_to_ptr.hbm [resolvable:$true] %s75
      %s77 = sshll.u32 [#allocation16], 4
      %s78 = int_to_ptr.vmem [resolvable:$true] %s77
      %83 = dma.hbm_to_vmem [thread:$0]  %s76, 1024, %s78, [#allocation15], 128, 128, 8
    $region21: #{tpu_custom_call.1} parent=1 // pred_fallthru
      _
    // Predicated region
    $region22: #{tpu_custom_call.1} parent=1 // pred_check
      _
    $region23: #{tpu_custom_call.1} parent=1 // pred_check_branch
      %85 = sbr.rel (0) target = $region25
    $region24: #{tpu_custom_call.1} parent=1 // pred_region
      _
    $region25: #{tpu_custom_call.1} parent=1 // pred_fallthru
      _
    // Predicated region
    $region26: #{tpu_custom_call.1} parent=1 // pred_check
      _
    $region27: #{tpu_custom_call.1} parent=1 // pred_check_branch
      %87 = sbr.rel (0) target = $region29
    $region28: #{tpu_custom_call.1} parent=1 // pred_region
      _
    $region29: #{tpu_custom_call.1} parent=1 // pred_fallthru
      _
    // Predicated region
    $region30: #{tpu_custom_call.1} parent=1 // pred_check
      _
    $region31: #{tpu_custom_call.1} parent=1 // pred_check_branch
      %89 = sbr.rel (0) target = $region33
    $region32: #{tpu_custom_call.1} parent=1 // pred_region
      _
    $region33: #{tpu_custom_call.1} parent=1 // pred_fallthru
      _
    // Predicated region
    $region34: #{tpu_custom_call.1} parent=1 // pred_check
      _
    $region35: #{tpu_custom_call.1} parent=1 // pred_check_branch
      %91 = sbr.rel (0) target = $region37
    $region36: #{tpu_custom_call.1} parent=1 // pred_region
      %93 = dma.done [#allocation9], 1024
    $region37: #{tpu_custom_call.1} parent=1 // pred_fallthru
      _
    // Predicated region
    $region38: #{tpu_custom_call.1} parent=1 // pred_check
      _
    $region39: #{tpu_custom_call.1} parent=1 // pred_check_branch
      %95 = sbr.rel (0) target = $region41
    $region40: #{tpu_custom_call.1} parent=1 // pred_region
      %97 = dma.done [#allocation12], 2048
    $region41: #{tpu_custom_call.1} parent=1 // pred_fallthru
      _
    // Predicated region
    $region42: #{tpu_custom_call.1} parent=1 // pred_check
      _
    $region43: #{tpu_custom_call.1} parent=1 // pred_check_branch
      %99 = sbr.rel (0) target = $region45
    $region44: #{tpu_custom_call.1} parent=1 // pred_region
      %101 = dma.done [#allocation12], 1024
    $region45: #{tpu_custom_call.1} parent=1 // pred_fallthru
      _
    // Predicated region
    $region46: #{tpu_custom_call.1} parent=1 // pred_check
      _
    $region47: #{tpu_custom_call.1} parent=1 // pred_check_branch
      %103 = sbr.rel (0) target = $region49
    $region48: #{tpu_custom_call.1} parent=1 // pred_region
      %105 = dma.done [#allocation15], 1024
    $region49: #{tpu_custom_call.1} parent=1 // pred_fallthru
      _
    // Predicated region
    $region50: #{tpu_custom_call.1} parent=1 // pred_check
      _
    $region51: #{tpu_custom_call.1} parent=1 // pred_check_branch
      %107 = sbr.rel (0) target = $region53
    $region52: #{tpu_custom_call.1} parent=1 // pred_region
      %109 = dma.done [#allocation15], 1024
    $region53: #{tpu_custom_call.1} parent=1 // pred_fallthru
      _
    %p111 = scmp.eq.s32.totalorder 0, 0
    // Predicated region
    $region54: #{tpu_custom_call.1} parent=1 // pred_check
      %p112 = pneg %p111
    $region55: #{tpu_custom_call.1} parent=1 // pred_check_branch
      %114 = sbr.rel (%p112) target = $region57
    $region56: #{tpu_custom_call.1} parent=1 // pred_region
      %vm115 = vcmask 523264
      %116 = vst.msk [vmem:[#allocation3] sm:$0xff] %vm115, 0.0
      %117 = vst.msk [vmem:[#allocation3 + $0x8] sm:$0xff] %vm115, 0.0
      %118 = vst.msk [vmem:[#allocation4] sm:$0xff] %vm115, 0.0
      %119 = vst.msk [vmem:[#allocation4 + $0x8] sm:$0xff] %vm115, 0.0
      %120 = vst.msk [vmem:[#allocation5] sm:$0xff] %vm115, 0.0
      %121 = vst.msk [vmem:[#allocation5 + $0x8] sm:$0xff] %vm115, 0.0
      %122 = vst.msk [vmem:[#allocation6] sm:$0xff] %vm115, 0.0
      %123 = vst.msk [vmem:[#allocation6 + $0x8] sm:$0xff] %vm115, 0.0
      %124 = vst [vmem:[#allocation17] sm:$0xff] 0.0
      %125 = vst [vmem:[#allocation17 + $0x8] sm:$0xff] 0.0
    $region57: #{tpu_custom_call.1} parent=1 // pred_fallthru
      _
    %v126 = vld [vmem:[#allocation8] sm:$0xf]
    %v127 = vld [vmem:[#allocation8 + $0x4] sm:$0xf]
    %v128 = vld [vmem:[#allocation8 + $0x8] sm:$0xf]
    %v129 = vld [vmem:[#allocation8 + $0xc] sm:$0xf]
    %v130 = vld [vmem:[#allocation8 + $0x10] sm:$0xf]
    %v131 = vld [vmem:[#allocation8 + $0x14] sm:$0xf]
    %v132 = vld [vmem:[#allocation8 + $0x18] sm:$0xf]
    %v133 = vld [vmem:[#allocation8 + $0x1c] sm:$0xf]
    %v134 = vld [vmem:[#allocation8 + $0x20] sm:$0xf]
    %v135 = vld [vmem:[#allocation8 + $0x24] sm:$0xf]
    %v136 = vld [vmem:[#allocation8 + $0x28] sm:$0xf]
    %v137 = vld [vmem:[#allocation8 + $0x2c] sm:$0xf]
    %v138 = vld [vmem:[#allocation8 + $0x30] sm:$0xf]
    %v139 = vld [vmem:[#allocation8 + $0x34] sm:$0xf]
    %v140 = vld [vmem:[#allocation8 + $0x38] sm:$0xf]
    %v141 = vld [vmem:[#allocation8 + $0x3c] sm:$0xf]
    %v142 = vld [vmem:[#allocation11] sm:$0xff]
    %v143 = vld [vmem:[#allocation11 + $0x8] sm:$0xff]
    %v144 = vld [vmem:[#allocation11 + $0x10] sm:$0xff]
    %v145 = vld [vmem:[#allocation11 + $0x18] sm:$0xff]
    %v146 = vld [vmem:[#allocation11 + $0x20] sm:$0xff]
    %v147 = vld [vmem:[#allocation11 + $0x28] sm:$0xff]
    %v148 = vld [vmem:[#allocation11 + $0x30] sm:$0xff]
    %v149 = vld [vmem:[#allocation11 + $0x38] sm:$0xff]
    %v150 = vld [vmem:[#allocation11 + $0x40] sm:$0xff]
    %v151 = vld [vmem:[#allocation11 + $0x48] sm:$0xff]
    %v152 = vld [vmem:[#allocation11 + $0x50] sm:$0xff]
    %v153 = vld [vmem:[#allocation11 + $0x58] sm:$0xff]
    %v154 = vld [vmem:[#allocation11 + $0x60] sm:$0xff]
    %v155 = vld [vmem:[#allocation11 + $0x68] sm:$0xff]
    %v156 = vld [vmem:[#allocation11 + $0x70] sm:$0xff]
    %v157 = vld [vmem:[#allocation11 + $0x78] sm:$0xff]
    %v174 = vunpack.c.l.b16 %v126
    %v175 = vunpack.c.l.b16 %v127
    %v176 = vunpack.c.l.b16 %v128
    %v177 = vunpack.c.l.b16 %v129
    %v178 = vunpack.c.l.b16 %v130
    %v179 = vunpack.c.l.b16 %v131
    %v180 = vunpack.c.l.b16 %v132
    %v181 = vunpack.c.l.b16 %v133
    %v182 = vunpack.c.l.b16 %v134
    %v183 = vunpack.c.l.b16 %v135
    %v184 = vunpack.c.l.b16 %v136
    %v185 = vunpack.c.l.b16 %v137
    %v186 = vunpack.c.l.b16 %v138
    %v187 = vunpack.c.l.b16 %v139
    %v188 = vunpack.c.l.b16 %v140
    %v189 = vunpack.c.l.b16 %v141
    %v190 = vpack.c.b16 %v175, %v174
    %v191 = vpack.c.b16 %v177, %v176
    %v192 = vpack.c.b16 %v179, %v178
    %v193 = vpack.c.b16 %v181, %v180
    %v194 = vpack.c.b16 %v183, %v182
    %v195 = vpack.c.b16 %v185, %v184
    %v196 = vpack.c.b16 %v187, %v186
    %v197 = vpack.c.b16 %v189, %v188
    %v222 = vunpack.c.l.b16 %v142
    %v223 = vunpack.c.h.b16 %v142
    %v224 = vunpack.c.l.b16 %v143
    %v225 = vunpack.c.h.b16 %v143
    %v226 = vunpack.c.l.b16 %v144
    %v227 = vunpack.c.h.b16 %v144
    %v228 = vunpack.c.l.b16 %v145
    %v229 = vunpack.c.h.b16 %v145
    %v230 = vunpack.c.l.b16 %v146
    %v231 = vunpack.c.h.b16 %v146
    %v232 = vunpack.c.l.b16 %v147
    %v233 = vunpack.c.h.b16 %v147
    %v234 = vunpack.c.l.b16 %v148
    %v235 = vunpack.c.h.b16 %v148
    %v236 = vunpack.c.l.b16 %v149
    %v237 = vunpack.c.h.b16 %v149
    %v238 = vunpack.c.l.b16 %v150
    %v239 = vunpack.c.h.b16 %v150
    %v240 = vunpack.c.l.b16 %v151
    %v241 = vunpack.c.h.b16 %v151
    %v242 = vunpack.c.l.b16 %v152
    %v243 = vunpack.c.h.b16 %v152
    %v244 = vunpack.c.l.b16 %v153
    %v245 = vunpack.c.h.b16 %v153
    %v246 = vunpack.c.l.b16 %v154
    %v247 = vunpack.c.h.b16 %v154
    %v248 = vunpack.c.l.b16 %v155
    %v249 = vunpack.c.h.b16 %v155
    %v250 = vunpack.c.l.b16 %v156
    %v251 = vunpack.c.h.b16 %v156
    %v252 = vunpack.c.l.b16 %v157
    %v253 = vunpack.c.h.b16 %v157
    %v254 = vpack.c.b16 %v224, %v222
    %v255 = vpack.c.b16 %v225, %v223
    %v256 = vpack.c.b16 %v228, %v226
    %v257 = vpack.c.b16 %v229, %v227
    %v258 = vpack.c.b16 %v232, %v230
    %v259 = vpack.c.b16 %v233, %v231
    %v260 = vpack.c.b16 %v236, %v234
    %v261 = vpack.c.b16 %v237, %v235
    %v262 = vpack.c.b16 %v240, %v238
    %v263 = vpack.c.b16 %v241, %v239
    %v264 = vpack.c.b16 %v244, %v242
    %v265 = vpack.c.b16 %v245, %v243
    %v266 = vpack.c.b16 %v248, %v246
    %v267 = vpack.c.b16 %v249, %v247
    %v268 = vpack.c.b16 %v252, %v250
    %v269 = vpack.c.b16 %v253, %v251
    %286 = vmatpush.bf16.msra.mxu0 %v268
    %287 = vmatpush.bf16.msra.mxu0 %v266
    %288 = vmatpush.bf16.msra.mxu0 %v264
    %289 = vmatpush.bf16.msra.mxu0 %v262
    %290 = vmatpush.bf16.msra.mxu0 %v260
    %291 = vmatpush.bf16.msra.mxu0 %v258
    %292 = vmatpush.bf16.msra.mxu0 %v256
    %293 = vmatpush.bf16.msra.mxu0 %v254
    %294 = vmatmul.bf16.gmra.mxu0 %v190
    %v295 = vpop.f32.mrf.mxu0
    %v296 = vadd.f32 0.0, %v295
    %v297 = vpop.f32.mrf.mxu0
    %v298 = vadd.f32 0.0, %v297
    %299 = vmatmul.bf16.gmra.mxu0 %v191
    %v300 = vpop.f32.mrf.mxu0
    %v301 = vadd.f32 0.0, %v300
    %v302 = vpop.f32.mrf.mxu0
    %v303 = vadd.f32 0.0, %v302
    %304 = vmatmul.bf16.gmra.mxu0 %v192
    %v305 = vpop.f32.mrf.mxu0
    %v306 = vadd.f32 0.0, %v305
    %v307 = vpop.f32.mrf.mxu0
    %v308 = vadd.f32 0.0, %v307
    %309 = vmatmul.bf16.gmra.mxu0 %v193
    %v310 = vpop.f32.mrf.mxu0
    %v311 = vadd.f32 0.0, %v310
    %v312 = vpop.f32.mrf.mxu0
    %v313 = vadd.f32 0.0, %v312
    %314 = vmatmul.bf16.gmra.mxu0 %v194
    %v315 = vpop.f32.mrf.mxu0
    %v316 = vadd.f32 0.0, %v315
    %v317 = vpop.f32.mrf.mxu0
    %v318 = vadd.f32 0.0, %v317
    %319 = vmatmul.bf16.gmra.mxu0 %v195
    %v320 = vpop.f32.mrf.mxu0
    %v321 = vadd.f32 0.0, %v320
    %v322 = vpop.f32.mrf.mxu0
    %v323 = vadd.f32 0.0, %v322
    %324 = vmatmul.bf16.gmra.mxu0 %v196
    %v325 = vpop.f32.mrf.mxu0
    %v326 = vadd.f32 0.0, %v325
    %v327 = vpop.f32.mrf.mxu0
    %v328 = vadd.f32 0.0, %v327
    %329 = vmatmul.bf16.gmra.mxu0 %v197
    %v330 = vpop.f32.mrf.mxu0
    %v331 = vadd.f32 0.0, %v330
    %v332 = vpop.f32.mrf.mxu0
    %v333 = vadd.f32 0.0, %v332
    %334 = vdwg.mxu0
    %335 = vmatpush.bf16.msra.mxu0 %v269
    %336 = vmatpush.bf16.msra.mxu0 %v267
    %337 = vmatpush.bf16.msra.mxu0 %v265
    %338 = vmatpush.bf16.msra.mxu0 %v263
    %339 = vmatpush.bf16.msra.mxu0 %v261
    %340 = vmatpush.bf16.msra.mxu0 %v259
    %341 = vmatpush.bf16.msra.mxu0 %v257
    %342 = vmatpush.bf16.msra.mxu0 %v255
    %343 = vmatmul.bf16.gmra.mxu0 %v190
    %v344 = vpop.f32.mrf.mxu0
    %v345 = vadd.f32 0.0, %v344
    %v346 = vpop.f32.mrf.mxu0
    %v347 = vadd.f32 0.0, %v346
    %348 = vmatmul.bf16.gmra.mxu0 %v191
    %v349 = vpop.f32.mrf.mxu0
    %v350 = vadd.f32 0.0, %v349
    %v351 = vpop.f32.mrf.mxu0
    %v352 = vadd.f32 0.0, %v351
    %353 = vmatmul.bf16.gmra.mxu0 %v192
    %v354 = vpop.f32.mrf.mxu0
    %v355 = vadd.f32 0.0, %v354
    %v356 = vpop.f32.mrf.mxu0
    %v357 = vadd.f32 0.0, %v356
    %358 = vmatmul.bf16.gmra.mxu0 %v193
    %v359 = vpop.f32.mrf.mxu0
    %v360 = vadd.f32 0.0, %v359
    %v361 = vpop.f32.mrf.mxu0
    %v362 = vadd.f32 0.0, %v361
    %363 = vmatmul.bf16.gmra.mxu0 %v194
    %v364 = vpop.f32.mrf.mxu0
    %v365 = vadd.f32 0.0, %v364
    %v366 = vpop.f32.mrf.mxu0
    %v367 = vadd.f32 0.0, %v366
    %368 = vmatmul.bf16.gmra.mxu0 %v195
    %v369 = vpop.f32.mrf.mxu0
    %v370 = vadd.f32 0.0, %v369
    %v371 = vpop.f32.mrf.mxu0
    %v372 = vadd.f32 0.0, %v371
    %373 = vmatmul.bf16.gmra.mxu0 %v196
    %v374 = vpop.f32.mrf.mxu0
    %v375 = vadd.f32 0.0, %v374
    %v376 = vpop.f32.mrf.mxu0
    %v377 = vadd.f32 0.0, %v376
    %378 = vmatmul.bf16.gmra.mxu0 %v197
    %v379 = vpop.f32.mrf.mxu0
    %v380 = vadd.f32 0.0, %v379
    %v381 = vpop.f32.mrf.mxu0
    %v382 = vadd.f32 0.0, %v381
    %383 = vdwg.mxu0
    %384 = vst [vmem:[#allocation2] sm:$0xff] %v296
    %385 = vst [vmem:[#allocation2 + $0x8] sm:$0xff] %v345
    %386 = vst [vmem:[#allocation2 + $0x10] sm:$0xff] %v298
    %387 = vst [vmem:[#allocation2 + $0x18] sm:$0xff] %v347
    %388 = vst [vmem:[#allocation2 + $0x20] sm:$0xff] %v301
    %389 = vst [vmem:[#allocation2 + $0x28] sm:$0xff] %v350
    %390 = vst [vmem:[#allocation2 + $0x30] sm:$0xff] %v303
    %391 = vst [vmem:[#allocation2 + $0x38] sm:$0xff] %v352
    %392 = vst [vmem:[#allocation2 + $0x40] sm:$0xff] %v306
    %393 = vst [vmem:[#allocation2 + $0x48] sm:$0xff] %v355
    %394 = vst [vmem:[#allocation2 + $0x50] sm:$0xff] %v308
    %395 = vst [vmem:[#allocation2 + $0x58] sm:$0xff] %v357
    %396 = vst [vmem:[#allocation2 + $0x60] sm:$0xff] %v311
    %397 = vst [vmem:[#allocation2 + $0x68] sm:$0xff] %v360
    %398 = vst [vmem:[#allocation2 + $0x70] sm:$0xff] %v313
    %399 = vst [vmem:[#allocation2 + $0x78] sm:$0xff] %v362
    %400 = vst [vmem:[#allocation2 + $0x80] sm:$0xff] %v316
    %401 = vst [vmem:[#allocation2 + $0x88] sm:$0xff] %v365
    %402 = vst [vmem:[#allocation2 + $0x90] sm:$0xff] %v318
    %403 = vst [vmem:[#allocation2 + $0x98] sm:$0xff] %v367
    %404 = vst [vmem:[#allocation2 + $0xa0] sm:$0xff] %v321
    %405 = vst [vmem:[#allocation2 + $0xa8] sm:$0xff] %v370
    %406 = vst [vmem:[#allocation2 + $0xb0] sm:$0xff] %v323
    %407 = vst [vmem:[#allocation2 + $0xb8] sm:$0xff] %v372
    %408 = vst [vmem:[#allocation2 + $0xc0] sm:$0xff] %v326
    %409 = vst [vmem:[#allocation2 + $0xc8] sm:$0xff] %v375
    %410 = vst [vmem:[#allocation2 + $0xd0] sm:$0xff] %v328
    %411 = vst [vmem:[#allocation2 + $0xd8] sm:$0xff] %v377
    %412 = vst [vmem:[#allocation2 + $0xe0] sm:$0xff] %v331
    %413 = vst [vmem:[#allocation2 + $0xe8] sm:$0xff] %v380
    %414 = vst [vmem:[#allocation2 + $0xf0] sm:$0xff] %v333
    %415 = vst [vmem:[#allocation2 + $0xf8] sm:$0xff] %v382
    %v416 = vld [vmem:[#allocation13] sm:$0xff]
    %v417 = vld [vmem:[#allocation13 + $0x8] sm:$0xff]
    %v418 = vld [vmem:[#allocation13 + $0x10] sm:$0xff]
    %v419 = vld [vmem:[#allocation13 + $0x18] sm:$0xff]
    %v420 = vld [vmem:[#allocation13 + $0x20] sm:$0xff]
    %v421 = vld [vmem:[#allocation13 + $0x28] sm:$0xff]
    %v422 = vld [vmem:[#allocation13 + $0x30] sm:$0xff]
    %v423 = vld [vmem:[#allocation13 + $0x38] sm:$0xff]
    %v424 = vld [vmem:[#allocation14] sm:$0xff]
    %v425 = vld [vmem:[#allocation14 + $0x8] sm:$0xff]
    %v426 = vld [vmem:[#allocation14 + $0x10] sm:$0xff]
    %v427 = vld [vmem:[#allocation14 + $0x18] sm:$0xff]
    %v428 = vld [vmem:[#allocation14 + $0x20] sm:$0xff]
    %v429 = vld [vmem:[#allocation14 + $0x28] sm:$0xff]
    %v430 = vld [vmem:[#allocation14 + $0x30] sm:$0xff]
    %v431 = vld [vmem:[#allocation14 + $0x38] sm:$0xff]
    %v432 = vld [vmem:[#allocation16] sm:$0xff]
    %v433 = vld [vmem:[#allocation16 + $0x8] sm:$0xff]
    %v434 = vld [vmem:[#allocation16 + $0x10] sm:$0xff]
    %v435 = vld [vmem:[#allocation16 + $0x18] sm:$0xff]
    %v436 = vld [vmem:[#allocation16 + $0x20] sm:$0xff]
    %v437 = vld [vmem:[#allocation16 + $0x28] sm:$0xff]
    %v438 = vld [vmem:[#allocation16 + $0x30] sm:$0xff]
    %v439 = vld [vmem:[#allocation16 + $0x38] sm:$0xff]
    %v440 = vld [vmem:[%s5] sm:$0x3]
    %v441 = vld [vmem:[#allocation3] sm:$0xff]
    %v442 = vld [vmem:[#allocation3 + $0x8] sm:$0xff]
    %v443 = vld [vmem:[#allocation4] sm:$0xff]
    %v444 = vld [vmem:[#allocation4 + $0x8] sm:$0xff]
    %v445 = vld [vmem:[#allocation5] sm:$0xff]
    %v446 = vld [vmem:[#allocation5 + $0x8] sm:$0xff]
    %v447 = vld [vmem:[#allocation6] sm:$0xff]
    %v448 = vld [vmem:[#allocation6 + $0x8] sm:$0xff]
    %s449 = smul.u32 0, 2
    %s450 = smul.addr %s449, 8
    %s451 = scalar_lea.vmem [#allocation2], %s450
    %v452 = vld [vmem:[%s451] sm:$0xff]
    %v453 = vld [vmem:[%s451 + $0x8] sm:$0xff]
    %v454 = vld [vmem:[%s451 + $0x10] sm:$0xff]
    %v455 = vld [vmem:[%s451 + $0x18] sm:$0xff]
    %v456 = vpack.c.bf16 %v442, %v441
    %v465 = vunpack.c.l.b16 %v416
    %v466 = vunpack.c.h.b16 %v416
    %v467 = vunpack.c.l.b16 %v417
    %v468 = vunpack.c.h.b16 %v417
    %v469 = vunpack.c.l.b16 %v418
    %v470 = vunpack.c.h.b16 %v418
    %v471 = vunpack.c.l.b16 %v419
    %v472 = vunpack.c.h.b16 %v419
    %v473 = vunpack.c.l.b16 %v420
    %v474 = vunpack.c.h.b16 %v420
    %v475 = vunpack.c.l.b16 %v421
    %v476 = vunpack.c.h.b16 %v421
    %v477 = vunpack.c.l.b16 %v422
    %v478 = vunpack.c.h.b16 %v422
    %v479 = vunpack.c.l.b16 %v423
    %v480 = vunpack.c.h.b16 %v423
    %v481 = vpack.c.b16 %v467, %v465
    %v482 = vpack.c.b16 %v468, %v466
    %v483 = vpack.c.b16 %v471, %v469
    %v484 = vpack.c.b16 %v472, %v470
    %v485 = vpack.c.b16 %v475, %v473
    %v486 = vpack.c.b16 %v476, %v474
    %v487 = vpack.c.b16 %v479, %v477
    %v488 = vpack.c.b16 %v480, %v478
    %vm497 = vcmask 523264
    %v499 = vsel %vm497, %v456, 0
    %501 = vmatpush.bf16.msra.mxu0 0
    %502 = vmatpush.bf16.msra.mxu0 0
    %503 = vmatpush.bf16.msra.mxu0 0
    %504 = vmatpush.bf16.msra.mxu0 0
    %505 = vmatpush.bf16.msra.mxu0 %v487
    %506 = vmatpush.bf16.msra.mxu0 %v485
    %507 = vmatpush.bf16.msra.mxu0 %v483
    %508 = vmatpush.bf16.msra.mxu0 %v481
    %509 = vmatmul.bf16.gmra.mxu0 %v499
    %v510 = vpop.f32.mrf.mxu0
    %v511 = vadd.f32 0.0, %v510
    %v512 = vpop.f32.mrf.mxu0
    %v513 = vadd.f32 0.0, %v512
    %514 = vdwg.mxu0
    %515 = vmatpush.bf16.msra.mxu0 0
    %516 = vmatpush.bf16.msra.mxu0 0
    %517 = vmatpush.bf16.msra.mxu0 0
    %518 = vmatpush.bf16.msra.mxu0 0
    %519 = vmatpush.bf16.msra.mxu0 %v488
    %520 = vmatpush.bf16.msra.mxu0 %v486
    %521 = vmatpush.bf16.msra.mxu0 %v484
    %522 = vmatpush.bf16.msra.mxu0 %v482
    %523 = vmatmul.bf16.gmra.mxu0 %v499
    %v524 = vpop.f32.mrf.mxu0
    %v525 = vadd.f32 0.0, %v524
    %v526 = vpop.f32.mrf.mxu0
    %v527 = vadd.f32 0.0, %v526
    %528 = vdwg.mxu0
    %v529 = vadd.f32 %v452, %v511
    %v530 = vadd.f32 %v453, %v525
    %v531 = vadd.f32 %v454, %v513
    %v532 = vadd.f32 %v455, %v527
    %v533 = vxor.u32 %v529, 2147483648
    %v534 = vxor.u32 %v530, 2147483648
    %v535 = vxor.u32 %v531, 2147483648
    %v536 = vxor.u32 %v532, 2147483648
    %v537 = vmul.f32 %v533, 1.442695
    %v538 = vpow.pop %v537
    %v539 = vmul.f32 %v534, 1.442695
    %v540 = vpow.pop %v539
    %v541 = vmul.f32 %v535, 1.442695
    %v542 = vpow.pop %v541
    %v543 = vmul.f32 %v536, 1.442695
    %v544 = vpow.pop %v543
    %v545 = vadd.f32 %v538, 1.0
    %v546 = vadd.f32 %v540, 1.0
    %v547 = vadd.f32 %v542, 1.0
    %v548 = vadd.f32 %v544, 1.0
    %v549 = vrcp.pop %v545
    %v550 = vmul.f32 %v545, %v549
    %v551 = vsub.f32 1.0, %v550
    %v552 = vmul.f32 %v549, %v551
    %v553 = vadd.f32 %v549, %v552
    %vm554 = vweird.f32 %v545
    %vm555 = vweird.f32 %v549
    %vm556 = vmor %vm554, %vm555
    %v557 = vsel %vm556, %v549, %v553
    %v558 = vand.u32 2147483647, %v545
    %vm559 = vcmp.eq.f32.partialorder %v558, 8.507059e+37
    %v560 = vand.u32 %v545, 2147483648
    %v561 = vor.u32 1.1754944e-38, %v560
    %v562 = vsel %vm559, %v561, %v557
    %v563 = vmul.f32 1.0, %v562
    %v564 = vrcp.pop %v546
    %v565 = vmul.f32 %v546, %v564
    %v566 = vsub.f32 1.0, %v565
    %v567 = vmul.f32 %v564, %v566
    %v568 = vadd.f32 %v564, %v567
    %vm569 = vweird.f32 %v546
    %vm570 = vweird.f32 %v564
    %vm571 = vmor %vm569, %vm570
    %v572 = vsel %vm571, %v564, %v568
    %v573 = vand.u32 2147483647, %v546
    %vm574 = vcmp.eq.f32.partialorder %v573, 8.507059e+37
    %v575 = vand.u32 %v546, 2147483648
    %v576 = vor.u32 1.1754944e-38, %v575
    %v577 = vsel %vm574, %v576, %v572
    %v578 = vmul.f32 1.0, %v577
    %v579 = vrcp.pop %v547
    %v580 = vmul.f32 %v547, %v579
    %v581 = vsub.f32 1.0, %v580
    %v582 = vmul.f32 %v579, %v581
    %v583 = vadd.f32 %v579, %v582
    %vm584 = vweird.f32 %v547
    %vm585 = vweird.f32 %v579
    %vm586 = vmor %vm584, %vm585
    %v587 = vsel %vm586, %v579, %v583
    %v588 = vand.u32 2147483647, %v547
    %vm589 = vcmp.eq.f32.partialorder %v588, 8.507059e+37
    %v590 = vand.u32 %v547, 2147483648
    %v591 = vor.u32 1.1754944e-38, %v590
    %v592 = vsel %vm589, %v591, %v587
    %v593 = vmul.f32 1.0, %v592
    %v594 = vrcp.pop %v548
    %v595 = vmul.f32 %v548, %v594
    %v596 = vsub.f32 1.0, %v595
    %v597 = vmul.f32 %v594, %v596
    %v598 = vadd.f32 %v594, %v597
    %vm599 = vweird.f32 %v548
    %vm600 = vweird.f32 %v594
    %vm601 = vmor %vm599, %vm600
    %v602 = vsel %vm601, %v594, %v598
    %v603 = vand.u32 2147483647, %v548
    %vm604 = vcmp.eq.f32.partialorder %v603, 8.507059e+37
    %v605 = vand.u32 %v548, 2147483648
    %v606 = vor.u32 1.1754944e-38, %v605
    %v607 = vsel %vm604, %v606, %v602
    %v608 = vmul.f32 1.0, %v607
    %v609 = vmul.f32 %v578, 2.0
    %v610 = vmul.f32 %v608, 2.0
    %v611 = vsub.f32 %v609, 1.0
    %v612 = vsub.f32 %v610, 1.0
    %615 = vrot.lane.b32.xlu0 %v443, 64
    %v616 = vpop.permute.xlu0 %615
    %617 = vrot.lane.b32.xlu0 %v444, 64
    %v618 = vpop.permute.xlu0 %617
    %v621 = vmul.f32 %v563, %v616
    %v622 = vmul.f32 %v593, %v618
    %v623 = vmul.f32 %v563, %v611
    %v624 = vmul.f32 %v593, %v612
    %627 = vrot.lane.b32.xlu0 %v623, 64
    %v628 = vpop.permute.xlu0 %627
    %629 = vrot.lane.b32.xlu0 %v624, 64
    %v630 = vpop.permute.xlu0 %629
    %v633 = vadd.f32 %v621, %v628
    %v634 = vadd.f32 %v622, %v630
    %v635 = vtanh.pop %v633
    %v636 = vtanh.pop %v634
    %v637 = vmul.f32 %v578, %v635
    %v638 = vmul.f32 %v608, %v636
    %v639 = vpack.c.bf16 %v638, %v637
    %v640 = vpack.c.bf16 %v446, %v445
    %v649 = vunpack.c.l.b16 %v432
    %v650 = vunpack.c.h.b16 %v432
    %v651 = vunpack.c.l.b16 %v433
    %v652 = vunpack.c.h.b16 %v433
    %v653 = vunpack.c.l.b16 %v434
    %v654 = vunpack.c.h.b16 %v434
    %v655 = vunpack.c.l.b16 %v435
    %v656 = vunpack.c.h.b16 %v435
    %v657 = vunpack.c.l.b16 %v436
    %v658 = vunpack.c.h.b16 %v436
    %v659 = vunpack.c.l.b16 %v437
    %v660 = vunpack.c.h.b16 %v437
    %v661 = vunpack.c.l.b16 %v438
    %v662 = vunpack.c.h.b16 %v438
    %v663 = vunpack.c.l.b16 %v439
    %v664 = vunpack.c.h.b16 %v439
    %v665 = vpack.c.b16 %v651, %v649
    %v666 = vpack.c.b16 %v652, %v650
    %v667 = vpack.c.b16 %v655, %v653
    %v668 = vpack.c.b16 %v656, %v654
    %v669 = vpack.c.b16 %v659, %v657
    %v670 = vpack.c.b16 %v660, %v658
    %v671 = vpack.c.b16 %v663, %v661
    %v672 = vpack.c.b16 %v664, %v662
    %v682 = vsel %vm497, %v640, 0
    %684 = vmatpush.bf16.msra.mxu0 0
    %685 = vmatpush.bf16.msra.mxu0 0
    %686 = vmatpush.bf16.msra.mxu0 0
    %687 = vmatpush.bf16.msra.mxu0 0
    %688 = vmatpush.bf16.msra.mxu0 %v671
    %689 = vmatpush.bf16.msra.mxu0 %v669
    %690 = vmatpush.bf16.msra.mxu0 %v667
    %691 = vmatpush.bf16.msra.mxu0 %v665
    %692 = vmatmul.bf16.gmra.mxu0 %v682
    %v693 = vpop.f32.mrf.mxu0
    %v694 = vadd.f32 0.0, %v693
    %v695 = vpop.f32.mrf.mxu0
    %v696 = vadd.f32 0.0, %v695
    %697 = vdwg.mxu0
    %698 = vmatpush.bf16.msra.mxu0 0
    %699 = vmatpush.bf16.msra.mxu0 0
    %700 = vmatpush.bf16.msra.mxu0 0
    %701 = vmatpush.bf16.msra.mxu0 0
    %702 = vmatpush.bf16.msra.mxu0 %v672
    %703 = vmatpush.bf16.msra.mxu0 %v670
    %704 = vmatpush.bf16.msra.mxu0 %v668
    %705 = vmatpush.bf16.msra.mxu0 %v666
    %706 = vmatmul.bf16.gmra.mxu0 %v682
    %v707 = vpop.f32.mrf.mxu0
    %v708 = vadd.f32 0.0, %v707
    %v709 = vpop.f32.mrf.mxu0
    %v710 = vadd.f32 0.0, %v709
    %711 = vdwg.mxu0
    %713 = vrot.lane.b32.xlu0 %v639, 64
    %v714 = vpop.permute.xlu0 %713
    %v723 = vunpack.c.l.b16 %v424
    %v724 = vunpack.c.h.b16 %v424
    %v725 = vunpack.c.l.b16 %v425
    %v726 = vunpack.c.h.b16 %v425
    %v727 = vunpack.c.l.b16 %v426
    %v728 = vunpack.c.h.b16 %v426
    %v729 = vunpack.c.l.b16 %v427
    %v730 = vunpack.c.h.b16 %v427
    %v731 = vunpack.c.l.b16 %v428
    %v732 = vunpack.c.h.b16 %v428
    %v733 = vunpack.c.l.b16 %v429
    %v734 = vunpack.c.h.b16 %v429
    %v735 = vunpack.c.l.b16 %v430
    %v736 = vunpack.c.h.b16 %v430
    %v737 = vunpack.c.l.b16 %v431
    %v738 = vunpack.c.h.b16 %v431
    %v739 = vpack.c.b16 %v725, %v723
    %v740 = vpack.c.b16 %v726, %v724
    %v741 = vpack.c.b16 %v729, %v727
    %v742 = vpack.c.b16 %v730, %v728
    %v743 = vpack.c.b16 %v733, %v731
    %v744 = vpack.c.b16 %v734, %v732
    %v745 = vpack.c.b16 %v737, %v735
    %v746 = vpack.c.b16 %v738, %v736
    %v756 = vsel %vm497, %v714, 0
    %758 = vmatpush.bf16.msra.mxu0 0
    %759 = vmatpush.bf16.msra.mxu0 0
    %760 = vmatpush.bf16.msra.mxu0 0
    %761 = vmatpush.bf16.msra.mxu0 0
    %762 = vmatpush.bf16.msra.mxu0 %v745
    %763 = vmatpush.bf16.msra.mxu0 %v743
    %764 = vmatpush.bf16.msra.mxu0 %v741
    %765 = vmatpush.bf16.msra.mxu0 %v739
    %766 = vmatmul.bf16.gmra.mxu0 %v756
    %v767 = vpop.f32.mrf.mxu0
    %v768 = vadd.f32 %v694, %v767
    %v769 = vpop.f32.mrf.mxu0
    %v770 = vadd.f32 %v696, %v769
    %771 = vdwg.mxu0
    %772 = vmatpush.bf16.msra.mxu0 0
    %773 = vmatpush.bf16.msra.mxu0 0
    %774 = vmatpush.bf16.msra.mxu0 0
    %775 = vmatpush.bf16.msra.mxu0 0
    %776 = vmatpush.bf16.msra.mxu0 %v746
    %777 = vmatpush.bf16.msra.mxu0 %v744
    %778 = vmatpush.bf16.msra.mxu0 %v742
    %779 = vmatpush.bf16.msra.mxu0 %v740
    %780 = vmatmul.bf16.gmra.mxu0 %v756
    %v781 = vpop.f32.mrf.mxu0
    %v782 = vadd.f32 %v708, %v781
    %v783 = vpop.f32.mrf.mxu0
    %v784 = vadd.f32 %v710, %v783
    %785 = vdwg.mxu0
    %v787 = vperm.slane %v440, 0
    %v788 = vperm.slane %v440, 1
    %v791 = vadd.f32 %v768, %v787
    %v792 = vadd.f32 %v782, %v788
    %v793 = vadd.f32 %v770, %v787
    %v794 = vadd.f32 %v784, %v788
    %v795 = vxor.u32 %v791, 2147483648
    %v796 = vxor.u32 %v792, 2147483648
    %v797 = vxor.u32 %v793, 2147483648
    %v798 = vxor.u32 %v794, 2147483648
    %v799 = vmul.f32 %v795, 1.442695
    %v800 = vpow.pop %v799
    %v801 = vmul.f32 %v796, 1.442695
    %v802 = vpow.pop %v801
    %v803 = vmul.f32 %v797, 1.442695
    %v804 = vpow.pop %v803
    %v805 = vmul.f32 %v798, 1.442695
    %v806 = vpow.pop %v805
    %v807 = vadd.f32 %v800, 1.0
    %v808 = vadd.f32 %v802, 1.0
    %v809 = vadd.f32 %v804, 1.0
    %v810 = vadd.f32 %v806, 1.0
    %v811 = vrcp.pop %v807
    %v812 = vmul.f32 %v807, %v811
    %v813 = vsub.f32 1.0, %v812
    %v814 = vmul.f32 %v811, %v813
    %v815 = vadd.f32 %v811, %v814
    %vm816 = vweird.f32 %v807
    %vm817 = vweird.f32 %v811
    %vm818 = vmor %vm816, %vm817
    %v819 = vsel %vm818, %v811, %v815
    %v820 = vand.u32 2147483647, %v807
    %vm821 = vcmp.eq.f32.partialorder %v820, 8.507059e+37
    %v822 = vand.u32 %v807, 2147483648
    %v823 = vor.u32 1.1754944e-38, %v822
    %v824 = vsel %vm821, %v823, %v819
    %v825 = vmul.f32 1.0, %v824
    %v826 = vrcp.pop %v808
    %v827 = vmul.f32 %v808, %v826
    %v828 = vsub.f32 1.0, %v827
    %v829 = vmul.f32 %v826, %v828
    %v830 = vadd.f32 %v826, %v829
    %vm831 = vweird.f32 %v808
    %vm832 = vweird.f32 %v826
    %vm833 = vmor %vm831, %vm832
    %v834 = vsel %vm833, %v826, %v830
    %v835 = vand.u32 2147483647, %v808
    %vm836 = vcmp.eq.f32.partialorder %v835, 8.507059e+37
    %v837 = vand.u32 %v808, 2147483648
    %v838 = vor.u32 1.1754944e-38, %v837
    %v839 = vsel %vm836, %v838, %v834
    %v840 = vmul.f32 1.0, %v839
    %v841 = vrcp.pop %v809
    %v842 = vmul.f32 %v809, %v841
    %v843 = vsub.f32 1.0, %v842
    %v844 = vmul.f32 %v841, %v843
    %v845 = vadd.f32 %v841, %v844
    %vm846 = vweird.f32 %v809
    %vm847 = vweird.f32 %v841
    %vm848 = vmor %vm846, %vm847
    %v849 = vsel %vm848, %v841, %v845
    %v850 = vand.u32 2147483647, %v809
    %vm851 = vcmp.eq.f32.partialorder %v850, 8.507059e+37
    %v852 = vand.u32 %v809, 2147483648
    %v853 = vor.u32 1.1754944e-38, %v852
    %v854 = vsel %vm851, %v853, %v849
    %v855 = vmul.f32 1.0, %v854
    %v856 = vrcp.pop %v810
    %v857 = vmul.f32 %v810, %v856
    %v858 = vsub.f32 1.0, %v857
    %v859 = vmul.f32 %v856, %v858
    %v860 = vadd.f32 %v856, %v859
    %vm861 = vweird.f32 %v810
    %vm862 = vweird.f32 %v856
    %vm863 = vmor %vm861, %vm862
    %v864 = vsel %vm863, %v856, %v860
    %v865 = vand.u32 2147483647, %v810
    %vm866 = vcmp.eq.f32.partialorder %v865, 8.507059e+37
    %v867 = vand.u32 %v810, 2147483648
    %v868 = vor.u32 1.1754944e-38, %v867
    %v869 = vsel %vm866, %v868, %v864
    %v870 = vmul.f32 1.0, %v869
    %v871 = vmul.f32 %v840, 2.0
    %v872 = vmul.f32 %v870, 2.0
    %v873 = vsub.f32 %v871, 1.0
    %v874 = vsub.f32 %v872, 1.0
    %877 = vrot.lane.b32.xlu0 %v447, 64
    %v878 = vpop.permute.xlu0 %877
    %879 = vrot.lane.b32.xlu0 %v448, 64
    %v880 = vpop.permute.xlu0 %879
    %v883 = vmul.f32 %v825, %v878
    %v884 = vmul.f32 %v855, %v880
    %v885 = vmul.f32 %v825, %v873
    %v886 = vmul.f32 %v855, %v874
    %889 = vrot.lane.b32.xlu0 %v885, 64
    %v890 = vpop.permute.xlu0 %889
    %891 = vrot.lane.b32.xlu0 %v886, 64
    %v892 = vpop.permute.xlu0 %891
    %v895 = vadd.f32 %v883, %v890
    %v896 = vadd.f32 %v884, %v892
    %v897 = vtanh.pop %v895
    %v898 = vtanh.pop %v896
    %v899 = vmul.f32 %v840, %v897
    %v900 = vmul.f32 %v870, %v898
    %s901 = smul.u32 2, 2
    %s902 = smul.addr %s901, 8
    %s903 = scalar_lea.vmem [#allocation2], %s902
    %v904 = vld [vmem:[%s903] sm:$0xff]
    %v905 = vld [vmem:[%s903 + $0x8] sm:$0xff]
    %v906 = vld [vmem:[%s903 + $0x10] sm:$0xff]
    %v907 = vld [vmem:[%s903 + $0x18] sm:$0xff]
    %908 = vmatpush.bf16.msra.mxu0 0
    %909 = vmatpush.bf16.msra.mxu0 0
    %910 = vmatpush.bf16.msra.mxu0 0
    %911 = vmatpush.bf16.msra.mxu0 0
    %912 = vmatpush.bf16.msra.mxu0 %v487
    %913 = vmatpush.bf16.msra.mxu0 %v485
    %914 = vmatpush.bf16.msra.mxu0 %v483
    %915 = vmatpush.bf16.msra.mxu0 %v481
    %916 = vmatmul.bf16.gmra.mxu0 %v756
    %v917 = vpop.f32.mrf.mxu0
    %v918 = vadd.f32 0.0, %v917
    %v919 = vpop.f32.mrf.mxu0
    %v920 = vadd.f32 0.0, %v919
    %921 = vdwg.mxu0
    %922 = vmatpush.bf16.msra.mxu0 0
    %923 = vmatpush.bf16.msra.mxu0 0
    %924 = vmatpush.bf16.msra.mxu0 0
    %925 = vmatpush.bf16.msra.mxu0 0
    %926 = vmatpush.bf16.msra.mxu0 %v488
    %927 = vmatpush.bf16.msra.mxu0 %v486
    %928 = vmatpush.bf16.msra.mxu0 %v484
    %929 = vmatpush.bf16.msra.mxu0 %v482
    %930 = vmatmul.bf16.gmra.mxu0 %v756
    %v931 = vpop.f32.mrf.mxu0
    %v932 = vadd.f32 0.0, %v931
    %v933 = vpop.f32.mrf.mxu0
    %v934 = vadd.f32 0.0, %v933
    %935 = vdwg.mxu0
    %v936 = vadd.f32 %v904, %v918
    %v937 = vadd.f32 %v905, %v932
    %v938 = vadd.f32 %v906, %v920
    %v939 = vadd.f32 %v907, %v934
    %v940 = vxor.u32 %v936, 2147483648
    %v941 = vxor.u32 %v937, 2147483648
    %v942 = vxor.u32 %v938, 2147483648
    %v943 = vxor.u32 %v939, 2147483648
    %v944 = vmul.f32 %v940, 1.442695
    %v945 = vpow.pop %v944
    %v946 = vmul.f32 %v941, 1.442695
    %v947 = vpow.pop %v946
    %v948 = vmul.f32 %v942, 1.442695
    %v949 = vpow.pop %v948
    %v950 = vmul.f32 %v943, 1.442695
    %v951 = vpow.pop %v950
    %v952 = vadd.f32 %v945, 1.0
    %v953 = vadd.f32 %v947, 1.0
    %v954 = vadd.f32 %v949, 1.0
    %v955 = vadd.f32 %v951, 1.0
    %v956 = vrcp.pop %v952
    %v957 = vmul.f32 %v952, %v956
    %v958 = vsub.f32 1.0, %v957
    %v959 = vmul.f32 %v956, %v958
    %v960 = vadd.f32 %v956, %v959
    %vm961 = vweird.f32 %v952
    %vm962 = vweird.f32 %v956
    %vm963 = vmor %vm961, %vm962
    %v964 = vsel %vm963, %v956, %v960
    %v965 = vand.u32 2147483647, %v952
    %vm966 = vcmp.eq.f32.partialorder %v965, 8.507059e+37
    %v967 = vand.u32 %v952, 2147483648
    %v968 = vor.u32 1.1754944e-38, %v967
    %v969 = vsel %vm966, %v968, %v964
    %v970 = vmul.f32 1.0, %v969
    %v971 = vrcp.pop %v953
    %v972 = vmul.f32 %v953, %v971
    %v973 = vsub.f32 1.0, %v972
    %v974 = vmul.f32 %v971, %v973
    %v975 = vadd.f32 %v971, %v974
    %vm976 = vweird.f32 %v953
    %vm977 = vweird.f32 %v971
    %vm978 = vmor %vm976, %vm977
    %v979 = vsel %vm978, %v971, %v975
    %v980 = vand.u32 2147483647, %v953
    %vm981 = vcmp.eq.f32.partialorder %v980, 8.507059e+37
    %v982 = vand.u32 %v953, 2147483648
    %v983 = vor.u32 1.1754944e-38, %v982
    %v984 = vsel %vm981, %v983, %v979
    %v985 = vmul.f32 1.0, %v984
    %v986 = vrcp.pop %v954
    %v987 = vmul.f32 %v954, %v986
    %v988 = vsub.f32 1.0, %v987
    %v989 = vmul.f32 %v986, %v988
    %v990 = vadd.f32 %v986, %v989
    %vm991 = vweird.f32 %v954
    %vm992 = vweird.f32 %v986
    %vm993 = vmor %vm991, %vm992
    %v994 = vsel %vm993, %v986, %v990
    %v995 = vand.u32 2147483647, %v954
    %vm996 = vcmp.eq.f32.partialorder %v995, 8.507059e+37
    %v997 = vand.u32 %v954, 2147483648
    %v998 = vor.u32 1.1754944e-38, %v997
    %v999 = vsel %vm996, %v998, %v994
    %v1000 = vmul.f32 1.0, %v999
    %v1001 = vrcp.pop %v955
    %v1002 = vmul.f32 %v955, %v1001
    %v1003 = vsub.f32 1.0, %v1002
    %v1004 = vmul.f32 %v1001, %v1003
    %v1005 = vadd.f32 %v1001, %v1004
    %vm1006 = vweird.f32 %v955
    %vm1007 = vweird.f32 %v1001
    %vm1008 = vmor %vm1006, %vm1007
    %v1009 = vsel %vm1008, %v1001, %v1005
    %v1010 = vand.u32 2147483647, %v955
    %vm1011 = vcmp.eq.f32.partialorder %v1010, 8.507059e+37
    %v1012 = vand.u32 %v955, 2147483648
    %v1013 = vor.u32 1.1754944e-38, %v1012
    %v1014 = vsel %vm1011, %v1013, %v1009
    %v1015 = vmul.f32 1.0, %v1014
    %v1016 = vmul.f32 %v985, 2.0
    %v1017 = vmul.f32 %v1015, 2.0
    %v1018 = vsub.f32 %v1016, 1.0
    %v1019 = vsub.f32 %v1017, 1.0
    %v1020 = vmul.f32 %v970, %v633
    %v1021 = vmul.f32 %v1000, %v634
    %v1022 = vmul.f32 %v970, %v1018
    %v1023 = vmul.f32 %v1000, %v1019
    %1026 = vrot.lane.b32.xlu0 %v1022, 64
    %v1027 = vpop.permute.xlu0 %1026
    %1028 = vrot.lane.b32.xlu0 %v1023, 64
    %v1029 = vpop.permute.xlu0 %1028
    %v1032 = vadd.f32 %v1020, %v1027
    %v1033 = vadd.f32 %v1021, %v1029
    %v1034 = vtanh.pop %v1032
    %v1035 = vtanh.pop %v1033
    %v1036 = vmul.f32 %v985, %v1034
    %v1037 = vmul.f32 %v1015, %v1035
    %v1038 = vpack.c.bf16 %v1037, %v1036
    %v1039 = vpack.c.bf16 %v900, %v899
    %1041 = vrot.lane.b32.xlu0 %v1039, 64
    %v1042 = vpop.permute.xlu0 %1041
    %v1044 = vsel %vm497, %v1042, 0
    %1046 = vmatpush.bf16.msra.mxu0 0
    %1047 = vmatpush.bf16.msra.mxu0 0
    %1048 = vmatpush.bf16.msra.mxu0 0
    %1049 = vmatpush.bf16.msra.mxu0 0
    %1050 = vmatpush.bf16.msra.mxu0 %v671
    %1051 = vmatpush.bf16.msra.mxu0 %v669
    %1052 = vmatpush.bf16.msra.mxu0 %v667
    %1053 = vmatpush.bf16.msra.mxu0 %v665
    %1054 = vmatmul.bf16.gmra.mxu0 %v1044
    %v1055 = vpop.f32.mrf.mxu0
    %v1056 = vadd.f32 0.0, %v1055
    %v1057 = vpop.f32.mrf.mxu0
    %v1058 = vadd.f32 0.0, %v1057
    %1059 = vdwg.mxu0
    %1060 = vmatpush.bf16.msra.mxu0 0
    %1061 = vmatpush.bf16.msra.mxu0 0
    %1062 = vmatpush.bf16.msra.mxu0 0
    %1063 = vmatpush.bf16.msra.mxu0 0
    %1064 = vmatpush.bf16.msra.mxu0 %v672
    %1065 = vmatpush.bf16.msra.mxu0 %v670
    %1066 = vmatpush.bf16.msra.mxu0 %v668
    %1067 = vmatpush.bf16.msra.mxu0 %v666
    %1068 = vmatmul.bf16.gmra.mxu0 %v1044
    %v1069 = vpop.f32.mrf.mxu0
    %v1070 = vadd.f32 0.0, %v1069
    %v1071 = vpop.f32.mrf.mxu0
    %v1072 = vadd.f32 0.0, %v1071
    %1073 = vdwg.mxu0
    %1075 = vrot.lane.b32.xlu0 %v1038, 64
    %v1076 = vpop.permute.xlu0 %1075
    %v1078 = vsel %vm497, %v1076, 0
    %1080 = vmatpush.bf16.msra.mxu0 0
    %1081 = vmatpush.bf16.msra.mxu0 0
    %1082 = vmatpush.bf16.msra.mxu0 0
    %1083 = vmatpush.bf16.msra.mxu0 0
    %1084 = vmatpush.bf16.msra.mxu0 %v745
    %1085 = vmatpush.bf16.msra.mxu0 %v743
    %1086 = vmatpush.bf16.msra.mxu0 %v741
    %1087 = vmatpush.bf16.msra.mxu0 %v739
    %1088 = vmatmul.bf16.gmra.mxu0 %v1078
    %v1089 = vpop.f32.mrf.mxu0
    %v1090 = vadd.f32 %v1056, %v1089
    %v1091 = vpop.f32.mrf.mxu0
    %v1092 = vadd.f32 %v1058, %v1091
    %1093 = vdwg.mxu0
    %1094 = vmatpush.bf16.msra.mxu0 0
    %1095 = vmatpush.bf16.msra.mxu0 0
    %1096 = vmatpush.bf16.msra.mxu0 0
    %1097 = vmatpush.bf16.msra.mxu0 0
    %1098 = vmatpush.bf16.msra.mxu0 %v746
    %1099 = vmatpush.bf16.msra.mxu0 %v744
    %1100 = vmatpush.bf16.msra.mxu0 %v742
    %1101 = vmatpush.bf16.msra.mxu0 %v740
    %1102 = vmatmul.bf16.gmra.mxu0 %v1078
    %v1103 = vpop.f32.mrf.mxu0
    %v1104 = vadd.f32 %v1070, %v1103
    %v1105 = vpop.f32.mrf.mxu0
    %v1106 = vadd.f32 %v1072, %v1105
    %1107 = vdwg.mxu0
    %v1108 = vadd.f32 %v1090, %v787
    %v1109 = vadd.f32 %v1104, %v788
    %v1110 = vadd.f32 %v1092, %v787
    %v1111 = vadd.f32 %v1106, %v788
    %v1112 = vxor.u32 %v1108, 2147483648
    %v1113 = vxor.u32 %v1109, 2147483648
    %v1114 = vxor.u32 %v1110, 2147483648
    %v1115 = vxor.u32 %v1111, 2147483648
    %v1116 = vmul.f32 %v1112, 1.442695
    %v1117 = vpow.pop %v1116
    %v1118 = vmul.f32 %v1113, 1.442695
    %v1119 = vpow.pop %v1118
    %v1120 = vmul.f32 %v1114, 1.442695
    %v1121 = vpow.pop %v1120
    %v1122 = vmul.f32 %v1115, 1.442695
    %v1123 = vpow.pop %v1122
    %v1124 = vadd.f32 %v1117, 1.0
    %v1125 = vadd.f32 %v1119, 1.0
    %v1126 = vadd.f32 %v1121, 1.0
    %v1127 = vadd.f32 %v1123, 1.0
    %v1128 = vrcp.pop %v1124
    %v1129 = vmul.f32 %v1124, %v1128
    %v1130 = vsub.f32 1.0, %v1129
    %v1131 = vmul.f32 %v1128, %v1130
    %v1132 = vadd.f32 %v1128, %v1131
    %vm1133 = vweird.f32 %v1124
    %vm1134 = vweird.f32 %v1128
    %vm1135 = vmor %vm1133, %vm1134
    %v1136 = vsel %vm1135, %v1128, %v1132
    %v1137 = vand.u32 2147483647, %v1124
    %vm1138 = vcmp.eq.f32.partialorder %v1137, 8.507059e+37
    %v1139 = vand.u32 %v1124, 2147483648
    %v1140 = vor.u32 1.1754944e-38, %v1139
    %v1141 = vsel %vm1138, %v1140, %v1136
    %v1142 = vmul.f32 1.0, %v1141
    %v1143 = vrcp.pop %v1125
    %v1144 = vmul.f32 %v1125, %v1143
    %v1145 = vsub.f32 1.0, %v1144
    %v1146 = vmul.f32 %v1143, %v1145
    %v1147 = vadd.f32 %v1143, %v1146
    %vm1148 = vweird.f32 %v1125
    %vm1149 = vweird.f32 %v1143
    %vm1150 = vmor %vm1148, %vm1149
    %v1151 = vsel %vm1150, %v1143, %v1147
    %v1152 = vand.u32 2147483647, %v1125
    %vm1153 = vcmp.eq.f32.partialorder %v1152, 8.507059e+37
    %v1154 = vand.u32 %v1125, 2147483648
    %v1155 = vor.u32 1.1754944e-38, %v1154
    %v1156 = vsel %vm1153, %v1155, %v1151
    %v1157 = vmul.f32 1.0, %v1156
    %v1158 = vrcp.pop %v1126
    %v1159 = vmul.f32 %v1126, %v1158
    %v1160 = vsub.f32 1.0, %v1159
    %v1161 = vmul.f32 %v1158, %v1160
    %v1162 = vadd.f32 %v1158, %v1161
    %vm1163 = vweird.f32 %v1126
    %vm1164 = vweird.f32 %v1158
    %vm1165 = vmor %vm1163, %vm1164
    %v1166 = vsel %vm1165, %v1158, %v1162
    %v1167 = vand.u32 2147483647, %v1126
    %vm1168 = vcmp.eq.f32.partialorder %v1167, 8.507059e+37
    %v1169 = vand.u32 %v1126, 2147483648
    %v1170 = vor.u32 1.1754944e-38, %v1169
    %v1171 = vsel %vm1168, %v1170, %v1166
    %v1172 = vmul.f32 1.0, %v1171
    %v1173 = vrcp.pop %v1127
    %v1174 = vmul.f32 %v1127, %v1173
    %v1175 = vsub.f32 1.0, %v1174
    %v1176 = vmul.f32 %v1173, %v1175
    %v1177 = vadd.f32 %v1173, %v1176
    %vm1178 = vweird.f32 %v1127
    %vm1179 = vweird.f32 %v1173
    %vm1180 = vmor %vm1178, %vm1179
    %v1181 = vsel %vm1180, %v1173, %v1177
    %v1182 = vand.u32 2147483647, %v1127
    %vm1183 = vcmp.eq.f32.partialorder %v1182, 8.507059e+37
    %v1184 = vand.u32 %v1127, 2147483648
    %v1185 = vor.u32 1.1754944e-38, %v1184
    %v1186 = vsel %vm1183, %v1185, %v1181
    %v1187 = vmul.f32 1.0, %v1186
    %v1188 = vmul.f32 %v1157, 2.0
    %v1189 = vmul.f32 %v1187, 2.0
    %v1190 = vsub.f32 %v1188, 1.0
    %v1191 = vsub.f32 %v1189, 1.0
    %v1192 = vmul.f32 %v1142, %v895
    %v1193 = vmul.f32 %v1172, %v896
    %v1194 = vmul.f32 %v1142, %v1190
    %v1195 = vmul.f32 %v1172, %v1191
    %1198 = vrot.lane.b32.xlu0 %v1194, 64
    %v1199 = vpop.permute.xlu0 %1198
    %1200 = vrot.lane.b32.xlu0 %v1195, 64
    %v1201 = vpop.permute.xlu0 %1200
    %v1204 = vadd.f32 %v1192, %v1199
    %v1205 = vadd.f32 %v1193, %v1201
    %v1206 = vtanh.pop %v1204
    %v1207 = vtanh.pop %v1205
    %v1208 = vmul.f32 %v1157, %v1206
    %v1209 = vmul.f32 %v1187, %v1207
    %s1210 = smul.u32 4, 2
    %s1211 = smul.addr %s1210, 8
    %s1212 = scalar_lea.vmem [#allocation2], %s1211
    %v1213 = vld [vmem:[%s1212] sm:$0xff]
    %v1214 = vld [vmem:[%s1212 + $0x8] sm:$0xff]
    %v1215 = vld [vmem:[%s1212 + $0x10] sm:$0xff]
    %v1216 = vld [vmem:[%s1212 + $0x18] sm:$0xff]
    %1217 = vmatpush.bf16.msra.mxu0 0
    %1218 = vmatpush.bf16.msra.mxu0 0
    %1219 = vmatpush.bf16.msra.mxu0 0
    %1220 = vmatpush.bf16.msra.mxu0 0
    %1221 = vmatpush.bf16.msra.mxu0 %v487
    %1222 = vmatpush.bf16.msra.mxu0 %v485
    %1223 = vmatpush.bf16.msra.mxu0 %v483
    %1224 = vmatpush.bf16.msra.mxu0 %v481
    %1225 = vmatmul.bf16.gmra.mxu0 %v1078
    %v1226 = vpop.f32.mrf.mxu0
    %v1227 = vadd.f32 0.0, %v1226
    %v1228 = vpop.f32.mrf.mxu0
    %v1229 = vadd.f32 0.0, %v1228
    %1230 = vdwg.mxu0
    %1231 = vmatpush.bf16.msra.mxu0 0
    %1232 = vmatpush.bf16.msra.mxu0 0
    %1233 = vmatpush.bf16.msra.mxu0 0
    %1234 = vmatpush.bf16.msra.mxu0 0
    %1235 = vmatpush.bf16.msra.mxu0 %v488
    %1236 = vmatpush.bf16.msra.mxu0 %v486
    %1237 = vmatpush.bf16.msra.mxu0 %v484
    %1238 = vmatpush.bf16.msra.mxu0 %v482
    %1239 = vmatmul.bf16.gmra.mxu0 %v1078
    %v1240 = vpop.f32.mrf.mxu0
    %v1241 = vadd.f32 0.0, %v1240
    %v1242 = vpop.f32.mrf.mxu0
    %v1243 = vadd.f32 0.0, %v1242
    %1244 = vdwg.mxu0
    %v1245 = vadd.f32 %v1213, %v1227
    %v1246 = vadd.f32 %v1214, %v1241
    %v1247 = vadd.f32 %v1215, %v1229
    %v1248 = vadd.f32 %v1216, %v1243
    %v1249 = vxor.u32 %v1245, 2147483648
    %v1250 = vxor.u32 %v1246, 2147483648
    %v1251 = vxor.u32 %v1247, 2147483648
    %v1252 = vxor.u32 %v1248, 2147483648
    %v1253 = vmul.f32 %v1249, 1.442695
    %v1254 = vpow.pop %v1253
    %v1255 = vmul.f32 %v1250, 1.442695
    %v1256 = vpow.pop %v1255
    %v1257 = vmul.f32 %v1251, 1.442695
    %v1258 = vpow.pop %v1257
    %v1259 = vmul.f32 %v1252, 1.442695
    %v1260 = vpow.pop %v1259
    %v1261 = vadd.f32 %v1254, 1.0
    %v1262 = vadd.f32 %v1256, 1.0
    %v1263 = vadd.f32 %v1258, 1.0
    %v1264 = vadd.f32 %v1260, 1.0
    %v1265 = vrcp.pop %v1261
    %v1266 = vmul.f32 %v1261, %v1265
    %v1267 = vsub.f32 1.0, %v1266
    %v1268 = vmul.f32 %v1265, %v1267
    %v1269 = vadd.f32 %v1265, %v1268
    %vm1270 = vweird.f32 %v1261
    %vm1271 = vweird.f32 %v1265
    %vm1272 = vmor %vm1270, %vm1271
    %v1273 = vsel %vm1272, %v1265, %v1269
    %v1274 = vand.u32 2147483647, %v1261
    %vm1275 = vcmp.eq.f32.partialorder %v1274, 8.507059e+37
    %v1276 = vand.u32 %v1261, 2147483648
    %v1277 = vor.u32 1.1754944e-38, %v1276
    %v1278 = vsel %vm1275, %v1277, %v1273
    %v1279 = vmul.f32 1.0, %v1278
    %v1280 = vrcp.pop %v1262
    %v1281 = vmul.f32 %v1262, %v1280
    %v1282 = vsub.f32 1.0, %v1281
    %v1283 = vmul.f32 %v1280, %v1282
    %v1284 = vadd.f32 %v1280, %v1283
    %vm1285 = vweird.f32 %v1262
    %vm1286 = vweird.f32 %v1280
    %vm1287 = vmor %vm1285, %vm1286
    %v1288 = vsel %vm1287, %v1280, %v1284
    %v1289 = vand.u32 2147483647, %v1262
    %vm1290 = vcmp.eq.f32.partialorder %v1289, 8.507059e+37
    %v1291 = vand.u32 %v1262, 2147483648
    %v1292 = vor.u32 1.1754944e-38, %v1291
    %v1293 = vsel %vm1290, %v1292, %v1288
    %v1294 = vmul.f32 1.0, %v1293
    %v1295 = vrcp.pop %v1263
    %v1296 = vmul.f32 %v1263, %v1295
    %v1297 = vsub.f32 1.0, %v1296
    %v1298 = vmul.f32 %v1295, %v1297
    %v1299 = vadd.f32 %v1295, %v1298
    %vm1300 = vweird.f32 %v1263
    %vm1301 = vweird.f32 %v1295
    %vm1302 = vmor %vm1300, %vm1301
    %v1303 = vsel %vm1302, %v1295, %v1299
    %v1304 = vand.u32 2147483647, %v1263
    %vm1305 = vcmp.eq.f32.partialorder %v1304, 8.507059e+37
    %v1306 = vand.u32 %v1263, 2147483648
    %v1307 = vor.u32 1.1754944e-38, %v1306
    %v1308 = vsel %vm1305, %v1307, %v1303
    %v1309 = vmul.f32 1.0, %v1308
    %v1310 = vrcp.pop %v1264
    %v1311 = vmul.f32 %v1264, %v1310
    %v1312 = vsub.f32 1.0, %v1311
    %v1313 = vmul.f32 %v1310, %v1312
    %v1314 = vadd.f32 %v1310, %v1313
    %vm1315 = vweird.f32 %v1264
    %vm1316 = vweird.f32 %v1310
    %vm1317 = vmor %vm1315, %vm1316
    %v1318 = vsel %vm1317, %v1310, %v1314
    %v1319 = vand.u32 2147483647, %v1264
    %vm1320 = vcmp.eq.f32.partialorder %v1319, 8.507059e+37
    %v1321 = vand.u32 %v1264, 2147483648
    %v1322 = vor.u32 1.1754944e-38, %v1321
    %v1323 = vsel %vm1320, %v1322, %v1318
    %v1324 = vmul.f32 1.0, %v1323
    %v1325 = vmul.f32 %v1294, 2.0
    %v1326 = vmul.f32 %v1324, 2.0
    %v1327 = vsub.f32 %v1325, 1.0
    %v1328 = vsub.f32 %v1326, 1.0
    %v1329 = vmul.f32 %v1279, %v1032
    %v1330 = vmul.f32 %v1309, %v1033
    %v1331 = vmul.f32 %v1279, %v1327
    %v1332 = vmul.f32 %v1309, %v1328
    %1335 = vrot.lane.b32.xlu0 %v1331, 64
    %v1336 = vpop.permute.xlu0 %1335
    %1337 = vrot.lane.b32.xlu0 %v1332, 64
    %v1338 = vpop.permute.xlu0 %1337
    %v1341 = vadd.f32 %v1329, %v1336
    %v1342 = vadd.f32 %v1330, %v1338
    %v1343 = vtanh.pop %v1341
    %v1344 = vtanh.pop %v1342
    %v1345 = vmul.f32 %v1294, %v1343
    %v1346 = vmul.f32 %v1324, %v1344
    %v1347 = vpack.c.bf16 %v1346, %v1345
    %v1348 = vpack.c.bf16 %v1209, %v1208
    %1350 = vrot.lane.b32.xlu0 %v1348, 64
    %v1351 = vpop.permute.xlu0 %1350
    %v1353 = vsel %vm497, %v1351, 0
    %1355 = vmatpush.bf16.msra.mxu0 0
    %1356 = vmatpush.bf16.msra.mxu0 0
    %1357 = vmatpush.bf16.msra.mxu0 0
    %1358 = vmatpush.bf16.msra.mxu0 0
    %1359 = vmatpush.bf16.msra.mxu0 %v671
    %1360 = vmatpush.bf16.msra.mxu0 %v669
    %1361 = vmatpush.bf16.msra.mxu0 %v667
    %1362 = vmatpush.bf16.msra.mxu0 %v665
    %1363 = vmatmul.bf16.gmra.mxu0 %v1353
    %v1364 = vpop.f32.mrf.mxu0
    %v1365 = vadd.f32 0.0, %v1364
    %v1366 = vpop.f32.mrf.mxu0
    %v1367 = vadd.f32 0.0, %v1366
    %1368 = vdwg.mxu0
    %1369 = vmatpush.bf16.msra.mxu0 0
    %1370 = vmatpush.bf16.msra.mxu0 0
    %1371 = vmatpush.bf16.msra.mxu0 0
    %1372 = vmatpush.bf16.msra.mxu0 0
    %1373 = vmatpush.bf16.msra.mxu0 %v672
    %1374 = vmatpush.bf16.msra.mxu0 %v670
    %1375 = vmatpush.bf16.msra.mxu0 %v668
    %1376 = vmatpush.bf16.msra.mxu0 %v666
    %1377 = vmatmul.bf16.gmra.mxu0 %v1353
    %v1378 = vpop.f32.mrf.mxu0
    %v1379 = vadd.f32 0.0, %v1378
    %v1380 = vpop.f32.mrf.mxu0
    %v1381 = vadd.f32 0.0, %v1380
    %1382 = vdwg.mxu0
    %1384 = vrot.lane.b32.xlu0 %v1347, 64
    %v1385 = vpop.permute.xlu0 %1384
    %v1387 = vsel %vm497, %v1385, 0
    %1389 = vmatpush.bf16.msra.mxu0 0
    %1390 = vmatpush.bf16.msra.mxu0 0
    %1391 = vmatpush.bf16.msra.mxu0 0
    %1392 = vmatpush.bf16.msra.mxu0 0
    %1393 = vmatpush.bf16.msra.mxu0 %v745
    %1394 = vmatpush.bf16.msra.mxu0 %v743
    %1395 = vmatpush.bf16.msra.mxu0 %v741
    %1396 = vmatpush.bf16.msra.mxu0 %v739
    %1397 = vmatmul.bf16.gmra.mxu0 %v1387
    %v1398 = vpop.f32.mrf.mxu0
    %v1399 = vadd.f32 %v1365, %v1398
    %v1400 = vpop.f32.mrf.mxu0
    %v1401 = vadd.f32 %v1367, %v1400
    %1402 = vdwg.mxu0
    %1403 = vmatpush.bf16.msra.mxu0 0
    %1404 = vmatpush.bf16.msra.mxu0 0
    %1405 = vmatpush.bf16.msra.mxu0 0
    %1406 = vmatpush.bf16.msra.mxu0 0
    %1407 = vmatpush.bf16.msra.mxu0 %v746
    %1408 = vmatpush.bf16.msra.mxu0 %v744
    %1409 = vmatpush.bf16.msra.mxu0 %v742
    %1410 = vmatpush.bf16.msra.mxu0 %v740
    %1411 = vmatmul.bf16.gmra.mxu0 %v1387
    %v1412 = vpop.f32.mrf.mxu0
    %v1413 = vadd.f32 %v1379, %v1412
    %v1414 = vpop.f32.mrf.mxu0
    %v1415 = vadd.f32 %v1381, %v1414
    %1416 = vdwg.mxu0
    %v1417 = vadd.f32 %v1399, %v787
    %v1418 = vadd.f32 %v1413, %v788
    %v1419 = vadd.f32 %v1401, %v787
    %v1420 = vadd.f32 %v1415, %v788
    %v1421 = vxor.u32 %v1417, 2147483648
    %v1422 = vxor.u32 %v1418, 2147483648
    %v1423 = vxor.u32 %v1419, 2147483648
    %v1424 = vxor.u32 %v1420, 2147483648
    %v1425 = vmul.f32 %v1421, 1.442695
    %v1426 = vpow.pop %v1425
    %v1427 = vmul.f32 %v1422, 1.442695
    %v1428 = vpow.pop %v1427
    %v1429 = vmul.f32 %v1423, 1.442695
    %v1430 = vpow.pop %v1429
    %v1431 = vmul.f32 %v1424, 1.442695
    %v1432 = vpow.pop %v1431
    %v1433 = vadd.f32 %v1426, 1.0
    %v1434 = vadd.f32 %v1428, 1.0
    %v1435 = vadd.f32 %v1430, 1.0
    %v1436 = vadd.f32 %v1432, 1.0
    %v1437 = vrcp.pop %v1433
    %v1438 = vmul.f32 %v1433, %v1437
    %v1439 = vsub.f32 1.0, %v1438
    %v1440 = vmul.f32 %v1437, %v1439
    %v1441 = vadd.f32 %v1437, %v1440
    %vm1442 = vweird.f32 %v1433
    %vm1443 = vweird.f32 %v1437
    %vm1444 = vmor %vm1442, %vm1443
    %v1445 = vsel %vm1444, %v1437, %v1441
    %v1446 = vand.u32 2147483647, %v1433
    %vm1447 = vcmp.eq.f32.partialorder %v1446, 8.507059e+37
    %v1448 = vand.u32 %v1433, 2147483648
    %v1449 = vor.u32 1.1754944e-38, %v1448
    %v1450 = vsel %vm1447, %v1449, %v1445
    %v1451 = vmul.f32 1.0, %v1450
    %v1452 = vrcp.pop %v1434
    %v1453 = vmul.f32 %v1434, %v1452
    %v1454 = vsub.f32 1.0, %v1453
    %v1455 = vmul.f32 %v1452, %v1454
    %v1456 = vadd.f32 %v1452, %v1455
    %vm1457 = vweird.f32 %v1434
    %vm1458 = vweird.f32 %v1452
    %vm1459 = vmor %vm1457, %vm1458
    %v1460 = vsel %vm1459, %v1452, %v1456
    %v1461 = vand.u32 2147483647, %v1434
    %vm1462 = vcmp.eq.f32.partialorder %v1461, 8.507059e+37
    %v1463 = vand.u32 %v1434, 2147483648
    %v1464 = vor.u32 1.1754944e-38, %v1463
    %v1465 = vsel %vm1462, %v1464, %v1460
    %v1466 = vmul.f32 1.0, %v1465
    %v1467 = vrcp.pop %v1435
    %v1468 = vmul.f32 %v1435, %v1467
    %v1469 = vsub.f32 1.0, %v1468
    %v1470 = vmul.f32 %v1467, %v1469
    %v1471 = vadd.f32 %v1467, %v1470
    %vm1472 = vweird.f32 %v1435
    %vm1473 = vweird.f32 %v1467
    %vm1474 = vmor %vm1472, %vm1473
    %v1475 = vsel %vm1474, %v1467, %v1471
    %v1476 = vand.u32 2147483647, %v1435
    %vm1477 = vcmp.eq.f32.partialorder %v1476, 8.507059e+37
    %v1478 = vand.u32 %v1435, 2147483648
    %v1479 = vor.u32 1.1754944e-38, %v1478
    %v1480 = vsel %vm1477, %v1479, %v1475
    %v1481 = vmul.f32 1.0, %v1480
    %v1482 = vrcp.pop %v1436
    %v1483 = vmul.f32 %v1436, %v1482
    %v1484 = vsub.f32 1.0, %v1483
    %v1485 = vmul.f32 %v1482, %v1484
    %v1486 = vadd.f32 %v1482, %v1485
    %vm1487 = vweird.f32 %v1436
    %vm1488 = vweird.f32 %v1482
    %vm1489 = vmor %vm1487, %vm1488
    %v1490 = vsel %vm1489, %v1482, %v1486
    %v1491 = vand.u32 2147483647, %v1436
    %vm1492 = vcmp.eq.f32.partialorder %v1491, 8.507059e+37
    %v1493 = vand.u32 %v1436, 2147483648
    %v1494 = vor.u32 1.1754944e-38, %v1493
    %v1495 = vsel %vm1492, %v1494, %v1490
    %v1496 = vmul.f32 1.0, %v1495
    %v1497 = vmul.f32 %v1466, 2.0
    %v1498 = vmul.f32 %v1496, 2.0
    %v1499 = vsub.f32 %v1497, 1.0
    %v1500 = vsub.f32 %v1498, 1.0
    %v1501 = vmul.f32 %v1451, %v1204
    %v1502 = vmul.f32 %v1481, %v1205
    %v1503 = vmul.f32 %v1451, %v1499
    %v1504 = vmul.f32 %v1481, %v1500
    %1507 = vrot.lane.b32.xlu0 %v1503, 64
    %v1508 = vpop.permute.xlu0 %1507
    %1509 = vrot.lane.b32.xlu0 %v1504, 64
    %v1510 = vpop.permute.xlu0 %1509
    %v1513 = vadd.f32 %v1501, %v1508
    %v1514 = vadd.f32 %v1502, %v1510
    %v1515 = vtanh.pop %v1513
    %v1516 = vtanh.pop %v1514
    %v1517 = vmul.f32 %v1466, %v1515
    %v1518 = vmul.f32 %v1496, %v1516
    %s1519 = smul.u32 6, 2
    %s1520 = smul.addr %s1519, 8
    %s1521 = scalar_lea.vmem [#allocation2], %s1520
    %v1522 = vld [vmem:[%s1521] sm:$0xff]
    %v1523 = vld [vmem:[%s1521 + $0x8] sm:$0xff]
    %v1524 = vld [vmem:[%s1521 + $0x10] sm:$0xff]
    %v1525 = vld [vmem:[%s1521 + $0x18] sm:$0xff]
    %1526 = vmatpush.bf16.msra.mxu0 0
    %1527 = vmatpush.bf16.msra.mxu0 0
    %1528 = vmatpush.bf16.msra.mxu0 0
    %1529 = vmatpush.bf16.msra.mxu0 0
    %1530 = vmatpush.bf16.msra.mxu0 %v487
    %1531 = vmatpush.bf16.msra.mxu0 %v485
    %1532 = vmatpush.bf16.msra.mxu0 %v483
    %1533 = vmatpush.bf16.msra.mxu0 %v481
    %1534 = vmatmul.bf16.gmra.mxu0 %v1387
    %v1535 = vpop.f32.mrf.mxu0
    %v1536 = vadd.f32 0.0, %v1535
    %v1537 = vpop.f32.mrf.mxu0
    %v1538 = vadd.f32 0.0, %v1537
    %1539 = vdwg.mxu0
    %1540 = vmatpush.bf16.msra.mxu0 0
    %1541 = vmatpush.bf16.msra.mxu0 0
    %1542 = vmatpush.bf16.msra.mxu0 0
    %1543 = vmatpush.bf16.msra.mxu0 0
    %1544 = vmatpush.bf16.msra.mxu0 %v488
    %1545 = vmatpush.bf16.msra.mxu0 %v486
    %1546 = vmatpush.bf16.msra.mxu0 %v484
    %1547 = vmatpush.bf16.msra.mxu0 %v482
    %1548 = vmatmul.bf16.gmra.mxu0 %v1387
    %v1549 = vpop.f32.mrf.mxu0
    %v1550 = vadd.f32 0.0, %v1549
    %v1551 = vpop.f32.mrf.mxu0
    %v1552 = vadd.f32 0.0, %v1551
    %1553 = vdwg.mxu0
    %v1554 = vadd.f32 %v1522, %v1536
    %v1555 = vadd.f32 %v1523, %v1550
    %v1556 = vadd.f32 %v1524, %v1538
    %v1557 = vadd.f32 %v1525, %v1552
    %v1558 = vxor.u32 %v1554, 2147483648
    %v1559 = vxor.u32 %v1555, 2147483648
    %v1560 = vxor.u32 %v1556, 2147483648
    %v1561 = vxor.u32 %v1557, 2147483648
    %v1562 = vmul.f32 %v1558, 1.442695
    %v1563 = vpow.pop %v1562
    %v1564 = vmul.f32 %v1559, 1.442695
    %v1565 = vpow.pop %v1564
    %v1566 = vmul.f32 %v1560, 1.442695
    %v1567 = vpow.pop %v1566
    %v1568 = vmul.f32 %v1561, 1.442695
    %v1569 = vpow.pop %v1568
    %v1570 = vadd.f32 %v1563, 1.0
    %v1571 = vadd.f32 %v1565, 1.0
    %v1572 = vadd.f32 %v1567, 1.0
    %v1573 = vadd.f32 %v1569, 1.0
    %v1574 = vrcp.pop %v1570
    %v1575 = vmul.f32 %v1570, %v1574
    %v1576 = vsub.f32 1.0, %v1575
    %v1577 = vmul.f32 %v1574, %v1576
    %v1578 = vadd.f32 %v1574, %v1577
    %vm1579 = vweird.f32 %v1570
    %vm1580 = vweird.f32 %v1574
    %vm1581 = vmor %vm1579, %vm1580
    %v1582 = vsel %vm1581, %v1574, %v1578
    %v1583 = vand.u32 2147483647, %v1570
    %vm1584 = vcmp.eq.f32.partialorder %v1583, 8.507059e+37
    %v1585 = vand.u32 %v1570, 2147483648
    %v1586 = vor.u32 1.1754944e-38, %v1585
    %v1587 = vsel %vm1584, %v1586, %v1582
    %v1588 = vmul.f32 1.0, %v1587
    %v1589 = vrcp.pop %v1571
    %v1590 = vmul.f32 %v1571, %v1589
    %v1591 = vsub.f32 1.0, %v1590
    %v1592 = vmul.f32 %v1589, %v1591
    %v1593 = vadd.f32 %v1589, %v1592
    %vm1594 = vweird.f32 %v1571
    %vm1595 = vweird.f32 %v1589
    %vm1596 = vmor %vm1594, %vm1595
    %v1597 = vsel %vm1596, %v1589, %v1593
    %v1598 = vand.u32 2147483647, %v1571
    %vm1599 = vcmp.eq.f32.partialorder %v1598, 8.507059e+37
    %v1600 = vand.u32 %v1571, 2147483648
    %v1601 = vor.u32 1.1754944e-38, %v1600
    %v1602 = vsel %vm1599, %v1601, %v1597
    %v1603 = vmul.f32 1.0, %v1602
    %v1604 = vrcp.pop %v1572
    %v1605 = vmul.f32 %v1572, %v1604
    %v1606 = vsub.f32 1.0, %v1605
    %v1607 = vmul.f32 %v1604, %v1606
    %v1608 = vadd.f32 %v1604, %v1607
    %vm1609 = vweird.f32 %v1572
    %vm1610 = vweird.f32 %v1604
    %vm1611 = vmor %vm1609, %vm1610
    %v1612 = vsel %vm1611, %v1604, %v1608
    %v1613 = vand.u32 2147483647, %v1572
    %vm1614 = vcmp.eq.f32.partialorder %v1613, 8.507059e+37
    %v1615 = vand.u32 %v1572, 2147483648
    %v1616 = vor.u32 1.1754944e-38, %v1615
    %v1617 = vsel %vm1614, %v1616, %v1612
    %v1618 = vmul.f32 1.0, %v1617
    %v1619 = vrcp.pop %v1573
    %v1620 = vmul.f32 %v1573, %v1619
    %v1621 = vsub.f32 1.0, %v1620
    %v1622 = vmul.f32 %v1619, %v1621
    %v1623 = vadd.f32 %v1619, %v1622
    %vm1624 = vweird.f32 %v1573
    %vm1625 = vweird.f32 %v1619
    %vm1626 = vmor %vm1624, %vm1625
    %v1627 = vsel %vm1626, %v1619, %v1623
    %v1628 = vand.u32 2147483647, %v1573
    %vm1629 = vcmp.eq.f32.partialorder %v1628, 8.507059e+37
    %v1630 = vand.u32 %v1573, 2147483648
    %v1631 = vor.u32 1.1754944e-38, %v1630
    %v1632 = vsel %vm1629, %v1631, %v1627
    %v1633 = vmul.f32 1.0, %v1632
    %v1634 = vmul.f32 %v1603, 2.0
    %v1635 = vmul.f32 %v1633, 2.0
    %v1636 = vsub.f32 %v1634, 1.0
    %v1637 = vsub.f32 %v1635, 1.0
    %v1638 = vmul.f32 %v1588, %v1341
    %v1639 = vmul.f32 %v1618, %v1342
    %v1640 = vmul.f32 %v1588, %v1636
    %v1641 = vmul.f32 %v1618, %v1637
    %1644 = vrot.lane.b32.xlu0 %v1640, 64
    %v1645 = vpop.permute.xlu0 %1644
    %1646 = vrot.lane.b32.xlu0 %v1641, 64
    %v1647 = vpop.permute.xlu0 %1646
    %v1650 = vadd.f32 %v1638, %v1645
    %v1651 = vadd.f32 %v1639, %v1647
    %v1652 = vtanh.pop %v1650
    %v1653 = vtanh.pop %v1651
    %v1654 = vmul.f32 %v1603, %v1652
    %v1655 = vmul.f32 %v1633, %v1653
    %v1656 = vpack.c.bf16 %v1655, %v1654
    %v1657 = vpack.c.bf16 %v1518, %v1517
    %1659 = vrot.lane.b32.xlu0 %v1657, 64
    %v1660 = vpop.permute.xlu0 %1659
    %v1662 = vsel %vm497, %v1660, 0
    %1664 = vmatpush.bf16.msra.mxu0 0
    %1665 = vmatpush.bf16.msra.mxu0 0
    %1666 = vmatpush.bf16.msra.mxu0 0
    %1667 = vmatpush.bf16.msra.mxu0 0
    %1668 = vmatpush.bf16.msra.mxu0 %v671
    %1669 = vmatpush.bf16.msra.mxu0 %v669
    %1670 = vmatpush.bf16.msra.mxu0 %v667
    %1671 = vmatpush.bf16.msra.mxu0 %v665
    %1672 = vmatmul.bf16.gmra.mxu0 %v1662
    %v1673 = vpop.f32.mrf.mxu0
    %v1674 = vadd.f32 0.0, %v1673
    %v1675 = vpop.f32.mrf.mxu0
    %v1676 = vadd.f32 0.0, %v1675
    %1677 = vdwg.mxu0
    %1678 = vmatpush.bf16.msra.mxu0 0
    %1679 = vmatpush.bf16.msra.mxu0 0
    %1680 = vmatpush.bf16.msra.mxu0 0
    %1681 = vmatpush.bf16.msra.mxu0 0
    %1682 = vmatpush.bf16.msra.mxu0 %v672
    %1683 = vmatpush.bf16.msra.mxu0 %v670
    %1684 = vmatpush.bf16.msra.mxu0 %v668
    %1685 = vmatpush.bf16.msra.mxu0 %v666
    %1686 = vmatmul.bf16.gmra.mxu0 %v1662
    %v1687 = vpop.f32.mrf.mxu0
    %v1688 = vadd.f32 0.0, %v1687
    %v1689 = vpop.f32.mrf.mxu0
    %v1690 = vadd.f32 0.0, %v1689
    %1691 = vdwg.mxu0
    %1693 = vrot.lane.b32.xlu0 %v1656, 64
    %v1694 = vpop.permute.xlu0 %1693
    %v1696 = vsel %vm497, %v1694, 0
    %1698 = vmatpush.bf16.msra.mxu0 0
    %1699 = vmatpush.bf16.msra.mxu0 0
    %1700 = vmatpush.bf16.msra.mxu0 0
    %1701 = vmatpush.bf16.msra.mxu0 0
    %1702 = vmatpush.bf16.msra.mxu0 %v745
    %1703 = vmatpush.bf16.msra.mxu0 %v743
    %1704 = vmatpush.bf16.msra.mxu0 %v741
    %1705 = vmatpush.bf16.msra.mxu0 %v739
    %1706 = vmatmul.bf16.gmra.mxu0 %v1696
    %v1707 = vpop.f32.mrf.mxu0
    %v1708 = vadd.f32 %v1674, %v1707
    %v1709 = vpop.f32.mrf.mxu0
    %v1710 = vadd.f32 %v1676, %v1709
    %1711 = vdwg.mxu0
    %1712 = vmatpush.bf16.msra.mxu0 0
    %1713 = vmatpush.bf16.msra.mxu0 0
    %1714 = vmatpush.bf16.msra.mxu0 0
    %1715 = vmatpush.bf16.msra.mxu0 0
    %1716 = vmatpush.bf16.msra.mxu0 %v746
    %1717 = vmatpush.bf16.msra.mxu0 %v744
    %1718 = vmatpush.bf16.msra.mxu0 %v742
    %1719 = vmatpush.bf16.msra.mxu0 %v740
    %1720 = vmatmul.bf16.gmra.mxu0 %v1696
    %v1721 = vpop.f32.mrf.mxu0
    %v1722 = vadd.f32 %v1688, %v1721
    %v1723 = vpop.f32.mrf.mxu0
    %v1724 = vadd.f32 %v1690, %v1723
    %1725 = vdwg.mxu0
    %v1726 = vadd.f32 %v1708, %v787
    %v1727 = vadd.f32 %v1722, %v788
    %v1728 = vadd.f32 %v1710, %v787
    %v1729 = vadd.f32 %v1724, %v788
    %v1730 = vxor.u32 %v1726, 2147483648
    %v1731 = vxor.u32 %v1727, 2147483648
    %v1732 = vxor.u32 %v1728, 2147483648
    %v1733 = vxor.u32 %v1729, 2147483648
    %v1734 = vmul.f32 %v1730, 1.442695
    %v1735 = vpow.pop %v1734
    %v1736 = vmul.f32 %v1731, 1.442695
    %v1737 = vpow.pop %v1736
    %v1738 = vmul.f32 %v1732, 1.442695
    %v1739 = vpow.pop %v1738
    %v1740 = vmul.f32 %v1733, 1.442695
    %v1741 = vpow.pop %v1740
    %v1742 = vadd.f32 %v1735, 1.0
    %v1743 = vadd.f32 %v1737, 1.0
    %v1744 = vadd.f32 %v1739, 1.0
    %v1745 = vadd.f32 %v1741, 1.0
    %v1746 = vrcp.pop %v1742
    %v1747 = vmul.f32 %v1742, %v1746
    %v1748 = vsub.f32 1.0, %v1747
    %v1749 = vmul.f32 %v1746, %v1748
    %v1750 = vadd.f32 %v1746, %v1749
    %vm1751 = vweird.f32 %v1742
    %vm1752 = vweird.f32 %v1746
    %vm1753 = vmor %vm1751, %vm1752
    %v1754 = vsel %vm1753, %v1746, %v1750
    %v1755 = vand.u32 2147483647, %v1742
    %vm1756 = vcmp.eq.f32.partialorder %v1755, 8.507059e+37
    %v1757 = vand.u32 %v1742, 2147483648
    %v1758 = vor.u32 1.1754944e-38, %v1757
    %v1759 = vsel %vm1756, %v1758, %v1754
    %v1760 = vmul.f32 1.0, %v1759
    %v1761 = vrcp.pop %v1743
    %v1762 = vmul.f32 %v1743, %v1761
    %v1763 = vsub.f32 1.0, %v1762
    %v1764 = vmul.f32 %v1761, %v1763
    %v1765 = vadd.f32 %v1761, %v1764
    %vm1766 = vweird.f32 %v1743
    %vm1767 = vweird.f32 %v1761
    %vm1768 = vmor %vm1766, %vm1767
    %v1769 = vsel %vm1768, %v1761, %v1765
    %v1770 = vand.u32 2147483647, %v1743
    %vm1771 = vcmp.eq.f32.partialorder %v1770, 8.507059e+37
    %v1772 = vand.u32 %v1743, 2147483648
    %v1773 = vor.u32 1.1754944e-38, %v1772
    %v1774 = vsel %vm1771, %v1773, %v1769
    %v1775 = vmul.f32 1.0, %v1774
    %v1776 = vrcp.pop %v1744
    %v1777 = vmul.f32 %v1744, %v1776
    %v1778 = vsub.f32 1.0, %v1777
    %v1779 = vmul.f32 %v1776, %v1778
    %v1780 = vadd.f32 %v1776, %v1779
    %vm1781 = vweird.f32 %v1744
    %vm1782 = vweird.f32 %v1776
    %vm1783 = vmor %vm1781, %vm1782
    %v1784 = vsel %vm1783, %v1776, %v1780
    %v1785 = vand.u32 2147483647, %v1744
    %vm1786 = vcmp.eq.f32.partialorder %v1785, 8.507059e+37
    %v1787 = vand.u32 %v1744, 2147483648
    %v1788 = vor.u32 1.1754944e-38, %v1787
    %v1789 = vsel %vm1786, %v1788, %v1784
    %v1790 = vmul.f32 1.0, %v1789
    %v1791 = vrcp.pop %v1745
    %v1792 = vmul.f32 %v1745, %v1791
    %v1793 = vsub.f32 1.0, %v1792
    %v1794 = vmul.f32 %v1791, %v1793
    %v1795 = vadd.f32 %v1791, %v1794
    %vm1796 = vweird.f32 %v1745
    %vm1797 = vweird.f32 %v1791
    %vm1798 = vmor %vm1796, %vm1797
    %v1799 = vsel %vm1798, %v1791, %v1795
    %v1800 = vand.u32 2147483647, %v1745
    %vm1801 = vcmp.eq.f32.partialorder %v1800, 8.507059e+37
    %v1802 = vand.u32 %v1745, 2147483648
    %v1803 = vor.u32 1.1754944e-38, %v1802
    %v1804 = vsel %vm1801, %v1803, %v1799
    %v1805 = vmul.f32 1.0, %v1804
    %v1806 = vmul.f32 %v1775, 2.0
    %v1807 = vmul.f32 %v1805, 2.0
    %v1808 = vsub.f32 %v1806, 1.0
    %v1809 = vsub.f32 %v1807, 1.0
    %v1810 = vmul.f32 %v1760, %v1513
    %v1811 = vmul.f32 %v1790, %v1514
    %v1812 = vmul.f32 %v1760, %v1808
    %v1813 = vmul.f32 %v1790, %v1809
    %1816 = vrot.lane.b32.xlu0 %v1812, 64
    %v1817 = vpop.permute.xlu0 %1816
    %1818 = vrot.lane.b32.xlu0 %v1813, 64
    %v1819 = vpop.permute.xlu0 %1818
    %v1822 = vadd.f32 %v1810, %v1817
    %v1823 = vadd.f32 %v1811, %v1819
    %v1824 = vtanh.pop %v1822
    %v1825 = vtanh.pop %v1823
    %v1826 = vmul.f32 %v1775, %v1824
    %v1827 = vmul.f32 %v1805, %v1825
    %s1828 = smul.u32 8, 2
    %s1829 = smul.addr %s1828, 8
    %s1830 = scalar_lea.vmem [#allocation2], %s1829
    %v1831 = vld [vmem:[%s1830] sm:$0xff]
    %v1832 = vld [vmem:[%s1830 + $0x8] sm:$0xff]
    %v1833 = vld [vmem:[%s1830 + $0x10] sm:$0xff]
    %v1834 = vld [vmem:[%s1830 + $0x18] sm:$0xff]
    %1835 = vmatpush.bf16.msra.mxu0 0
    %1836 = vmatpush.bf16.msra.mxu0 0
    %1837 = vmatpush.bf16.msra.mxu0 0
    %1838 = vmatpush.bf16.msra.mxu0 0
    %1839 = vmatpush.bf16.msra.mxu0 %v487
    %1840 = vmatpush.bf16.msra.mxu0 %v485
    %1841 = vmatpush.bf16.msra.mxu0 %v483
    %1842 = vmatpush.bf16.msra.mxu0 %v481
    %1843 = vmatmul.bf16.gmra.mxu0 %v1696
    %v1844 = vpop.f32.mrf.mxu0
    %v1845 = vadd.f32 0.0, %v1844
    %v1846 = vpop.f32.mrf.mxu0
    %v1847 = vadd.f32 0.0, %v1846
    %1848 = vdwg.mxu0
    %1849 = vmatpush.bf16.msra.mxu0 0
    %1850 = vmatpush.bf16.msra.mxu0 0
    %1851 = vmatpush.bf16.msra.mxu0 0
    %1852 = vmatpush.bf16.msra.mxu0 0
    %1853 = vmatpush.bf16.msra.mxu0 %v488
    %1854 = vmatpush.bf16.msra.mxu0 %v486
    %1855 = vmatpush.bf16.msra.mxu0 %v484
    %1856 = vmatpush.bf16.msra.mxu0 %v482
    %1857 = vmatmul.bf16.gmra.mxu0 %v1696
    %v1858 = vpop.f32.mrf.mxu0
    %v1859 = vadd.f32 0.0, %v1858
    %v1860 = vpop.f32.mrf.mxu0
    %v1861 = vadd.f32 0.0, %v1860
    %1862 = vdwg.mxu0
    %v1863 = vadd.f32 %v1831, %v1845
    %v1864 = vadd.f32 %v1832, %v1859
    %v1865 = vadd.f32 %v1833, %v1847
    %v1866 = vadd.f32 %v1834, %v1861
    %v1867 = vxor.u32 %v1863, 2147483648
    %v1868 = vxor.u32 %v1864, 2147483648
    %v1869 = vxor.u32 %v1865, 2147483648
    %v1870 = vxor.u32 %v1866, 2147483648
    %v1871 = vmul.f32 %v1867, 1.442695
    %v1872 = vpow.pop %v1871
    %v1873 = vmul.f32 %v1868, 1.442695
    %v1874 = vpow.pop %v1873
    %v1875 = vmul.f32 %v1869, 1.442695
    %v1876 = vpow.pop %v1875
    %v1877 = vmul.f32 %v1870, 1.442695
    %v1878 = vpow.pop %v1877
    %v1879 = vadd.f32 %v1872, 1.0
    %v1880 = vadd.f32 %v1874, 1.0
    %v1881 = vadd.f32 %v1876, 1.0
    %v1882 = vadd.f32 %v1878, 1.0
    %v1883 = vrcp.pop %v1879
    %v1884 = vmul.f32 %v1879, %v1883
    %v1885 = vsub.f32 1.0, %v1884
    %v1886 = vmul.f32 %v1883, %v1885
    %v1887 = vadd.f32 %v1883, %v1886
    %vm1888 = vweird.f32 %v1879
    %vm1889 = vweird.f32 %v1883
    %vm1890 = vmor %vm1888, %vm1889
    %v1891 = vsel %vm1890, %v1883, %v1887
    %v1892 = vand.u32 2147483647, %v1879
    %vm1893 = vcmp.eq.f32.partialorder %v1892, 8.507059e+37
    %v1894 = vand.u32 %v1879, 2147483648
    %v1895 = vor.u32 1.1754944e-38, %v1894
    %v1896 = vsel %vm1893, %v1895, %v1891
    %v1897 = vmul.f32 1.0, %v1896
    %v1898 = vrcp.pop %v1880
    %v1899 = vmul.f32 %v1880, %v1898
    %v1900 = vsub.f32 1.0, %v1899
    %v1901 = vmul.f32 %v1898, %v1900
    %v1902 = vadd.f32 %v1898, %v1901
    %vm1903 = vweird.f32 %v1880
    %vm1904 = vweird.f32 %v1898
    %vm1905 = vmor %vm1903, %vm1904
    %v1906 = vsel %vm1905, %v1898, %v1902
    %v1907 = vand.u32 2147483647, %v1880
    %vm1908 = vcmp.eq.f32.partialorder %v1907, 8.507059e+37
    %v1909 = vand.u32 %v1880, 2147483648
    %v1910 = vor.u32 1.1754944e-38, %v1909
    %v1911 = vsel %vm1908, %v1910, %v1906
    %v1912 = vmul.f32 1.0, %v1911
    %v1913 = vrcp.pop %v1881
    %v1914 = vmul.f32 %v1881, %v1913
    %v1915 = vsub.f32 1.0, %v1914
    %v1916 = vmul.f32 %v1913, %v1915
    %v1917 = vadd.f32 %v1913, %v1916
    %vm1918 = vweird.f32 %v1881
    %vm1919 = vweird.f32 %v1913
    %vm1920 = vmor %vm1918, %vm1919
    %v1921 = vsel %vm1920, %v1913, %v1917
    %v1922 = vand.u32 2147483647, %v1881
    %vm1923 = vcmp.eq.f32.partialorder %v1922, 8.507059e+37
    %v1924 = vand.u32 %v1881, 2147483648
    %v1925 = vor.u32 1.1754944e-38, %v1924
    %v1926 = vsel %vm1923, %v1925, %v1921
    %v1927 = vmul.f32 1.0, %v1926
    %v1928 = vrcp.pop %v1882
    %v1929 = vmul.f32 %v1882, %v1928
    %v1930 = vsub.f32 1.0, %v1929
    %v1931 = vmul.f32 %v1928, %v1930
    %v1932 = vadd.f32 %v1928, %v1931
    %vm1933 = vweird.f32 %v1882
    %vm1934 = vweird.f32 %v1928
    %vm1935 = vmor %vm1933, %vm1934
    %v1936 = vsel %vm1935, %v1928, %v1932
    %v1937 = vand.u32 2147483647, %v1882
    %vm1938 = vcmp.eq.f32.partialorder %v1937, 8.507059e+37
    %v1939 = vand.u32 %v1882, 2147483648
    %v1940 = vor.u32 1.1754944e-38, %v1939
    %v1941 = vsel %vm1938, %v1940, %v1936
    %v1942 = vmul.f32 1.0, %v1941
    %v1943 = vmul.f32 %v1912, 2.0
    %v1944 = vmul.f32 %v1942, 2.0
    %v1945 = vsub.f32 %v1943, 1.0
    %v1946 = vsub.f32 %v1944, 1.0
    %v1947 = vmul.f32 %v1897, %v1650
    %v1948 = vmul.f32 %v1927, %v1651
    %v1949 = vmul.f32 %v1897, %v1945
    %v1950 = vmul.f32 %v1927, %v1946
    %1953 = vrot.lane.b32.xlu0 %v1949, 64
    %v1954 = vpop.permute.xlu0 %1953
    %1955 = vrot.lane.b32.xlu0 %v1950, 64
    %v1956 = vpop.permute.xlu0 %1955
    %v1959 = vadd.f32 %v1947, %v1954
    %v1960 = vadd.f32 %v1948, %v1956
    %v1961 = vtanh.pop %v1959
    %v1962 = vtanh.pop %v1960
    %v1963 = vmul.f32 %v1912, %v1961
    %v1964 = vmul.f32 %v1942, %v1962
    %v1965 = vpack.c.bf16 %v1964, %v1963
    %v1966 = vpack.c.bf16 %v1827, %v1826
    %1968 = vrot.lane.b32.xlu0 %v1966, 64
    %v1969 = vpop.permute.xlu0 %1968
    %v1971 = vsel %vm497, %v1969, 0
    %1973 = vmatpush.bf16.msra.mxu0 0
    %1974 = vmatpush.bf16.msra.mxu0 0
    %1975 = vmatpush.bf16.msra.mxu0 0
    %1976 = vmatpush.bf16.msra.mxu0 0
    %1977 = vmatpush.bf16.msra.mxu0 %v671
    %1978 = vmatpush.bf16.msra.mxu0 %v669
    %1979 = vmatpush.bf16.msra.mxu0 %v667
    %1980 = vmatpush.bf16.msra.mxu0 %v665
    %1981 = vmatmul.bf16.gmra.mxu0 %v1971
    %v1982 = vpop.f32.mrf.mxu0
    %v1983 = vadd.f32 0.0, %v1982
    %v1984 = vpop.f32.mrf.mxu0
    %v1985 = vadd.f32 0.0, %v1984
    %1986 = vdwg.mxu0
    %1987 = vmatpush.bf16.msra.mxu0 0
    %1988 = vmatpush.bf16.msra.mxu0 0
    %1989 = vmatpush.bf16.msra.mxu0 0
    %1990 = vmatpush.bf16.msra.mxu0 0
    %1991 = vmatpush.bf16.msra.mxu0 %v672
    %1992 = vmatpush.bf16.msra.mxu0 %v670
    %1993 = vmatpush.bf16.msra.mxu0 %v668
    %1994 = vmatpush.bf16.msra.mxu0 %v666
    %1995 = vmatmul.bf16.gmra.mxu0 %v1971
    %v1996 = vpop.f32.mrf.mxu0
    %v1997 = vadd.f32 0.0, %v1996
    %v1998 = vpop.f32.mrf.mxu0
    %v1999 = vadd.f32 0.0, %v1998
    %2000 = vdwg.mxu0
    %2002 = vrot.lane.b32.xlu0 %v1965, 64
    %v2003 = vpop.permute.xlu0 %2002
    %v2005 = vsel %vm497, %v2003, 0
    %2007 = vmatpush.bf16.msra.mxu0 0
    %2008 = vmatpush.bf16.msra.mxu0 0
    %2009 = vmatpush.bf16.msra.mxu0 0
    %2010 = vmatpush.bf16.msra.mxu0 0
    %2011 = vmatpush.bf16.msra.mxu0 %v745
    %2012 = vmatpush.bf16.msra.mxu0 %v743
    %2013 = vmatpush.bf16.msra.mxu0 %v741
    %2014 = vmatpush.bf16.msra.mxu0 %v739
    %2015 = vmatmul.bf16.gmra.mxu0 %v2005
    %v2016 = vpop.f32.mrf.mxu0
    %v2017 = vadd.f32 %v1983, %v2016
    %v2018 = vpop.f32.mrf.mxu0
    %v2019 = vadd.f32 %v1985, %v2018
    %2020 = vdwg.mxu0
    %2021 = vmatpush.bf16.msra.mxu0 0
    %2022 = vmatpush.bf16.msra.mxu0 0
    %2023 = vmatpush.bf16.msra.mxu0 0
    %2024 = vmatpush.bf16.msra.mxu0 0
    %2025 = vmatpush.bf16.msra.mxu0 %v746
    %2026 = vmatpush.bf16.msra.mxu0 %v744
    %2027 = vmatpush.bf16.msra.mxu0 %v742
    %2028 = vmatpush.bf16.msra.mxu0 %v740
    %2029 = vmatmul.bf16.gmra.mxu0 %v2005
    %v2030 = vpop.f32.mrf.mxu0
    %v2031 = vadd.f32 %v1997, %v2030
    %v2032 = vpop.f32.mrf.mxu0
    %v2033 = vadd.f32 %v1999, %v2032
    %2034 = vdwg.mxu0
    %v2035 = vadd.f32 %v2017, %v787
    %v2036 = vadd.f32 %v2031, %v788
    %v2037 = vadd.f32 %v2019, %v787
    %v2038 = vadd.f32 %v2033, %v788
    %v2039 = vxor.u32 %v2035, 2147483648
    %v2040 = vxor.u32 %v2036, 2147483648
    %v2041 = vxor.u32 %v2037, 2147483648
    %v2042 = vxor.u32 %v2038, 2147483648
    %v2043 = vmul.f32 %v2039, 1.442695
    %v2044 = vpow.pop %v2043
    %v2045 = vmul.f32 %v2040, 1.442695
    %v2046 = vpow.pop %v2045
    %v2047 = vmul.f32 %v2041, 1.442695
    %v2048 = vpow.pop %v2047
    %v2049 = vmul.f32 %v2042, 1.442695
    %v2050 = vpow.pop %v2049
    %v2051 = vadd.f32 %v2044, 1.0
    %v2052 = vadd.f32 %v2046, 1.0
    %v2053 = vadd.f32 %v2048, 1.0
    %v2054 = vadd.f32 %v2050, 1.0
    %v2055 = vrcp.pop %v2051
    %v2056 = vmul.f32 %v2051, %v2055
    %v2057 = vsub.f32 1.0, %v2056
    %v2058 = vmul.f32 %v2055, %v2057
    %v2059 = vadd.f32 %v2055, %v2058
    %vm2060 = vweird.f32 %v2051
    %vm2061 = vweird.f32 %v2055
    %vm2062 = vmor %vm2060, %vm2061
    %v2063 = vsel %vm2062, %v2055, %v2059
    %v2064 = vand.u32 2147483647, %v2051
    %vm2065 = vcmp.eq.f32.partialorder %v2064, 8.507059e+37
    %v2066 = vand.u32 %v2051, 2147483648
    %v2067 = vor.u32 1.1754944e-38, %v2066
    %v2068 = vsel %vm2065, %v2067, %v2063
    %v2069 = vmul.f32 1.0, %v2068
    %v2070 = vrcp.pop %v2052
    %v2071 = vmul.f32 %v2052, %v2070
    %v2072 = vsub.f32 1.0, %v2071
    %v2073 = vmul.f32 %v2070, %v2072
    %v2074 = vadd.f32 %v2070, %v2073
    %vm2075 = vweird.f32 %v2052
    %vm2076 = vweird.f32 %v2070
    %vm2077 = vmor %vm2075, %vm2076
    %v2078 = vsel %vm2077, %v2070, %v2074
    %v2079 = vand.u32 2147483647, %v2052
    %vm2080 = vcmp.eq.f32.partialorder %v2079, 8.507059e+37
    %v2081 = vand.u32 %v2052, 2147483648
    %v2082 = vor.u32 1.1754944e-38, %v2081
    %v2083 = vsel %vm2080, %v2082, %v2078
    %v2084 = vmul.f32 1.0, %v2083
    %v2085 = vrcp.pop %v2053
    %v2086 = vmul.f32 %v2053, %v2085
    %v2087 = vsub.f32 1.0, %v2086
    %v2088 = vmul.f32 %v2085, %v2087
    %v2089 = vadd.f32 %v2085, %v2088
    %vm2090 = vweird.f32 %v2053
    %vm2091 = vweird.f32 %v2085
    %vm2092 = vmor %vm2090, %vm2091
    %v2093 = vsel %vm2092, %v2085, %v2089
    %v2094 = vand.u32 2147483647, %v2053
    %vm2095 = vcmp.eq.f32.partialorder %v2094, 8.507059e+37
    %v2096 = vand.u32 %v2053, 2147483648
    %v2097 = vor.u32 1.1754944e-38, %v2096
    %v2098 = vsel %vm2095, %v2097, %v2093
    %v2099 = vmul.f32 1.0, %v2098
    %v2100 = vrcp.pop %v2054
    %v2101 = vmul.f32 %v2054, %v2100
    %v2102 = vsub.f32 1.0, %v2101
    %v2103 = vmul.f32 %v2100, %v2102
    %v2104 = vadd.f32 %v2100, %v2103
    %vm2105 = vweird.f32 %v2054
    %vm2106 = vweird.f32 %v2100
    %vm2107 = vmor %vm2105, %vm2106
    %v2108 = vsel %vm2107, %v2100, %v2104
    %v2109 = vand.u32 2147483647, %v2054
    %vm2110 = vcmp.eq.f32.partialorder %v2109, 8.507059e+37
    %v2111 = vand.u32 %v2054, 2147483648
    %v2112 = vor.u32 1.1754944e-38, %v2111
    %v2113 = vsel %vm2110, %v2112, %v2108
    %v2114 = vmul.f32 1.0, %v2113
    %v2115 = vmul.f32 %v2084, 2.0
    %v2116 = vmul.f32 %v2114, 2.0
    %v2117 = vsub.f32 %v2115, 1.0
    %v2118 = vsub.f32 %v2116, 1.0
    %v2119 = vmul.f32 %v2069, %v1822
    %v2120 = vmul.f32 %v2099, %v1823
    %v2121 = vmul.f32 %v2069, %v2117
    %v2122 = vmul.f32 %v2099, %v2118
    %2125 = vrot.lane.b32.xlu0 %v2121, 64
    %v2126 = vpop.permute.xlu0 %2125
    %2127 = vrot.lane.b32.xlu0 %v2122, 64
    %v2128 = vpop.permute.xlu0 %2127
    %v2131 = vadd.f32 %v2119, %v2126
    %v2132 = vadd.f32 %v2120, %v2128
    %v2133 = vtanh.pop %v2131
    %v2134 = vtanh.pop %v2132
    %v2135 = vmul.f32 %v2084, %v2133
    %v2136 = vmul.f32 %v2114, %v2134
    %s2137 = smul.u32 10, 2
    %s2138 = smul.addr %s2137, 8
    %s2139 = scalar_lea.vmem [#allocation2], %s2138
    %v2140 = vld [vmem:[%s2139] sm:$0xff]
    %v2141 = vld [vmem:[%s2139 + $0x8] sm:$0xff]
    %v2142 = vld [vmem:[%s2139 + $0x10] sm:$0xff]
    %v2143 = vld [vmem:[%s2139 + $0x18] sm:$0xff]
    %2144 = vmatpush.bf16.msra.mxu0 0
    %2145 = vmatpush.bf16.msra.mxu0 0
    %2146 = vmatpush.bf16.msra.mxu0 0
    %2147 = vmatpush.bf16.msra.mxu0 0
    %2148 = vmatpush.bf16.msra.mxu0 %v487
    %2149 = vmatpush.bf16.msra.mxu0 %v485
    %2150 = vmatpush.bf16.msra.mxu0 %v483
    %2151 = vmatpush.bf16.msra.mxu0 %v481
    %2152 = vmatmul.bf16.gmra.mxu0 %v2005
    %v2153 = vpop.f32.mrf.mxu0
    %v2154 = vadd.f32 0.0, %v2153
    %v2155 = vpop.f32.mrf.mxu0
    %v2156 = vadd.f32 0.0, %v2155
    %2157 = vdwg.mxu0
    %2158 = vmatpush.bf16.msra.mxu0 0
    %2159 = vmatpush.bf16.msra.mxu0 0
    %2160 = vmatpush.bf16.msra.mxu0 0
    %2161 = vmatpush.bf16.msra.mxu0 0
    %2162 = vmatpush.bf16.msra.mxu0 %v488
    %2163 = vmatpush.bf16.msra.mxu0 %v486
    %2164 = vmatpush.bf16.msra.mxu0 %v484
    %2165 = vmatpush.bf16.msra.mxu0 %v482
    %2166 = vmatmul.bf16.gmra.mxu0 %v2005
    %v2167 = vpop.f32.mrf.mxu0
    %v2168 = vadd.f32 0.0, %v2167
    %v2169 = vpop.f32.mrf.mxu0
    %v2170 = vadd.f32 0.0, %v2169
    %2171 = vdwg.mxu0
    %v2172 = vadd.f32 %v2140, %v2154
    %v2173 = vadd.f32 %v2141, %v2168
    %v2174 = vadd.f32 %v2142, %v2156
    %v2175 = vadd.f32 %v2143, %v2170
    %v2176 = vxor.u32 %v2172, 2147483648
    %v2177 = vxor.u32 %v2173, 2147483648
    %v2178 = vxor.u32 %v2174, 2147483648
    %v2179 = vxor.u32 %v2175, 2147483648
    %v2180 = vmul.f32 %v2176, 1.442695
    %v2181 = vpow.pop %v2180
    %v2182 = vmul.f32 %v2177, 1.442695
    %v2183 = vpow.pop %v2182
    %v2184 = vmul.f32 %v2178, 1.442695
    %v2185 = vpow.pop %v2184
    %v2186 = vmul.f32 %v2179, 1.442695
    %v2187 = vpow.pop %v2186
    %v2188 = vadd.f32 %v2181, 1.0
    %v2189 = vadd.f32 %v2183, 1.0
    %v2190 = vadd.f32 %v2185, 1.0
    %v2191 = vadd.f32 %v2187, 1.0
    %v2192 = vrcp.pop %v2188
    %v2193 = vmul.f32 %v2188, %v2192
    %v2194 = vsub.f32 1.0, %v2193
    %v2195 = vmul.f32 %v2192, %v2194
    %v2196 = vadd.f32 %v2192, %v2195
    %vm2197 = vweird.f32 %v2188
    %vm2198 = vweird.f32 %v2192
    %vm2199 = vmor %vm2197, %vm2198
    %v2200 = vsel %vm2199, %v2192, %v2196
    %v2201 = vand.u32 2147483647, %v2188
    %vm2202 = vcmp.eq.f32.partialorder %v2201, 8.507059e+37
    %v2203 = vand.u32 %v2188, 2147483648
    %v2204 = vor.u32 1.1754944e-38, %v2203
    %v2205 = vsel %vm2202, %v2204, %v2200
    %v2206 = vmul.f32 1.0, %v2205
    %v2207 = vrcp.pop %v2189
    %v2208 = vmul.f32 %v2189, %v2207
    %v2209 = vsub.f32 1.0, %v2208
    %v2210 = vmul.f32 %v2207, %v2209
    %v2211 = vadd.f32 %v2207, %v2210
    %vm2212 = vweird.f32 %v2189
    %vm2213 = vweird.f32 %v2207
    %vm2214 = vmor %vm2212, %vm2213
    %v2215 = vsel %vm2214, %v2207, %v2211
    %v2216 = vand.u32 2147483647, %v2189
    %vm2217 = vcmp.eq.f32.partialorder %v2216, 8.507059e+37
    %v2218 = vand.u32 %v2189, 2147483648
    %v2219 = vor.u32 1.1754944e-38, %v2218
    %v2220 = vsel %vm2217, %v2219, %v2215
    %v2221 = vmul.f32 1.0, %v2220
    %v2222 = vrcp.pop %v2190
    %v2223 = vmul.f32 %v2190, %v2222
    %v2224 = vsub.f32 1.0, %v2223
    %v2225 = vmul.f32 %v2222, %v2224
    %v2226 = vadd.f32 %v2222, %v2225
    %vm2227 = vweird.f32 %v2190
    %vm2228 = vweird.f32 %v2222
    %vm2229 = vmor %vm2227, %vm2228
    %v2230 = vsel %vm2229, %v2222, %v2226
    %v2231 = vand.u32 2147483647, %v2190
    %vm2232 = vcmp.eq.f32.partialorder %v2231, 8.507059e+37
    %v2233 = vand.u32 %v2190, 2147483648
    %v2234 = vor.u32 1.1754944e-38, %v2233
    %v2235 = vsel %vm2232, %v2234, %v2230
    %v2236 = vmul.f32 1.0, %v2235
    %v2237 = vrcp.pop %v2191
    %v2238 = vmul.f32 %v2191, %v2237
    %v2239 = vsub.f32 1.0, %v2238
    %v2240 = vmul.f32 %v2237, %v2239
    %v2241 = vadd.f32 %v2237, %v2240
    %vm2242 = vweird.f32 %v2191
    %vm2243 = vweird.f32 %v2237
    %vm2244 = vmor %vm2242, %vm2243
    %v2245 = vsel %vm2244, %v2237, %v2241
    %v2246 = vand.u32 2147483647, %v2191
    %vm2247 = vcmp.eq.f32.partialorder %v2246, 8.507059e+37
    %v2248 = vand.u32 %v2191, 2147483648
    %v2249 = vor.u32 1.1754944e-38, %v2248
    %v2250 = vsel %vm2247, %v2249, %v2245
    %v2251 = vmul.f32 1.0, %v2250
    %v2252 = vmul.f32 %v2221, 2.0
    %v2253 = vmul.f32 %v2251, 2.0
    %v2254 = vsub.f32 %v2252, 1.0
    %v2255 = vsub.f32 %v2253, 1.0
    %v2256 = vmul.f32 %v2206, %v1959
    %v2257 = vmul.f32 %v2236, %v1960
    %v2258 = vmul.f32 %v2206, %v2254
    %v2259 = vmul.f32 %v2236, %v2255
    %2262 = vrot.lane.b32.xlu0 %v2258, 64
    %v2263 = vpop.permute.xlu0 %2262
    %2264 = vrot.lane.b32.xlu0 %v2259, 64
    %v2265 = vpop.permute.xlu0 %2264
    %v2268 = vadd.f32 %v2256, %v2263
    %v2269 = vadd.f32 %v2257, %v2265
    %v2270 = vtanh.pop %v2268
    %v2271 = vtanh.pop %v2269
    %v2272 = vmul.f32 %v2221, %v2270
    %v2273 = vmul.f32 %v2251, %v2271
    %v2274 = vpack.c.bf16 %v2273, %v2272
    %v2275 = vpack.c.bf16 %v2136, %v2135
    %2277 = vrot.lane.b32.xlu0 %v2275, 64
    %v2278 = vpop.permute.xlu0 %2277
    %v2280 = vsel %vm497, %v2278, 0
    %2282 = vmatpush.bf16.msra.mxu0 0
    %2283 = vmatpush.bf16.msra.mxu0 0
    %2284 = vmatpush.bf16.msra.mxu0 0
    %2285 = vmatpush.bf16.msra.mxu0 0
    %2286 = vmatpush.bf16.msra.mxu0 %v671
    %2287 = vmatpush.bf16.msra.mxu0 %v669
    %2288 = vmatpush.bf16.msra.mxu0 %v667
    %2289 = vmatpush.bf16.msra.mxu0 %v665
    %2290 = vmatmul.bf16.gmra.mxu0 %v2280
    %v2291 = vpop.f32.mrf.mxu0
    %v2292 = vadd.f32 0.0, %v2291
    %v2293 = vpop.f32.mrf.mxu0
    %v2294 = vadd.f32 0.0, %v2293
    %2295 = vdwg.mxu0
    %2296 = vmatpush.bf16.msra.mxu0 0
    %2297 = vmatpush.bf16.msra.mxu0 0
    %2298 = vmatpush.bf16.msra.mxu0 0
    %2299 = vmatpush.bf16.msra.mxu0 0
    %2300 = vmatpush.bf16.msra.mxu0 %v672
    %2301 = vmatpush.bf16.msra.mxu0 %v670
    %2302 = vmatpush.bf16.msra.mxu0 %v668
    %2303 = vmatpush.bf16.msra.mxu0 %v666
    %2304 = vmatmul.bf16.gmra.mxu0 %v2280
    %v2305 = vpop.f32.mrf.mxu0
    %v2306 = vadd.f32 0.0, %v2305
    %v2307 = vpop.f32.mrf.mxu0
    %v2308 = vadd.f32 0.0, %v2307
    %2309 = vdwg.mxu0
    %2311 = vrot.lane.b32.xlu0 %v2274, 64
    %v2312 = vpop.permute.xlu0 %2311
    %v2314 = vsel %vm497, %v2312, 0
    %2316 = vmatpush.bf16.msra.mxu0 0
    %2317 = vmatpush.bf16.msra.mxu0 0
    %2318 = vmatpush.bf16.msra.mxu0 0
    %2319 = vmatpush.bf16.msra.mxu0 0
    %2320 = vmatpush.bf16.msra.mxu0 %v745
    %2321 = vmatpush.bf16.msra.mxu0 %v743
    %2322 = vmatpush.bf16.msra.mxu0 %v741
    %2323 = vmatpush.bf16.msra.mxu0 %v739
    %2324 = vmatmul.bf16.gmra.mxu0 %v2314
    %v2325 = vpop.f32.mrf.mxu0
    %v2326 = vadd.f32 %v2292, %v2325
    %v2327 = vpop.f32.mrf.mxu0
    %v2328 = vadd.f32 %v2294, %v2327
    %2329 = vdwg.mxu0
    %2330 = vmatpush.bf16.msra.mxu0 0
    %2331 = vmatpush.bf16.msra.mxu0 0
    %2332 = vmatpush.bf16.msra.mxu0 0
    %2333 = vmatpush.bf16.msra.mxu0 0
    %2334 = vmatpush.bf16.msra.mxu0 %v746
    %2335 = vmatpush.bf16.msra.mxu0 %v744
    %2336 = vmatpush.bf16.msra.mxu0 %v742
    %2337 = vmatpush.bf16.msra.mxu0 %v740
    %2338 = vmatmul.bf16.gmra.mxu0 %v2314
    %v2339 = vpop.f32.mrf.mxu0
    %v2340 = vadd.f32 %v2306, %v2339
    %v2341 = vpop.f32.mrf.mxu0
    %v2342 = vadd.f32 %v2308, %v2341
    %2343 = vdwg.mxu0
    %v2344 = vadd.f32 %v2326, %v787
    %v2345 = vadd.f32 %v2340, %v788
    %v2346 = vadd.f32 %v2328, %v787
    %v2347 = vadd.f32 %v2342, %v788
    %v2348 = vxor.u32 %v2344, 2147483648
    %v2349 = vxor.u32 %v2345, 2147483648
    %v2350 = vxor.u32 %v2346, 2147483648
    %v2351 = vxor.u32 %v2347, 2147483648
    %v2352 = vmul.f32 %v2348, 1.442695
    %v2353 = vpow.pop %v2352
    %v2354 = vmul.f32 %v2349, 1.442695
    %v2355 = vpow.pop %v2354
    %v2356 = vmul.f32 %v2350, 1.442695
    %v2357 = vpow.pop %v2356
    %v2358 = vmul.f32 %v2351, 1.442695
    %v2359 = vpow.pop %v2358
    %v2360 = vadd.f32 %v2353, 1.0
    %v2361 = vadd.f32 %v2355, 1.0
    %v2362 = vadd.f32 %v2357, 1.0
    %v2363 = vadd.f32 %v2359, 1.0
    %v2364 = vrcp.pop %v2360
    %v2365 = vmul.f32 %v2360, %v2364
    %v2366 = vsub.f32 1.0, %v2365
    %v2367 = vmul.f32 %v2364, %v2366
    %v2368 = vadd.f32 %v2364, %v2367
    %vm2369 = vweird.f32 %v2360
    %vm2370 = vweird.f32 %v2364
    %vm2371 = vmor %vm2369, %vm2370
    %v2372 = vsel %vm2371, %v2364, %v2368
    %v2373 = vand.u32 2147483647, %v2360
    %vm2374 = vcmp.eq.f32.partialorder %v2373, 8.507059e+37
    %v2375 = vand.u32 %v2360, 2147483648
    %v2376 = vor.u32 1.1754944e-38, %v2375
    %v2377 = vsel %vm2374, %v2376, %v2372
    %v2378 = vmul.f32 1.0, %v2377
    %v2379 = vrcp.pop %v2361
    %v2380 = vmul.f32 %v2361, %v2379
    %v2381 = vsub.f32 1.0, %v2380
    %v2382 = vmul.f32 %v2379, %v2381
    %v2383 = vadd.f32 %v2379, %v2382
    %vm2384 = vweird.f32 %v2361
    %vm2385 = vweird.f32 %v2379
    %vm2386 = vmor %vm2384, %vm2385
    %v2387 = vsel %vm2386, %v2379, %v2383
    %v2388 = vand.u32 2147483647, %v2361
    %vm2389 = vcmp.eq.f32.partialorder %v2388, 8.507059e+37
    %v2390 = vand.u32 %v2361, 2147483648
    %v2391 = vor.u32 1.1754944e-38, %v2390
    %v2392 = vsel %vm2389, %v2391, %v2387
    %v2393 = vmul.f32 1.0, %v2392
    %v2394 = vrcp.pop %v2362
    %v2395 = vmul.f32 %v2362, %v2394
    %v2396 = vsub.f32 1.0, %v2395
    %v2397 = vmul.f32 %v2394, %v2396
    %v2398 = vadd.f32 %v2394, %v2397
    %vm2399 = vweird.f32 %v2362
    %vm2400 = vweird.f32 %v2394
    %vm2401 = vmor %vm2399, %vm2400
    %v2402 = vsel %vm2401, %v2394, %v2398
    %v2403 = vand.u32 2147483647, %v2362
    %vm2404 = vcmp.eq.f32.partialorder %v2403, 8.507059e+37
    %v2405 = vand.u32 %v2362, 2147483648
    %v2406 = vor.u32 1.1754944e-38, %v2405
    %v2407 = vsel %vm2404, %v2406, %v2402
    %v2408 = vmul.f32 1.0, %v2407
    %v2409 = vrcp.pop %v2363
    %v2410 = vmul.f32 %v2363, %v2409
    %v2411 = vsub.f32 1.0, %v2410
    %v2412 = vmul.f32 %v2409, %v2411
    %v2413 = vadd.f32 %v2409, %v2412
    %vm2414 = vweird.f32 %v2363
    %vm2415 = vweird.f32 %v2409
    %vm2416 = vmor %vm2414, %vm2415
    %v2417 = vsel %vm2416, %v2409, %v2413
    %v2418 = vand.u32 2147483647, %v2363
    %vm2419 = vcmp.eq.f32.partialorder %v2418, 8.507059e+37
    %v2420 = vand.u32 %v2363, 2147483648
    %v2421 = vor.u32 1.1754944e-38, %v2420
    %v2422 = vsel %vm2419, %v2421, %v2417
    %v2423 = vmul.f32 1.0, %v2422
    %v2424 = vmul.f32 %v2393, 2.0
    %v2425 = vmul.f32 %v2423, 2.0
    %v2426 = vsub.f32 %v2424, 1.0
    %v2427 = vsub.f32 %v2425, 1.0
    %v2428 = vmul.f32 %v2378, %v2131
    %v2429 = vmul.f32 %v2408, %v2132
    %v2430 = vmul.f32 %v2378, %v2426
    %v2431 = vmul.f32 %v2408, %v2427
    %2434 = vrot.lane.b32.xlu0 %v2430, 64
    %v2435 = vpop.permute.xlu0 %2434
    %2436 = vrot.lane.b32.xlu0 %v2431, 64
    %v2437 = vpop.permute.xlu0 %2436
    %v2440 = vadd.f32 %v2428, %v2435
    %v2441 = vadd.f32 %v2429, %v2437
    %v2442 = vtanh.pop %v2440
    %v2443 = vtanh.pop %v2441
    %v2444 = vmul.f32 %v2393, %v2442
    %v2445 = vmul.f32 %v2423, %v2443
    %s2446 = smul.u32 12, 2
    %s2447 = smul.addr %s2446, 8
    %s2448 = scalar_lea.vmem [#allocation2], %s2447
    %v2449 = vld [vmem:[%s2448] sm:$0xff]
    %v2450 = vld [vmem:[%s2448 + $0x8] sm:$0xff]
    %v2451 = vld [vmem:[%s2448 + $0x10] sm:$0xff]
    %v2452 = vld [vmem:[%s2448 + $0x18] sm:$0xff]
    %2453 = vmatpush.bf16.msra.mxu0 0
    %2454 = vmatpush.bf16.msra.mxu0 0
    %2455 = vmatpush.bf16.msra.mxu0 0
    %2456 = vmatpush.bf16.msra.mxu0 0
    %2457 = vmatpush.bf16.msra.mxu0 %v487
    %2458 = vmatpush.bf16.msra.mxu0 %v485
    %2459 = vmatpush.bf16.msra.mxu0 %v483
    %2460 = vmatpush.bf16.msra.mxu0 %v481
    %2461 = vmatmul.bf16.gmra.mxu0 %v2314
    %v2462 = vpop.f32.mrf.mxu0
    %v2463 = vadd.f32 0.0, %v2462
    %v2464 = vpop.f32.mrf.mxu0
    %v2465 = vadd.f32 0.0, %v2464
    %2466 = vdwg.mxu0
    %2467 = vmatpush.bf16.msra.mxu0 0
    %2468 = vmatpush.bf16.msra.mxu0 0
    %2469 = vmatpush.bf16.msra.mxu0 0
    %2470 = vmatpush.bf16.msra.mxu0 0
    %2471 = vmatpush.bf16.msra.mxu0 %v488
    %2472 = vmatpush.bf16.msra.mxu0 %v486
    %2473 = vmatpush.bf16.msra.mxu0 %v484
    %2474 = vmatpush.bf16.msra.mxu0 %v482
    %2475 = vmatmul.bf16.gmra.mxu0 %v2314
    %v2476 = vpop.f32.mrf.mxu0
    %v2477 = vadd.f32 0.0, %v2476
    %v2478 = vpop.f32.mrf.mxu0
    %v2479 = vadd.f32 0.0, %v2478
    %2480 = vdwg.mxu0
    %v2481 = vadd.f32 %v2449, %v2463
    %v2482 = vadd.f32 %v2450, %v2477
    %v2483 = vadd.f32 %v2451, %v2465
    %v2484 = vadd.f32 %v2452, %v2479
    %v2485 = vxor.u32 %v2481, 2147483648
    %v2486 = vxor.u32 %v2482, 2147483648
    %v2487 = vxor.u32 %v2483, 2147483648
    %v2488 = vxor.u32 %v2484, 2147483648
    %v2489 = vmul.f32 %v2485, 1.442695
    %v2490 = vpow.pop %v2489
    %v2491 = vmul.f32 %v2486, 1.442695
    %v2492 = vpow.pop %v2491
    %v2493 = vmul.f32 %v2487, 1.442695
    %v2494 = vpow.pop %v2493
    %v2495 = vmul.f32 %v2488, 1.442695
    %v2496 = vpow.pop %v2495
    %v2497 = vadd.f32 %v2490, 1.0
    %v2498 = vadd.f32 %v2492, 1.0
    %v2499 = vadd.f32 %v2494, 1.0
    %v2500 = vadd.f32 %v2496, 1.0
    %v2501 = vrcp.pop %v2497
    %v2502 = vmul.f32 %v2497, %v2501
    %v2503 = vsub.f32 1.0, %v2502
    %v2504 = vmul.f32 %v2501, %v2503
    %v2505 = vadd.f32 %v2501, %v2504
    %vm2506 = vweird.f32 %v2497
    %vm2507 = vweird.f32 %v2501
    %vm2508 = vmor %vm2506, %vm2507
    %v2509 = vsel %vm2508, %v2501, %v2505
    %v2510 = vand.u32 2147483647, %v2497
    %vm2511 = vcmp.eq.f32.partialorder %v2510, 8.507059e+37
    %v2512 = vand.u32 %v2497, 2147483648
    %v2513 = vor.u32 1.1754944e-38, %v2512
    %v2514 = vsel %vm2511, %v2513, %v2509
    %v2515 = vmul.f32 1.0, %v2514
    %v2516 = vrcp.pop %v2498
    %v2517 = vmul.f32 %v2498, %v2516
    %v2518 = vsub.f32 1.0, %v2517
    %v2519 = vmul.f32 %v2516, %v2518
    %v2520 = vadd.f32 %v2516, %v2519
    %vm2521 = vweird.f32 %v2498
    %vm2522 = vweird.f32 %v2516
    %vm2523 = vmor %vm2521, %vm2522
    %v2524 = vsel %vm2523, %v2516, %v2520
    %v2525 = vand.u32 2147483647, %v2498
    %vm2526 = vcmp.eq.f32.partialorder %v2525, 8.507059e+37
    %v2527 = vand.u32 %v2498, 2147483648
    %v2528 = vor.u32 1.1754944e-38, %v2527
    %v2529 = vsel %vm2526, %v2528, %v2524
    %v2530 = vmul.f32 1.0, %v2529
    %v2531 = vrcp.pop %v2499
    %v2532 = vmul.f32 %v2499, %v2531
    %v2533 = vsub.f32 1.0, %v2532
    %v2534 = vmul.f32 %v2531, %v2533
    %v2535 = vadd.f32 %v2531, %v2534
    %vm2536 = vweird.f32 %v2499
    %vm2537 = vweird.f32 %v2531
    %vm2538 = vmor %vm2536, %vm2537
    %v2539 = vsel %vm2538, %v2531, %v2535
    %v2540 = vand.u32 2147483647, %v2499
    %vm2541 = vcmp.eq.f32.partialorder %v2540, 8.507059e+37
    %v2542 = vand.u32 %v2499, 2147483648
    %v2543 = vor.u32 1.1754944e-38, %v2542
    %v2544 = vsel %vm2541, %v2543, %v2539
    %v2545 = vmul.f32 1.0, %v2544
    %v2546 = vrcp.pop %v2500
    %v2547 = vmul.f32 %v2500, %v2546
    %v2548 = vsub.f32 1.0, %v2547
    %v2549 = vmul.f32 %v2546, %v2548
    %v2550 = vadd.f32 %v2546, %v2549
    %vm2551 = vweird.f32 %v2500
    %vm2552 = vweird.f32 %v2546
    %vm2553 = vmor %vm2551, %vm2552
    %v2554 = vsel %vm2553, %v2546, %v2550
    %v2555 = vand.u32 2147483647, %v2500
    %vm2556 = vcmp.eq.f32.partialorder %v2555, 8.507059e+37
    %v2557 = vand.u32 %v2500, 2147483648
    %v2558 = vor.u32 1.1754944e-38, %v2557
    %v2559 = vsel %vm2556, %v2558, %v2554
    %v2560 = vmul.f32 1.0, %v2559
    %v2561 = vmul.f32 %v2530, 2.0
    %v2562 = vmul.f32 %v2560, 2.0
    %v2563 = vsub.f32 %v2561, 1.0
    %v2564 = vsub.f32 %v2562, 1.0
    %v2565 = vmul.f32 %v2515, %v2268
    %v2566 = vmul.f32 %v2545, %v2269
    %v2567 = vmul.f32 %v2515, %v2563
    %v2568 = vmul.f32 %v2545, %v2564
    %2571 = vrot.lane.b32.xlu0 %v2567, 64
    %v2572 = vpop.permute.xlu0 %2571
    %2573 = vrot.lane.b32.xlu0 %v2568, 64
    %v2574 = vpop.permute.xlu0 %2573
    %v2577 = vadd.f32 %v2565, %v2572
    %v2578 = vadd.f32 %v2566, %v2574
    %v2579 = vtanh.pop %v2577
    %v2580 = vtanh.pop %v2578
    %v2581 = vmul.f32 %v2530, %v2579
    %v2582 = vmul.f32 %v2560, %v2580
    %v2583 = vpack.c.bf16 %v2582, %v2581
    %v2584 = vpack.c.bf16 %v2445, %v2444
    %2586 = vrot.lane.b32.xlu0 %v2584, 64
    %v2587 = vpop.permute.xlu0 %2586
    %v2589 = vsel %vm497, %v2587, 0
    %2591 = vmatpush.bf16.msra.mxu0 0
    %2592 = vmatpush.bf16.msra.mxu0 0
    %2593 = vmatpush.bf16.msra.mxu0 0
    %2594 = vmatpush.bf16.msra.mxu0 0
    %2595 = vmatpush.bf16.msra.mxu0 %v671
    %2596 = vmatpush.bf16.msra.mxu0 %v669
    %2597 = vmatpush.bf16.msra.mxu0 %v667
    %2598 = vmatpush.bf16.msra.mxu0 %v665
    %2599 = vmatmul.bf16.gmra.mxu0 %v2589
    %v2600 = vpop.f32.mrf.mxu0
    %v2601 = vadd.f32 0.0, %v2600
    %v2602 = vpop.f32.mrf.mxu0
    %v2603 = vadd.f32 0.0, %v2602
    %2604 = vdwg.mxu0
    %2605 = vmatpush.bf16.msra.mxu0 0
    %2606 = vmatpush.bf16.msra.mxu0 0
    %2607 = vmatpush.bf16.msra.mxu0 0
    %2608 = vmatpush.bf16.msra.mxu0 0
    %2609 = vmatpush.bf16.msra.mxu0 %v672
    %2610 = vmatpush.bf16.msra.mxu0 %v670
    %2611 = vmatpush.bf16.msra.mxu0 %v668
    %2612 = vmatpush.bf16.msra.mxu0 %v666
    %2613 = vmatmul.bf16.gmra.mxu0 %v2589
    %v2614 = vpop.f32.mrf.mxu0
    %v2615 = vadd.f32 0.0, %v2614
    %v2616 = vpop.f32.mrf.mxu0
    %v2617 = vadd.f32 0.0, %v2616
    %2618 = vdwg.mxu0
    %2620 = vrot.lane.b32.xlu0 %v2583, 64
    %v2621 = vpop.permute.xlu0 %2620
    %v2623 = vsel %vm497, %v2621, 0
    %2625 = vmatpush.bf16.msra.mxu0 0
    %2626 = vmatpush.bf16.msra.mxu0 0
    %2627 = vmatpush.bf16.msra.mxu0 0
    %2628 = vmatpush.bf16.msra.mxu0 0
    %2629 = vmatpush.bf16.msra.mxu0 %v745
    %2630 = vmatpush.bf16.msra.mxu0 %v743
    %2631 = vmatpush.bf16.msra.mxu0 %v741
    %2632 = vmatpush.bf16.msra.mxu0 %v739
    %2633 = vmatmul.bf16.gmra.mxu0 %v2623
    %v2634 = vpop.f32.mrf.mxu0
    %v2635 = vadd.f32 %v2601, %v2634
    %v2636 = vpop.f32.mrf.mxu0
    %v2637 = vadd.f32 %v2603, %v2636
    %2638 = vdwg.mxu0
    %2639 = vmatpush.bf16.msra.mxu0 0
    %2640 = vmatpush.bf16.msra.mxu0 0
    %2641 = vmatpush.bf16.msra.mxu0 0
    %2642 = vmatpush.bf16.msra.mxu0 0
    %2643 = vmatpush.bf16.msra.mxu0 %v746
    %2644 = vmatpush.bf16.msra.mxu0 %v744
    %2645 = vmatpush.bf16.msra.mxu0 %v742
    %2646 = vmatpush.bf16.msra.mxu0 %v740
    %2647 = vmatmul.bf16.gmra.mxu0 %v2623
    %v2648 = vpop.f32.mrf.mxu0
    %v2649 = vadd.f32 %v2615, %v2648
    %v2650 = vpop.f32.mrf.mxu0
    %v2651 = vadd.f32 %v2617, %v2650
    %2652 = vdwg.mxu0
    %v2653 = vadd.f32 %v2635, %v787
    %v2654 = vadd.f32 %v2649, %v788
    %v2655 = vadd.f32 %v2637, %v787
    %v2656 = vadd.f32 %v2651, %v788
    %v2657 = vxor.u32 %v2653, 2147483648
    %v2658 = vxor.u32 %v2654, 2147483648
    %v2659 = vxor.u32 %v2655, 2147483648
    %v2660 = vxor.u32 %v2656, 2147483648
    %v2661 = vmul.f32 %v2657, 1.442695
    %v2662 = vpow.pop %v2661
    %v2663 = vmul.f32 %v2658, 1.442695
    %v2664 = vpow.pop %v2663
    %v2665 = vmul.f32 %v2659, 1.442695
    %v2666 = vpow.pop %v2665
    %v2667 = vmul.f32 %v2660, 1.442695
    %v2668 = vpow.pop %v2667
    %v2669 = vadd.f32 %v2662, 1.0
    %v2670 = vadd.f32 %v2664, 1.0
    %v2671 = vadd.f32 %v2666, 1.0
    %v2672 = vadd.f32 %v2668, 1.0
    %v2673 = vrcp.pop %v2669
    %v2674 = vmul.f32 %v2669, %v2673
    %v2675 = vsub.f32 1.0, %v2674
    %v2676 = vmul.f32 %v2673, %v2675
    %v2677 = vadd.f32 %v2673, %v2676
    %vm2678 = vweird.f32 %v2669
    %vm2679 = vweird.f32 %v2673
    %vm2680 = vmor %vm2678, %vm2679
    %v2681 = vsel %vm2680, %v2673, %v2677
    %v2682 = vand.u32 2147483647, %v2669
    %vm2683 = vcmp.eq.f32.partialorder %v2682, 8.507059e+37
    %v2684 = vand.u32 %v2669, 2147483648
    %v2685 = vor.u32 1.1754944e-38, %v2684
    %v2686 = vsel %vm2683, %v2685, %v2681
    %v2687 = vmul.f32 1.0, %v2686
    %v2688 = vrcp.pop %v2670
    %v2689 = vmul.f32 %v2670, %v2688
    %v2690 = vsub.f32 1.0, %v2689
    %v2691 = vmul.f32 %v2688, %v2690
    %v2692 = vadd.f32 %v2688, %v2691
    %vm2693 = vweird.f32 %v2670
    %vm2694 = vweird.f32 %v2688
    %vm2695 = vmor %vm2693, %vm2694
    %v2696 = vsel %vm2695, %v2688, %v2692
    %v2697 = vand.u32 2147483647, %v2670
    %vm2698 = vcmp.eq.f32.partialorder %v2697, 8.507059e+37
    %v2699 = vand.u32 %v2670, 2147483648
    %v2700 = vor.u32 1.1754944e-38, %v2699
    %v2701 = vsel %vm2698, %v2700, %v2696
    %v2702 = vmul.f32 1.0, %v2701
    %v2703 = vrcp.pop %v2671
    %v2704 = vmul.f32 %v2671, %v2703
    %v2705 = vsub.f32 1.0, %v2704
    %v2706 = vmul.f32 %v2703, %v2705
    %v2707 = vadd.f32 %v2703, %v2706
    %vm2708 = vweird.f32 %v2671
    %vm2709 = vweird.f32 %v2703
    %vm2710 = vmor %vm2708, %vm2709
    %v2711 = vsel %vm2710, %v2703, %v2707
    %v2712 = vand.u32 2147483647, %v2671
    %vm2713 = vcmp.eq.f32.partialorder %v2712, 8.507059e+37
    %v2714 = vand.u32 %v2671, 2147483648
    %v2715 = vor.u32 1.1754944e-38, %v2714
    %v2716 = vsel %vm2713, %v2715, %v2711
    %v2717 = vmul.f32 1.0, %v2716
    %v2718 = vrcp.pop %v2672
    %v2719 = vmul.f32 %v2672, %v2718
    %v2720 = vsub.f32 1.0, %v2719
    %v2721 = vmul.f32 %v2718, %v2720
    %v2722 = vadd.f32 %v2718, %v2721
    %vm2723 = vweird.f32 %v2672
    %vm2724 = vweird.f32 %v2718
    %vm2725 = vmor %vm2723, %vm2724
    %v2726 = vsel %vm2725, %v2718, %v2722
    %v2727 = vand.u32 2147483647, %v2672
    %vm2728 = vcmp.eq.f32.partialorder %v2727, 8.507059e+37
    %v2729 = vand.u32 %v2672, 2147483648
    %v2730 = vor.u32 1.1754944e-38, %v2729
    %v2731 = vsel %vm2728, %v2730, %v2726
    %v2732 = vmul.f32 1.0, %v2731
    %v2733 = vmul.f32 %v2702, 2.0
    %v2734 = vmul.f32 %v2732, 2.0
    %v2735 = vsub.f32 %v2733, 1.0
    %v2736 = vsub.f32 %v2734, 1.0
    %v2737 = vmul.f32 %v2687, %v2440
    %v2738 = vmul.f32 %v2717, %v2441
    %v2739 = vmul.f32 %v2687, %v2735
    %v2740 = vmul.f32 %v2717, %v2736
    %2743 = vrot.lane.b32.xlu0 %v2739, 64
    %v2744 = vpop.permute.xlu0 %2743
    %2745 = vrot.lane.b32.xlu0 %v2740, 64
    %v2746 = vpop.permute.xlu0 %2745
    %v2749 = vadd.f32 %v2737, %v2744
    %v2750 = vadd.f32 %v2738, %v2746
    %v2751 = vtanh.pop %v2749
    %v2752 = vtanh.pop %v2750
    %v2753 = vmul.f32 %v2702, %v2751
    %v2754 = vmul.f32 %v2732, %v2752
    %s2755 = smul.u32 14, 2
    %s2756 = smul.addr %s2755, 8
    %s2757 = scalar_lea.vmem [#allocation2], %s2756
    %v2758 = vld [vmem:[%s2757] sm:$0xff]
    %v2759 = vld [vmem:[%s2757 + $0x8] sm:$0xff]
    %v2760 = vld [vmem:[%s2757 + $0x10] sm:$0xff]
    %v2761 = vld [vmem:[%s2757 + $0x18] sm:$0xff]
    %2762 = vmatpush.bf16.msra.mxu0 0
    %2763 = vmatpush.bf16.msra.mxu0 0
    %2764 = vmatpush.bf16.msra.mxu0 0
    %2765 = vmatpush.bf16.msra.mxu0 0
    %2766 = vmatpush.bf16.msra.mxu0 %v487
    %2767 = vmatpush.bf16.msra.mxu0 %v485
    %2768 = vmatpush.bf16.msra.mxu0 %v483
    %2769 = vmatpush.bf16.msra.mxu0 %v481
    %2770 = vmatmul.bf16.gmra.mxu0 %v2623
    %v2771 = vpop.f32.mrf.mxu0
    %v2772 = vadd.f32 0.0, %v2771
    %v2773 = vpop.f32.mrf.mxu0
    %v2774 = vadd.f32 0.0, %v2773
    %2775 = vdwg.mxu0
    %2776 = vmatpush.bf16.msra.mxu0 0
    %2777 = vmatpush.bf16.msra.mxu0 0
    %2778 = vmatpush.bf16.msra.mxu0 0
    %2779 = vmatpush.bf16.msra.mxu0 0
    %2780 = vmatpush.bf16.msra.mxu0 %v488
    %2781 = vmatpush.bf16.msra.mxu0 %v486
    %2782 = vmatpush.bf16.msra.mxu0 %v484
    %2783 = vmatpush.bf16.msra.mxu0 %v482
    %2784 = vmatmul.bf16.gmra.mxu0 %v2623
    %v2785 = vpop.f32.mrf.mxu0
    %v2786 = vadd.f32 0.0, %v2785
    %v2787 = vpop.f32.mrf.mxu0
    %v2788 = vadd.f32 0.0, %v2787
    %2789 = vdwg.mxu0
    %v2790 = vadd.f32 %v2758, %v2772
    %v2791 = vadd.f32 %v2759, %v2786
    %v2792 = vadd.f32 %v2760, %v2774
    %v2793 = vadd.f32 %v2761, %v2788
    %v2794 = vxor.u32 %v2790, 2147483648
    %v2795 = vxor.u32 %v2791, 2147483648
    %v2796 = vxor.u32 %v2792, 2147483648
    %v2797 = vxor.u32 %v2793, 2147483648
    %v2798 = vmul.f32 %v2794, 1.442695
    %v2799 = vpow.pop %v2798
    %v2800 = vmul.f32 %v2795, 1.442695
    %v2801 = vpow.pop %v2800
    %v2802 = vmul.f32 %v2796, 1.442695
    %v2803 = vpow.pop %v2802
    %v2804 = vmul.f32 %v2797, 1.442695
    %v2805 = vpow.pop %v2804
    %v2806 = vadd.f32 %v2799, 1.0
    %v2807 = vadd.f32 %v2801, 1.0
    %v2808 = vadd.f32 %v2803, 1.0
    %v2809 = vadd.f32 %v2805, 1.0
    %v2810 = vrcp.pop %v2806
    %v2811 = vmul.f32 %v2806, %v2810
    %v2812 = vsub.f32 1.0, %v2811
    %v2813 = vmul.f32 %v2810, %v2812
    %v2814 = vadd.f32 %v2810, %v2813
    %vm2815 = vweird.f32 %v2806
    %vm2816 = vweird.f32 %v2810
    %vm2817 = vmor %vm2815, %vm2816
    %v2818 = vsel %vm2817, %v2810, %v2814
    %v2819 = vand.u32 2147483647, %v2806
    %vm2820 = vcmp.eq.f32.partialorder %v2819, 8.507059e+37
    %v2821 = vand.u32 %v2806, 2147483648
    %v2822 = vor.u32 1.1754944e-38, %v2821
    %v2823 = vsel %vm2820, %v2822, %v2818
    %v2824 = vmul.f32 1.0, %v2823
    %v2825 = vrcp.pop %v2807
    %v2826 = vmul.f32 %v2807, %v2825
    %v2827 = vsub.f32 1.0, %v2826
    %v2828 = vmul.f32 %v2825, %v2827
    %v2829 = vadd.f32 %v2825, %v2828
    %vm2830 = vweird.f32 %v2807
    %vm2831 = vweird.f32 %v2825
    %vm2832 = vmor %vm2830, %vm2831
    %v2833 = vsel %vm2832, %v2825, %v2829
    %v2834 = vand.u32 2147483647, %v2807
    %vm2835 = vcmp.eq.f32.partialorder %v2834, 8.507059e+37
    %v2836 = vand.u32 %v2807, 2147483648
    %v2837 = vor.u32 1.1754944e-38, %v2836
    %v2838 = vsel %vm2835, %v2837, %v2833
    %v2839 = vmul.f32 1.0, %v2838
    %v2840 = vrcp.pop %v2808
    %v2841 = vmul.f32 %v2808, %v2840
    %v2842 = vsub.f32 1.0, %v2841
    %v2843 = vmul.f32 %v2840, %v2842
    %v2844 = vadd.f32 %v2840, %v2843
    %vm2845 = vweird.f32 %v2808
    %vm2846 = vweird.f32 %v2840
    %vm2847 = vmor %vm2845, %vm2846
    %v2848 = vsel %vm2847, %v2840, %v2844
    %v2849 = vand.u32 2147483647, %v2808
    %vm2850 = vcmp.eq.f32.partialorder %v2849, 8.507059e+37
    %v2851 = vand.u32 %v2808, 2147483648
    %v2852 = vor.u32 1.1754944e-38, %v2851
    %v2853 = vsel %vm2850, %v2852, %v2848
    %v2854 = vmul.f32 1.0, %v2853
    %v2855 = vrcp.pop %v2809
    %v2856 = vmul.f32 %v2809, %v2855
    %v2857 = vsub.f32 1.0, %v2856
    %v2858 = vmul.f32 %v2855, %v2857
    %v2859 = vadd.f32 %v2855, %v2858
    %vm2860 = vweird.f32 %v2809
    %vm2861 = vweird.f32 %v2855
    %vm2862 = vmor %vm2860, %vm2861
    %v2863 = vsel %vm2862, %v2855, %v2859
    %v2864 = vand.u32 2147483647, %v2809
    %vm2865 = vcmp.eq.f32.partialorder %v2864, 8.507059e+37
    %v2866 = vand.u32 %v2809, 2147483648
    %v2867 = vor.u32 1.1754944e-38, %v2866
    %v2868 = vsel %vm2865, %v2867, %v2863
    %v2869 = vmul.f32 1.0, %v2868
    %v2870 = vmul.f32 %v2839, 2.0
    %v2871 = vmul.f32 %v2869, 2.0
    %v2872 = vsub.f32 %v2870, 1.0
    %v2873 = vsub.f32 %v2871, 1.0
    %v2874 = vmul.f32 %v2824, %v2577
    %v2875 = vmul.f32 %v2854, %v2578
    %v2876 = vmul.f32 %v2824, %v2872
    %v2877 = vmul.f32 %v2854, %v2873
    %2880 = vrot.lane.b32.xlu0 %v2876, 64
    %v2881 = vpop.permute.xlu0 %2880
    %2882 = vrot.lane.b32.xlu0 %v2877, 64
    %v2883 = vpop.permute.xlu0 %2882
    %v2886 = vadd.f32 %v2874, %v2881
    %v2887 = vadd.f32 %v2875, %v2883
    %v2888 = vtanh.pop %v2886
    %v2889 = vtanh.pop %v2887
    %v2890 = vmul.f32 %v2839, %v2888
    %v2891 = vmul.f32 %v2869, %v2889
    %v2892 = vpack.c.bf16 %v2891, %v2890
    %v2893 = vpack.c.bf16 %v2754, %v2753
    %2895 = vrot.lane.b32.xlu0 %v2893, 64
    %v2896 = vpop.permute.xlu0 %2895
    %v2898 = vsel %vm497, %v2896, 0
    %2900 = vmatpush.bf16.msra.mxu0 0
    %2901 = vmatpush.bf16.msra.mxu0 0
    %2902 = vmatpush.bf16.msra.mxu0 0
    %2903 = vmatpush.bf16.msra.mxu0 0
    %2904 = vmatpush.bf16.msra.mxu0 %v671
    %2905 = vmatpush.bf16.msra.mxu0 %v669
    %2906 = vmatpush.bf16.msra.mxu0 %v667
    %2907 = vmatpush.bf16.msra.mxu0 %v665
    %2908 = vmatmul.bf16.gmra.mxu0 %v2898
    %v2909 = vpop.f32.mrf.mxu0
    %v2910 = vadd.f32 0.0, %v2909
    %v2911 = vpop.f32.mrf.mxu0
    %v2912 = vadd.f32 0.0, %v2911
    %2913 = vdwg.mxu0
    %2914 = vmatpush.bf16.msra.mxu0 0
    %2915 = vmatpush.bf16.msra.mxu0 0
    %2916 = vmatpush.bf16.msra.mxu0 0
    %2917 = vmatpush.bf16.msra.mxu0 0
    %2918 = vmatpush.bf16.msra.mxu0 %v672
    %2919 = vmatpush.bf16.msra.mxu0 %v670
    %2920 = vmatpush.bf16.msra.mxu0 %v668
    %2921 = vmatpush.bf16.msra.mxu0 %v666
    %2922 = vmatmul.bf16.gmra.mxu0 %v2898
    %v2923 = vpop.f32.mrf.mxu0
    %v2924 = vadd.f32 0.0, %v2923
    %v2925 = vpop.f32.mrf.mxu0
    %v2926 = vadd.f32 0.0, %v2925
    %2927 = vdwg.mxu0
    %2929 = vrot.lane.b32.xlu0 %v2892, 64
    %v2930 = vpop.permute.xlu0 %2929
    %v2932 = vsel %vm497, %v2930, 0
    %2934 = vmatpush.bf16.msra.mxu0 0
    %2935 = vmatpush.bf16.msra.mxu0 0
    %2936 = vmatpush.bf16.msra.mxu0 0
    %2937 = vmatpush.bf16.msra.mxu0 0
    %2938 = vmatpush.bf16.msra.mxu0 %v745
    %2939 = vmatpush.bf16.msra.mxu0 %v743
    %2940 = vmatpush.bf16.msra.mxu0 %v741
    %2941 = vmatpush.bf16.msra.mxu0 %v739
    %2942 = vmatmul.bf16.gmra.mxu0 %v2932
    %v2943 = vpop.f32.mrf.mxu0
    %v2944 = vadd.f32 %v2910, %v2943
    %v2945 = vpop.f32.mrf.mxu0
    %v2946 = vadd.f32 %v2912, %v2945
    %2947 = vdwg.mxu0
    %2948 = vmatpush.bf16.msra.mxu0 0
    %2949 = vmatpush.bf16.msra.mxu0 0
    %2950 = vmatpush.bf16.msra.mxu0 0
    %2951 = vmatpush.bf16.msra.mxu0 0
    %2952 = vmatpush.bf16.msra.mxu0 %v746
    %2953 = vmatpush.bf16.msra.mxu0 %v744
    %2954 = vmatpush.bf16.msra.mxu0 %v742
    %2955 = vmatpush.bf16.msra.mxu0 %v740
    %2956 = vmatmul.bf16.gmra.mxu0 %v2932
    %v2957 = vpop.f32.mrf.mxu0
    %v2958 = vadd.f32 %v2924, %v2957
    %v2959 = vpop.f32.mrf.mxu0
    %v2960 = vadd.f32 %v2926, %v2959
    %2961 = vdwg.mxu0
    %v2962 = vadd.f32 %v2944, %v787
    %v2963 = vadd.f32 %v2958, %v788
    %v2964 = vadd.f32 %v2946, %v787
    %v2965 = vadd.f32 %v2960, %v788
    %v2966 = vxor.u32 %v2962, 2147483648
    %v2967 = vxor.u32 %v2963, 2147483648
    %v2968 = vxor.u32 %v2964, 2147483648
    %v2969 = vxor.u32 %v2965, 2147483648
    %v2970 = vmul.f32 %v2966, 1.442695
    %v2971 = vpow.pop %v2970
    %v2972 = vmul.f32 %v2967, 1.442695
    %v2973 = vpow.pop %v2972
    %v2974 = vmul.f32 %v2968, 1.442695
    %v2975 = vpow.pop %v2974
    %v2976 = vmul.f32 %v2969, 1.442695
    %v2977 = vpow.pop %v2976
    %v2978 = vadd.f32 %v2971, 1.0
    %v2979 = vadd.f32 %v2973, 1.0
    %v2980 = vadd.f32 %v2975, 1.0
    %v2981 = vadd.f32 %v2977, 1.0
    %v2982 = vrcp.pop %v2978
    %v2983 = vmul.f32 %v2978, %v2982
    %v2984 = vsub.f32 1.0, %v2983
    %v2985 = vmul.f32 %v2982, %v2984
    %v2986 = vadd.f32 %v2982, %v2985
    %vm2987 = vweird.f32 %v2978
    %vm2988 = vweird.f32 %v2982
    %vm2989 = vmor %vm2987, %vm2988
    %v2990 = vsel %vm2989, %v2982, %v2986
    %v2991 = vand.u32 2147483647, %v2978
    %vm2992 = vcmp.eq.f32.partialorder %v2991, 8.507059e+37
    %v2993 = vand.u32 %v2978, 2147483648
    %v2994 = vor.u32 1.1754944e-38, %v2993
    %v2995 = vsel %vm2992, %v2994, %v2990
    %v2996 = vmul.f32 1.0, %v2995
    %v2997 = vrcp.pop %v2979
    %v2998 = vmul.f32 %v2979, %v2997
    %v2999 = vsub.f32 1.0, %v2998
    %v3000 = vmul.f32 %v2997, %v2999
    %v3001 = vadd.f32 %v2997, %v3000
    %vm3002 = vweird.f32 %v2979
    %vm3003 = vweird.f32 %v2997
    %vm3004 = vmor %vm3002, %vm3003
    %v3005 = vsel %vm3004, %v2997, %v3001
    %v3006 = vand.u32 2147483647, %v2979
    %vm3007 = vcmp.eq.f32.partialorder %v3006, 8.507059e+37
    %v3008 = vand.u32 %v2979, 2147483648
    %v3009 = vor.u32 1.1754944e-38, %v3008
    %v3010 = vsel %vm3007, %v3009, %v3005
    %v3011 = vmul.f32 1.0, %v3010
    %v3012 = vrcp.pop %v2980
    %v3013 = vmul.f32 %v2980, %v3012
    %v3014 = vsub.f32 1.0, %v3013
    %v3015 = vmul.f32 %v3012, %v3014
    %v3016 = vadd.f32 %v3012, %v3015
    %vm3017 = vweird.f32 %v2980
    %vm3018 = vweird.f32 %v3012
    %vm3019 = vmor %vm3017, %vm3018
    %v3020 = vsel %vm3019, %v3012, %v3016
    %v3021 = vand.u32 2147483647, %v2980
    %vm3022 = vcmp.eq.f32.partialorder %v3021, 8.507059e+37
    %v3023 = vand.u32 %v2980, 2147483648
    %v3024 = vor.u32 1.1754944e-38, %v3023
    %v3025 = vsel %vm3022, %v3024, %v3020
    %v3026 = vmul.f32 1.0, %v3025
    %v3027 = vrcp.pop %v2981
    %v3028 = vmul.f32 %v2981, %v3027
    %v3029 = vsub.f32 1.0, %v3028
    %v3030 = vmul.f32 %v3027, %v3029
    %v3031 = vadd.f32 %v3027, %v3030
    %vm3032 = vweird.f32 %v2981
    %vm3033 = vweird.f32 %v3027
    %vm3034 = vmor %vm3032, %vm3033
    %v3035 = vsel %vm3034, %v3027, %v3031
    %v3036 = vand.u32 2147483647, %v2981
    %vm3037 = vcmp.eq.f32.partialorder %v3036, 8.507059e+37
    %v3038 = vand.u32 %v2981, 2147483648
    %v3039 = vor.u32 1.1754944e-38, %v3038
    %v3040 = vsel %vm3037, %v3039, %v3035
    %v3041 = vmul.f32 1.0, %v3040
    %v3042 = vmul.f32 %v3011, 2.0
    %v3043 = vmul.f32 %v3041, 2.0
    %v3044 = vsub.f32 %v3042, 1.0
    %v3045 = vsub.f32 %v3043, 1.0
    %v3046 = vmul.f32 %v2996, %v2749
    %v3047 = vmul.f32 %v3026, %v2750
    %v3048 = vmul.f32 %v2996, %v3044
    %v3049 = vmul.f32 %v3026, %v3045
    %3052 = vrot.lane.b32.xlu0 %v3048, 64
    %v3053 = vpop.permute.xlu0 %3052
    %3054 = vrot.lane.b32.xlu0 %v3049, 64
    %v3055 = vpop.permute.xlu0 %3054
    %v3058 = vadd.f32 %v3046, %v3053
    %v3059 = vadd.f32 %v3047, %v3055
    %v3060 = vtanh.pop %v3058
    %v3061 = vtanh.pop %v3059
    %v3062 = vmul.f32 %v3011, %v3060
    %v3063 = vmul.f32 %v3041, %v3061
    %3066 = vrot.lane.b32.xlu0 %v2890, 64
    %v3067 = vpop.permute.xlu0 %3066
    %3068 = vrot.lane.b32.xlu0 %v2891, 64
    %v3069 = vpop.permute.xlu0 %3068
    %3072 = vst.msk [vmem:[#allocation3] sm:$0xff] %vm497, %v3067
    %3073 = vst.msk [vmem:[#allocation3 + $0x8] sm:$0xff] %vm497, %v3069
    %3076 = vrot.lane.b32.xlu0 %v2886, 64
    %v3077 = vpop.permute.xlu0 %3076
    %3078 = vrot.lane.b32.xlu0 %v2887, 64
    %v3079 = vpop.permute.xlu0 %3078
    %3082 = vst.msk [vmem:[#allocation4] sm:$0xff] %vm497, %v3077
    %3083 = vst.msk [vmem:[#allocation4 + $0x8] sm:$0xff] %vm497, %v3079
    %3086 = vrot.lane.b32.xlu0 %v3062, 64
    %v3087 = vpop.permute.xlu0 %3086
    %3088 = vrot.lane.b32.xlu0 %v3063, 64
    %v3089 = vpop.permute.xlu0 %3088
    %3092 = vst.msk [vmem:[#allocation5] sm:$0xff] %vm497, %v3087
    %3093 = vst.msk [vmem:[#allocation5 + $0x8] sm:$0xff] %vm497, %v3089
    %3096 = vrot.lane.b32.xlu0 %v3058, 64
    %v3097 = vpop.permute.xlu0 %3096
    %3098 = vrot.lane.b32.xlu0 %v3059, 64
    %v3099 = vpop.permute.xlu0 %3098
    %3102 = vst.msk [vmem:[#allocation6] sm:$0xff] %vm497, %v3097
    %3103 = vst.msk [vmem:[#allocation6 + $0x8] sm:$0xff] %vm497, %v3099
    // Predicated region
    $region58: #{tpu_custom_call.1} parent=1 // pred_check
      %p3104 = pneg %p111
    $region59: #{tpu_custom_call.1} parent=1 // pred_check_branch
      %3106 = sbr.rel (%p3104) target = $region61
    $region60: #{tpu_custom_call.1} parent=1 // pred_region
      %v3107 = vld [vmem:[%s6] sm:$0x1]
      %v3109 = vperm.slane %v3107, 0
      %3110 = vrot.lane.b32.xlu0 %v3109, 64
      %v3111 = vpop.permute.xlu0 %3110
      %v3113 = vmul.f32 %v3062, %v3111
      %v3114 = vmul.f32 %v3063, %v3111
      %3117 = vrot.lane.b32.xlu0 %v3113, 64
      %v3118 = vpop.permute.xlu0 %3117
      %3119 = vrot.lane.b32.xlu0 %v3114, 64
      %v3120 = vpop.permute.xlu0 %3119
      %v3123 = vsel %vm497, %v3118, 0.0
      %3124 = vadd.xlane.f32.xlu0 %v3123
      %v3125 = vpop.xlane.xlu0 %3124
      %v3126 = vsel %vm497, %v3120, 0.0
      %3127 = vadd.xlane.f32.xlu0 %v3126
      %v3128 = vpop.xlane.xlu0 %3127
      %v3129 = vld [vmem:[#allocation7] sm:$0x1]
      %v3131 = vperm.slane %v3129, 0
      %v3133 = vadd.f32 %v3125, %v3131
      %v3134 = vadd.f32 %v3128, %v3131
      %3136 = vset.pattern.permute.xlu0 0
      %3137 = vperm.xlu0 %3136, %v3133
      %v3138 = vpop.permute.xlu0 %3137
      %3141 = vset.pattern.permute.xlu0 0
      %3142 = vperm.xlu0 %3141, %v3134
      %v3143 = vpop.permute.xlu0 %3142
      %3145 = vst [vmem:[#allocation17] sm:$0xff] %v3138
      %3146 = vst [vmem:[#allocation17 + $0x8] sm:$0xff] %v3143
    $region61: #{tpu_custom_call.1} parent=1 // pred_fallthru
      _
    // Predicated region
    $region62: #{tpu_custom_call.1} parent=1 // pred_check
      _
    $region63: #{tpu_custom_call.1} parent=1 // pred_check_branch
      %3148 = sbr.rel (0) target = $region65
    $region64: #{tpu_custom_call.1} parent=1 // pred_region
      %3150 = vsyncadd [#allocation10], 0
      %s3151 = sshll.u32 [#allocation17], 4
      %s3152 = int_to_ptr.vmem [resolvable:$true] %s3151
      %s3153 = sshll.u32 %s8, 4
      %s3154 = int_to_ptr.hbm [resolvable:$true] %s3153
      %3159 = dma.vmem_to_hbm [thread:$0]  %s3152, 256, %s3154, [#allocation10], 128, 128, 8
    $region65: #{tpu_custom_call.1} parent=1 // pred_fallthru
      _
    // Predicated region
    $region66: #{tpu_custom_call.1} parent=1 // pred_check
      _
    $region67: #{tpu_custom_call.1} parent=1 // pred_check_branch
      %3161 = sbr.rel (0) target = $region69
    $region68: #{tpu_custom_call.1} parent=1 // pred_region
      %3163 = dma.done [#allocation10], 256
    $region69: #{tpu_custom_call.1} parent=1 // pred_fallthru
      _
    %3164 = vsyncpa [#allocation9], 1
    %3165 = vsyncpa [#allocation12], 1
    %3166 = vsyncpa [#allocation15], 1
    %3167 = vsyncpa [#allocation10], 1

</llo_original>
